<compile_context>
chip_gen: v7x
topology: tpu7x:2x2x1
jax: 0.10.0
libtpu: 0.0.40
codegen_flags: <defaults>
</compile_context>

<pallas_src>
import functools
import math

import jax
import jax.numpy as jnp
from jax.experimental import pallas as pl
from jax.experimental.pallas import tpu as pltpu

_W = 128  # lane width of the packed weight slabs and of the output slab


# ---------------------------------------------------------------------------
# Hardware-aware tiling helpers
# ---------------------------------------------------------------------------
def _vmem_capacity_bytes():
    try:
        info = pltpu.get_tpu_info()
        cap = getattr(info, "vmem_capacity_bytes", None)
        if cap:
            return int(cap)
    except Exception:
        pass
    return 64 << 20  # conservative (v7x-sized) fallback


def _vmem_limit_bytes():
    cap = _vmem_capacity_bytes()
    return int(min(cap - (16 << 20), 100 << 20))


def _ceil_to(x, m):
    return ((x + m - 1) // m) * m


def _plan_tiles(n):
    """(tq, tk, n_pad).  tq sized for the heavy per-q-tile finalize (and >=2
    q blocks on large N for v7x's 2 TCs); tk long so the p@[V|1] contraction
    amortizes per-step rescale/reduce work; both keyed to the (tq, tk) exp /
    scores temporaries (~3*tq*tk*4 B), not total VMEM.  n_pad is a common
    multiple so padded keys are masked instead of falling back to an (N, N)
    scores block."""
    cap = _vmem_capacity_bytes()
    tq_max = 256 if cap <= (64 << 20) else 512
    n8 = _ceil_to(max(n, 8), 8)
    if n8 <= tq_max:
        return n8, n8, n8
    tq = tq_max
    tk = min(2048, _ceil_to(n8, tq))       # multiple of tq (hence of 128/256)
    n_pad = _ceil_to(n8, tk)
    return tq, tk, n_pad


def _pad_rows(a, n_pad):
    n = a.shape[0]
    if n == n_pad:
        return a
    return jnp.concatenate(
        [a, jnp.zeros((n_pad - n,) + a.shape[1:], a.dtype)], axis=0)


def _compiler_params(ndims):
    sem = ("parallel",) if ndims == 1 else ("parallel", "arbitrary")
    return pltpu.CompilerParams(dimension_semantics=sem,
                                vmem_limit_bytes=_vmem_limit_bytes())


# ---------------------------------------------------------------------------
# Weight packing: all tiny params in one (rows, 128) slab, DMA'd once
# ---------------------------------------------------------------------------
def _pack_params(named):
    parts, meta, r = [], {}, 0
    for name, a in named:
        a = jnp.asarray(a, jnp.float32)
        rows, cols = a.shape
        assert cols <= _W
        rows8 = _ceil_to(rows, 8)
        buf = jnp.zeros((rows8, _W), jnp.float32).at[:rows, :cols].set(a)
        parts.append(buf)
        meta[name] = (r, rows, cols)
        r += rows8
    return jnp.concatenate(parts, axis=0), meta


def _get(ref, meta, name):
    off, rows, cols = meta[name]
    return ref[off:off + rows, :cols]


# ---------------------------------------------------------------------------
# Kernel 0: K/V projection (once per key row, K pre-transposed, V gets a
#           ones column so the softmax row-sum rides the p@v matmul)
# ---------------------------------------------------------------------------
def _project_kv_kernel(x_ref, w_ref, kt_ref, vaug_ref, *, e, meta):
    f32 = jnp.float32
    x = x_ref[...][:, :e]                                    # (tk, e)
    wk = _get(w_ref, meta, "wk")                             # (e, e) row-major Wk
    bkT = _get(w_ref, meta, "bkT")                           # (e, 1)
    wvT = _get(w_ref, meta, "wvT")                           # (e, e)
    bv = _get(w_ref, meta, "bv")                             # (1, e)
    # K^T tile emitted directly in (e, tk) layout.
    kt_ref[...] = jax.lax.dot_general(
        wk, x, (((1,), (1,)), ((), ())), preferred_element_type=f32) + bkT
    v = jnp.dot(x, wvT, preferred_element_type=f32) + bv     # (tk, e)
    vaug_ref[...] = jnp.concatenate(
        [v, jnp.ones((v.shape[0], 1), f32)], axis=1)         # (tk, e+1)


def _project_kv(x_pad, kv_named, *, e, tk, n_pad):
    wslab, meta = _pack_params(kv_named)
    in_w = x_pad.shape[1]
    return pl.pallas_call(
        functools.partial(_project_kv_kernel, e=e, meta=meta),
        grid=(n_pad // tk,),
        in_specs=[pl.BlockSpec((tk, in_w), lambda j: (j, 0)),
                  pl.BlockSpec(wslab.shape, lambda j: (0, 0))],
        out_specs=(pl.BlockSpec((e, tk), lambda j: (0, j)),
                   pl.BlockSpec((tk, e + 1), lambda j: (j, 0))),
        out_shape=(jax.ShapeDtypeStruct((e, n_pad), jnp.float32),
                   jax.ShapeDtypeStruct((n_pad, e + 1), jnp.float32)),
        compiler_params=_compiler_params(1),
    )(x_pad, wslab)


# ---------------------------------------------------------------------------
# Shared in-kernel pieces
# ---------------------------------------------------------------------------
def _flash_step(j, kt_ref, vaug_ref, q_scr, m_scr, acc_scr,
                *, n_valid, tk, mask_keys):
    f32 = jnp.float32
    # Scores straight from the pre-transposed K tile (no per-step transpose).
    s = jnp.dot(q_scr[...], kt_ref[...], preferred_element_type=f32)  # (tq,tk)
    if mask_keys:
        col = jax.lax.broadcasted_iota(jnp.int32, (1, tk), 1) + j * tk
        s = jnp.where(col < n_valid, s, -jnp.inf)
    m_new = jnp.maximum(m_scr[...], jnp.max(s, axis=-1, keepdims=True))
    alpha = jnp.exp(m_scr[...] - m_new)
    p = jnp.exp(s - m_new)
    # Ones column of vaug folds the row-sum into the MXU; last acc column = l.
    acc_scr[...] = alpha * acc_scr[...] + jnp.dot(
        p, vaug_ref[...], preferred_element_type=f32)
    m_scr[...] = m_new


def _attn_epilogue(x_in, acc, w_ref, meta, *, e, dense1_from_attn):
    """Softmax normalize + out-proj + residual LayerNorm + Dense1/ReLU.
    Returns the pre-Dense2 activation x1 (callers apply Dense2).
    dense1_from_attn=False -> xNN.forward ; True -> DeepHPM.forward."""
    f32 = jnp.float32
    l = acc[:, e:e + 1]
    attn = acc[:, :e] / l                                    # exact reciprocal
    attn_out = jnp.dot(attn, _get(w_ref, meta, "woT"),
                       preferred_element_type=f32) + _get(w_ref, meta, "bo")
    res = attn_out + x_in                                    # LayerNorm, eps=1e-5
    mean = jnp.mean(res, axis=-1, keepdims=True)
    cen = res - mean
    var = jnp.mean(cen * cen, axis=-1, keepdims=True)
    ln = cen * jax.lax.rsqrt(var + 1e-5) * _get(w_ref, meta, "lnw") \
        + _get(w_ref, meta, "lnb")
    d1_in = attn_out if dense1_from_attn else ln
    x1 = jnp.dot(d1_in, _get(w_ref, meta, "d1wT"),
                 preferred_element_type=f32) + _get(w_ref, meta, "d1b")
    return jnp.maximum(x1 + ln, 0.0)


# ---------------------------------------------------------------------------
# Kernel 1: xNN attention + MLP forward + analytic input gradient
# ---------------------------------------------------------------------------
def _encode_kernel(xq_ref, kt_ref, vaug_ref, t_ref, w_ref, out_ref,
                   q_scr, m_scr, acc_scr,
                   *, e, h, slab_w, n_valid, tk, mask_keys, meta):
    f32 = jnp.float32
    j = pl.program_id(1)
    xq = xq_ref[...]

    @pl.when(j == 0)
    def _init():
        # 1/sqrt(e) folded into wqT/bq at pack time.
        q_scr[...] = jnp.dot(xq, _get(w_ref, meta, "wqT"),
                             preferred_element_type=f32) + _get(w_ref, meta, "bq")
        m_scr[...] = jnp.full(m_scr.shape, -jnp.inf, f32)
        acc_scr[...] = jnp.zeros(acc_scr.shape, f32)

    _flash_step(j, kt_ref, vaug_ref, q_scr, m_scr, acc_scr,
                n_valid=n_valid, tk=tk, mask_keys=mask_keys)

    @pl.when(j == pl.num_programs(1) - 1)
    def _finalize():
        x1 = _attn_epilogue(xq, acc_scr[...], w_ref, meta, e=e,
                            dense1_from_attn=False)
        hidden = jnp.dot(x1, _get(w_ref, meta, "d2wT"),
                         preferred_element_type=f32) + _get(w_ref, meta, "d2b")

        wTs = [_get(w_ref, meta, "m%dwT" % i) for i in range(6)]
        bs = [_get(w_ref, meta, "m%db" % i) for i in range(6)]
        prms = _get(w_ref, meta, "mparams")                  # (1, 6)

        a = jnp.concatenate([hidden, t_ref[...]], axis=1)    # (tq, h+1)
        acts = []
        for i in range(5):
            a = jnp.tanh(jnp.dot(a, wTs[i], preferred_element_type=f32) + bs[i])
            acts.append(a)
        y = jnp.dot(a, wTs[5], preferred_element_type=f32) + bs[5]
        rul = jnp.sum(y * prms, axis=1, keepdims=True)       # (tq, 1)

        # Reverse sweep (rows independent) == torch.autograd.grad wrt (hidden,t)
        cdims = (((1,), (1,)), ((), ()))                     # g @ W using W^T
        g = jnp.broadcast_to(prms, (xq.shape[0], prms.shape[-1]))
        for i in range(5, 0, -1):
            g = jax.lax.dot_general(g, wTs[i], cdims, preferred_element_type=f32)
            g = g * (1.0 - acts[i - 1] * acts[i - 1])
        grad = jax.lax.dot_general(g, wTs[0], cdims, preferred_element_type=f32)
        rul_h1 = grad[:, :h]                                 # d rul / d hidden
        rul_t = grad[:, h:h + 1]                             # d rul / d t

        pad = jnp.zeros((xq.shape[0], slab_w - (2 * h + 2)), f32)
        # Lane-dense 128-wide slab: [hidden | rul | rul_h1 | rul_t | 0pad]
        out_ref[...] = jnp.concatenate([hidden, rul, rul_h1, rul_t, pad], axis=1)


def pinn_encode(x_pad, t_pad, kt, vaug, named, *, e, h, slab_w, tq, tk,
                n_valid, n_pad):
    wslab, meta = _pack_params(named)
    grid = (n_pad // tq, n_pad // tk)
    kern = functools.partial(_encode_kernel, e=e, h=h, slab_w=slab_w,
                             n_valid=n_valid, tk=tk,
                             mask_keys=(n_valid < n_pad), meta=meta)
    return pl.pallas_call(
        kern,
        grid=grid,
        in_specs=[pl.BlockSpec((tq, e), lambda i, j: (i, 0)),
                  pl.BlockSpec((e, tk), lambda i, j: (0, j)),
                  pl.BlockSpec((tk, e + 1), lambda i, j: (j, 0)),
                  pl.BlockSpec((tq, 1), lambda i, j: (i, 0)),
                  pl.BlockSpec(wslab.shape, lambda i, j: (0, 0))],
        out_specs=pl.BlockSpec((tq, slab_w), lambda i, j: (i, 0)),
        out_shape=jax.ShapeDtypeStruct((n_pad, slab_w), jnp.float32),
        scratch_shapes=[pltpu.VMEM((tq, e), jnp.float32),       # scaled q
                        pltpu.VMEM((tq, 1), jnp.float32),       # running max
                        pltpu.VMEM((tq, e + 1), jnp.float32)],  # [attn acc | l]
        compiler_params=_compiler_params(2),
    )(x_pad, kt, vaug, t_pad, wslab)


# ---------------------------------------------------------------------------
# Kernel 2: DeepHPM attention over deri + f = rul_t - hpm (lane-dense rows)
# ---------------------------------------------------------------------------
def _hpm_kernel(sq_ref, kt_ref, vaug_ref, w_ref, f_ref,
                q_scr, m_scr, acc_scr,
                *, d, slab_w, n_valid, tk, mask_keys, meta):
    f32 = jnp.float32
    j = pl.program_id(1)
    sq = sq_ref[...]
    deri_q = sq[:, :d]

    @pl.when(j == 0)
    def _init():
        q_scr[...] = jnp.dot(deri_q, _get(w_ref, meta, "wqT"),
                             preferred_element_type=f32) + _get(w_ref, meta, "bq")
        m_scr[...] = jnp.full(m_scr.shape, -jnp.inf, f32)
        acc_scr[...] = jnp.zeros(acc_scr.shape, f32)

    _flash_step(j, kt_ref, vaug_ref, q_scr, m_scr, acc_scr,
                n_valid=n_valid, tk=tk, mask_keys=mask_keys)

    @pl.when(j == pl.num_programs(1) - 1)
    def _finalize():
        x1 = _attn_epilogue(deri_q, acc_scr[...], w_ref, meta, e=d,
                            dense1_from_attn=True)           # (tq, d)
        tdims = (((1,), (1,)), ((), ()))
        # Dense2 (width-1) evaluated in row orientation -> lane-dense f store.
        hpm_row = jax.lax.dot_general(_get(w_ref, meta, "d2w"), x1, tdims,
                                      preferred_element_type=f32) \
            + _get(w_ref, meta, "d2b")                        # (1, tq)
        onehot = (jax.lax.broadcasted_iota(jnp.int32, (1, slab_w), 1)
                  == d).astype(f32)
        rul_t_row = jax.lax.dot_general(onehot, sq, tdims,
                                        preferred_element_type=f32)  # (1, tq)
        f_row = rul_t_row - hpm_row
        f_ref[...] = jnp.broadcast_to(f_row, f_ref.shape)


def pinn_hpm(slab, kt, vaug, named, *, d, slab_w, tq, tk, n_valid, n_pad):
    wslab, meta = _pack_params(named)
    grid = (n_pad // tq, n_pad // tk)
    kern = functools.partial(_hpm_kernel, d=d, slab_w=slab_w,
                             n_valid=n_valid, tk=tk,
                             mask_keys=(n_valid < n_pad), meta=meta)
    return pl.pallas_call(
        kern,
        grid=grid,
        in_specs=[pl.BlockSpec((tq, slab_w), lambda i, j: (i, 0)),
                  pl.BlockSpec((d, tk), lambda i, j: (0, j)),
                  pl.BlockSpec((tk, d + 1), lambda i, j: (j, 0)),
                  pl.BlockSpec(wslab.shape, lambda i, j: (0, 0))],
        out_specs=pl.BlockSpec((8, tq), lambda i, j: (0, i)),
        out_shape=jax.ShapeDtypeStruct((8, n_pad), jnp.float32),
        scratch_shapes=[pltpu.VMEM((tq, d), jnp.float32),
                        pltpu.VMEM((tq, 1), jnp.float32),
                        pltpu.VMEM((tq, d + 1), jnp.float32)],
        compiler_params=_compiler_params(2),
    )(slab, kt, vaug, wslab)


# ---------------------------------------------------------------------------
# Parameter init (deterministic, synthetic)
# ---------------------------------------------------------------------------
def _linear_T(key, in_dim, out_dim, scale=0.1):
    kw, kb = jax.random.split(key)
    wT = scale * jax.random.normal(kw, (in_dim, out_dim), jnp.float32)
    b = scale * jax.random.normal(kb, (1, out_dim), jnp.float32)
    return wT, b


def init_attn_block_params(key, embed_dim, out_dim):
    e = embed_dim
    k = jax.random.split(key, 5)
    in_wT = 0.1 * jax.random.normal(k[0], (e, 3 * e), jnp.float32)  # [Wq|Wk|Wv]^T
    in_b = 0.1 * jax.random.normal(k[1], (1, 3 * e), jnp.float32)
    woT, bo = _linear_T(k[2], e, e)
    d1wT, d1b = _linear_T(k[3], e, e)
    d2wT, d2b = _linear_T(k[4], e, out_dim)
    return dict(
        wqT=in_wT[:, :e], bq=in_b[:, :e],
        wkvT=in_wT[:, e:], bkv=in_b[:, e:],
        woT=woT, bo=bo,
        lnw=jnp.ones((1, e), jnp.float32), lnb=jnp.zeros((1, e), jnp.float32),
        d1wT=d1wT, d1b=d1b, d2wT=d2wT, d2b=d2b,
    )


def init_mlp_params(key, in_dim):
    dims = [(in_dim, 10), (10, 10), (10, 10), (10, 10), (10, 10), (10, 6)]
    ks = jax.random.split(key, len(dims))
    wTs, bs = [], []
    for kk, (i, o) in zip(ks, dims):
        wT, b = _linear_T(kk, i, o)
        wTs.append(wT)
        bs.append(b)
    return dict(wTs=wTs, bs=bs, params=jnp.full((1, 6), 10.0, jnp.float32))


def init_pinn_params(key, input_dim, hidden_dim, order):
    deep_dim = 1 + hidden_dim * (order + 1)
    k1, k2, k3 = jax.random.split(key, 3)
    return dict(
        xnn=init_attn_block_params(k1, input_dim, hidden_dim),
        mlp=init_mlp_params(k2, hidden_dim + 1),
        deepHPM=init_attn_block_params(k3, deep_dim, 1),
    )


# ---------------------------------------------------------------------------
# PINN forward
# ---------------------------------------------------------------------------
def pinn_forward(params, x, t, order=1):
    if order != 1:
        # TODO(synk): higher-order torch.autograd.grad chain (order > 1) not
        # implemented in-kernel; only the first-order VJPs are reproduced.
        raise NotImplementedError("only derivatives_order == 1 is implemented")

    n, e = x.shape
    h = params["xnn"]["d2b"].shape[-1]
    d = 2 * h + 1                                   # deri = [hidden|rul|rul_h1]
    slab_w = max(_W, _ceil_to(2 * h + 2, _W))
    tq, tk, n_pad = _plan_tiles(n)

    x_pad = _pad_rows(x, n_pad)
    t_pad = _pad_rows(t, n_pad)

    xp, mp, hp = params["xnn"], params["mlp"], params["deepHPM"]

    # Stage 1: xNN K/V projected once for all rows.
    kv1 = [("wk", xp["wkvT"][:, :e].T), ("bkT", xp["bkv"][:, :e].T),
           ("wvT", xp["wkvT"][:, e:]), ("bv", xp["bkv"][:, e:])]
    kt1, vaug1 = _project_kv(x_pad, kv1, e=e, tk=tk, n_pad=n_pad)

    # Stage 2: xNN attention + LN/Dense + MLP forward + analytic input grad.
    sc = 1.0 / math.sqrt(e)
    enc_named = ([("wqT", xp["wqT"] * sc), ("bq", xp["bq"] * sc),
                  ("woT", xp["woT"]), ("bo", xp["bo"]),
                  ("lnw", xp["lnw"]), ("lnb", xp["lnb"]),
                  ("d1wT", xp["d1wT"]), ("d1b", xp["d1b"]),
                  ("d2wT", xp["d2wT"]), ("d2b", xp["d2b"])]
                 + [("m%dwT" % i, w) for i, w in enumerate(mp["wTs"])]
                 + [("m%db" % i, b) for i, b in enumerate(mp["bs"])]
                 + [("mparams", mp["params"])])
    slab = pinn_encode(x_pad, t_pad, kt1, vaug1, enc_named,
                       e=e, h=h, slab_w=slab_w, tq=tq, tk=tk,
                       n_valid=n, n_pad=n_pad)

    # Stage 3: DeepHPM K/V over the deri columns of the slab.
    kv2 = [("wk", hp["wkvT"][:, :d].T), ("bkT", hp["bkv"][:, :d].T),
           ("wvT", hp["wkvT"][:, d:]), ("bv", hp["bkv"][:, d:])]
    kt2, vaug2 = _project_kv(slab, kv2, e=d, tk=tk, n_pad=n_pad)

    # Stage 4: DeepHPM attention + f = rul_t - hpm.
    sc2 = 1.0 / math.sqrt(d)
    hpm_named = [("wqT", hp["wqT"] * sc2), ("bq", hp["bq"] * sc2),
                 ("woT", hp["woT"]), ("bo", hp["bo"]),
                 ("lnw", hp["lnw"]), ("lnb", hp["lnb"]),
                 ("d1wT", hp["d1wT"]), ("d1b", hp["d1b"]),
                 ("d2w", hp["d2wT"].T), ("d2b", hp["d2b"])]
    f_rows = pinn_hpm(slab, kt2, vaug2, hpm_named,
                      d=d, slab_w=slab_w, tq=tq, tk=tk,
                      n_valid=n, n_pad=n_pad)

    rul = slab[:n, h:h + 1]
    f = f_rows[0, :n].reshape(-1, 1)
    return rul, f


# ---------------------------------------------------------------------------
# Pure-JAX reference (self-consistency check only)
# ---------------------------------------------------------------------------
def _ref_attn_block(x, p, dense1_from_attn):
    e = x.shape[-1]
    q = x @ p["wqT"] + p["bq"]
    kv = x @ p["wkvT"] + p["bkv"]
    k, v = kv[:, :e], kv[:, e:]
    a = jax.nn.softmax((q @ k.T) / math.sqrt(e), axis=-1)
    attn_out = (a @ v) @ p["woT"] + p["bo"]
    res = attn_out + x
    mean = res.mean(-1, keepdims=True)
    var = ((res - mean) ** 2).mean(-1, keepdims=True)
    ln = (res - mean) * jax.lax.rsqrt(var + 1e-5) * p["lnw"] + p["lnb"]
    d1_in = attn_out if dense1_from_attn else ln
    x1 = jnp.maximum(d1_in @ p["d1wT"] + p["d1b"] + ln, 0.0)
    return x1 @ p["d2wT"] + p["d2b"]


def _ref_mlp(xb, p):
    a = xb
    for wT, b in zip(p["wTs"][:-1], p["bs"][:-1]):
        a = jnp.tanh(a @ wT + b)
    y = a @ p["wTs"][-1] + p["bs"][-1]
    return jnp.sum(y * p["params"], axis=1)


def _ref_forward(params, x, t):
    hidden = _ref_attn_block(x, params["xnn"], False)
    h = hidden.shape[1]
    mlp_in = jnp.concatenate([hidden, t], axis=1)
    rul = _ref_mlp(mlp_in, params["mlp"])[:, None]
    grad = jax.vmap(jax.grad(lambda r: _ref_mlp(r[None, :], params["mlp"])[0]))(mlp_in)
    rul_t, rul_h1 = grad[:, h:h + 1], grad[:, :h]
    deri = jnp.concatenate([hidden, rul, rul_h1], axis=1)
    hpm = _ref_attn_block(deri, params["deepHPM"], True)
    return rul, rul_t - hpm


if __name__ == "__main__":
    N, INPUT_DIM, HIDDEN_DIM, ORDER = 21, 6, 4, 1   # N % 8 != 0: exercises pad+mask
    key = jax.random.PRNGKey(0)
    kx, kt_, kp = jax.random.split(key, 3)
    x = jax.random.normal(kx, (N, INPUT_DIM), jnp.float32)
    t = jax.random.uniform(kt_, (N, 1), jnp.float32)
    params = init_pinn_params(kp, INPUT_DIM, HIDDEN_DIM, ORDER)

    fwd = jax.jit(functools.partial(pinn_forward, order=ORDER))
    rul, f = fwd(params, x, t)
    jax.block_until_ready((rul, f))
    assert rul.shape == (N, 1) and f.shape == (N, 1)

    # Self-consistency check vs. a pure-JAX reference (exact reciprocal in the
    # kernel -> tight tolerance).
    rul_ref, f_ref = _ref_forward(params, x, t)
    assert bool(jnp.all(jnp.isfinite(rul)) & jnp.all(jnp.isfinite(f)))
    assert bool(jnp.allclose(rul, rul_ref, rtol=1e-3, atol=1e-3)), \
        float(jnp.max(jnp.abs(rul - rul_ref)))
    assert bool(jnp.allclose(f, f_ref, rtol=1e-3, atol=1e-3)), \
        float(jnp.max(jnp.abs(f - f_ref)))

    print("KERNEL_OK")
</pallas_src>

<mosaic_0001>
module attributes {stable_mosaic.version = 11 : i64} {
  func.func @_project_kv_kernel(%arg0: i32, %arg1: memref<24x6xf32, #tpu.memory_space<vmem>>, %arg2: memref<32x128xf32, #tpu.memory_space<vmem>>, %arg3: memref<6x24xf32, #tpu.memory_space<vmem>>, %arg4: memref<24x7xf32, #tpu.memory_space<vmem>>) attributes {dimension_semantics = [#tpu.dimension_semantics<parallel>], iteration_bounds = array<i64: 1>, scalar_prefetch = 0 : i64, scratch_operands = 0 : i64, tpu.core_type = #tpu.core_type<tc>, window_params = [{transform_indices = @transform_0, window_bounds = array<i64: 24, 6>}, {pipeline_mode = #tpu.pipeline_mode<synchronous>, transform_indices = @transform_1, window_bounds = array<i64: 32, 128>}, {transform_indices = @transform_2, window_bounds = array<i64: 6, 24>}, {transform_indices = @transform_3, window_bounds = array<i64: 24, 7>}]} {
    %c0 = arith.constant 0 : index
    %c0_0 = arith.constant 0 : index
    %0 = vector.load %arg1[%c0, %c0_0] : memref<24x6xf32, #tpu.memory_space<vmem>>, vector<24x6xf32>
    %c0_1 = arith.constant 0 : index
    %c0_2 = arith.constant 0 : index
    %1 = vector.load %arg2[%c0_1, %c0_2] : memref<32x128xf32, #tpu.memory_space<vmem>>, vector<6x6xf32>
    %c8 = arith.constant 8 : index
    %c0_3 = arith.constant 0 : index
    %2 = vector.load %arg2[%c8, %c0_3] : memref<32x128xf32, #tpu.memory_space<vmem>>, vector<6x1xf32>
    %c16 = arith.constant 16 : index
    %c0_4 = arith.constant 0 : index
    %3 = vector.load %arg2[%c16, %c0_4] : memref<32x128xf32, #tpu.memory_space<vmem>>, vector<6x6xf32>
    %c24 = arith.constant 24 : index
    %c0_5 = arith.constant 0 : index
    %4 = vector.load %arg2[%c24, %c0_5] : memref<32x128xf32, #tpu.memory_space<vmem>>, vector<1x6xf32>
    %cst = arith.constant dense<0.000000e+00> : vector<6x24xf32>
    %5 = tpu.matmul %1, %0, %cst {dimension_numbers = #tpu.dot_dimension_numbers<[1], [1], [0], [0], [0, 0, 1, 0], [], []>} : vector<6x6xf32>, vector<24x6xf32>, vector<6x24xf32> -> vector<6x24xf32>
    %6 = vector.broadcast %2 : vector<6x1xf32> to vector<6x24xf32>
    %7 = arith.addf %5, %6 : vector<6x24xf32>
    %c0_6 = arith.constant 0 : index
    %c0_7 = arith.constant 0 : index
    %8 = vector.load %arg3[%c0_6, %c0_7] : memref<6x24xf32, #tpu.memory_space<vmem>>, vector<6x24xf32>
    tpu.vector_store %arg3[%c0_6, %c0_7], %7 {strides = array<i32>} : memref<6x24xf32, #tpu.memory_space<vmem>>, vector<6x24xf32>,
    %cst_8 = arith.constant dense<0.000000e+00> : vector<24x6xf32>
    %9 = tpu.matmul %0, %3, %cst_8 {dimension_numbers = #tpu.dot_dimension_numbers<[1], [0], [0], [1], [0, 0, 1, 1], [], []>} : vector<24x6xf32>, vector<6x6xf32>, vector<24x6xf32> -> vector<24x6xf32>
    %10 = vector.broadcast %4 : vector<1x6xf32> to vector<24x6xf32>
    %11 = arith.addf %9, %10 : vector<24x6xf32>
    %cst_9 = arith.constant 1.000000e+00 : f32
    %12 = vector.broadcast %cst_9 : f32 to vector<24x1xf32>
    %13 = tpu.concatenate %11, %12 in 1 : vector<24x6xf32>, vector<24x1xf32> -> vector<24x7xf32>
    %c0_10 = arith.constant 0 : index
    %c0_11 = arith.constant 0 : index
    %14 = vector.load %arg4[%c0_10, %c0_11] : memref<24x7xf32, #tpu.memory_space<vmem>>, vector<24x7xf32>
    tpu.vector_store %arg4[%c0_10, %c0_11], %13 {strides = array<i32>} : memref<24x7xf32, #tpu.memory_space<vmem>>, vector<24x7xf32>,
    return
  }
  func.func @transform_0(%arg0: i32) -> (i32, i32) {
    %c0_i32 = arith.constant 0 : i32
    %c0_i32_0 = arith.constant 0 : i32
    return %arg0, %c0_i32 : i32, i32
  }
  func.func @transform_1(%arg0: i32) -> (i32, i32) {
    %c0_i32 = arith.constant 0 : i32
    %c0_i32_0 = arith.constant 0 : i32
    %c0_i32_1 = arith.constant 0 : i32
    return %c0_i32, %c0_i32_0 : i32, i32
  }
  func.func @transform_2(%arg0: i32) -> (i32, i32) {
    %c0_i32 = arith.constant 0 : i32
    %c0_i32_0 = arith.constant 0 : i32
    return %c0_i32, %arg0 : i32, i32
  }
  func.func @transform_3(%arg0: i32) -> (i32, i32) {
    %c0_i32 = arith.constant 0 : i32
    %c0_i32_0 = arith.constant 0 : i32
    return %arg0, %c0_i32 : i32, i32
  }
}

module attributes {stable_mosaic.version = 11 : i64} {
  func.func @_project_kv_kernel(%arg0: i32, %arg1: memref<24x128xf32, #tpu.memory_space<vmem>>, %arg2: memref<56x128xf32, #tpu.memory_space<vmem>>, %arg3: memref<9x24xf32, #tpu.memory_space<vmem>>, %arg4: memref<24x10xf32, #tpu.memory_space<vmem>>) attributes {dimension_semantics = [#tpu.dimension_semantics<parallel>], iteration_bounds = array<i64: 1>, scalar_prefetch = 0 : i64, scratch_operands = 0 : i64, tpu.core_type = #tpu.core_type<tc>, window_params = [{transform_indices = @transform_0, window_bounds = array<i64: 24, 128>}, {pipeline_mode = #tpu.pipeline_mode<synchronous>, transform_indices = @transform_1, window_bounds = array<i64: 56, 128>}, {transform_indices = @transform_2, window_bounds = array<i64: 9, 24>}, {transform_indices = @transform_3, window_bounds = array<i64: 24, 10>}]} {
    %c0 = arith.constant 0 : index
    %c0_0 = arith.constant 0 : index
    %0 = vector.load %arg1[%c0, %c0_0] : memref<24x128xf32, #tpu.memory_space<vmem>>, vector<24x128xf32>
    %1 = vector.extract_strided_slice %0 {offsets = [0, 0], sizes = [24, 9], strides = [1, 1]} : vector<24x128xf32> to vector<24x9xf32>
    %c0_1 = arith.constant 0 : index
    %c0_2 = arith.constant 0 : index
    %2 = vector.load %arg2[%c0_1, %c0_2] : memref<56x128xf32, #tpu.memory_space<vmem>>, vector<9x9xf32>
    %c16 = arith.constant 16 : index
    %c0_3 = arith.constant 0 : index
    %3 = vector.load %arg2[%c16, %c0_3] : memref<56x128xf32, #tpu.memory_space<vmem>>, vector<9x1xf32>
    %c32 = arith.constant 32 : index
    %c0_4 = arith.constant 0 : index
    %4 = vector.load %arg2[%c32, %c0_4] : memref<56x128xf32, #tpu.memory_space<vmem>>, vector<9x9xf32>
    %c48 = arith.constant 48 : index
    %c0_5 = arith.constant 0 : index
    %5 = vector.load %arg2[%c48, %c0_5] : memref<56x128xf32, #tpu.memory_space<vmem>>, vector<1x9xf32>
    %cst = arith.constant dense<0.000000e+00> : vector<9x24xf32>
    %6 = tpu.matmul %2, %1, %cst {dimension_numbers = #tpu.dot_dimension_numbers<[1], [1], [0], [0], [0, 0, 1, 0], [], []>} : vector<9x9xf32>, vector<24x9xf32>, vector<9x24xf32> -> vector<9x24xf32>
    %7 = vector.broadcast %3 : vector<9x1xf32> to vector<9x24xf32>
    %8 = arith.addf %6, %7 : vector<9x24xf32>
    %c0_6 = arith.constant 0 : index
    %c0_7 = arith.constant 0 : index
    %9 = vector.load %arg3[%c0_6, %c0_7] : memref<9x24xf32, #tpu.memory_space<vmem>>, vector<9x24xf32>
    tpu.vector_store %arg3[%c0_6, %c0_7], %8 {strides = array<i32>} : memref<9x24xf32, #tpu.memory_space<vmem>>, vector<9x24xf32>,
    %cst_8 = arith.constant dense<0.000000e+00> : vector<24x9xf32>
    %10 = tpu.matmul %1, %4, %cst_8 {dimension_numbers = #tpu.dot_dimension_numbers<[1], [0], [0], [1], [0, 0, 1, 1], [], []>} : vector<24x9xf32>, vector<9x9xf32>, vector<24x9xf32> -> vector<24x9xf32>
    %11 = vector.broadcast %5 : vector<1x9xf32> to vector<24x9xf32>
    %12 = arith.addf %10, %11 : vector<24x9xf32>
    %cst_9 = arith.constant 1.000000e+00 : f32
    %13 = vector.broadcast %cst_9 : f32 to vector<24x1xf32>
    %14 = tpu.concatenate %12, %13 in 1 : vector<24x9xf32>, vector<24x1xf32> -> vector<24x10xf32>
    %c0_10 = arith.constant 0 : index
    %c0_11 = arith.constant 0 : index
    %15 = vector.load %arg4[%c0_10, %c0_11] : memref<24x10xf32, #tpu.memory_space<vmem>>, vector<24x10xf32>
    tpu.vector_store %arg4[%c0_10, %c0_11], %14 {strides = array<i32>} : memref<24x10xf32, #tpu.memory_space<vmem>>, vector<24x10xf32>,
    return
  }
  func.func @transform_0(%arg0: i32) -> (i32, i32) {
    %c0_i32 = arith.constant 0 : i32
    %c0_i32_0 = arith.constant 0 : i32
    return %arg0, %c0_i32 : i32, i32
  }
  func.func @transform_1(%arg0: i32) -> (i32, i32) {
    %c0_i32 = arith.constant 0 : i32
    %c0_i32_0 = arith.constant 0 : i32
    %c0_i32_1 = arith.constant 0 : i32
    return %c0_i32, %c0_i32_0 : i32, i32
  }
  func.func @transform_2(%arg0: i32) -> (i32, i32) {
    %c0_i32 = arith.constant 0 : i32
    %c0_i32_0 = arith.constant 0 : i32
    return %c0_i32, %arg0 : i32, i32
  }
  func.func @transform_3(%arg0: i32) -> (i32, i32) {
    %c0_i32 = arith.constant 0 : i32
    %c0_i32_0 = arith.constant 0 : i32
    return %arg0, %c0_i32 : i32, i32
  }
}

module attributes {stable_mosaic.version = 11 : i64} {
  func.func @_encode_kernel(%arg0: i32, %arg1: i32, %arg2: memref<24x6xf32, #tpu.memory_space<vmem>>, %arg3: memref<6x24xf32, #tpu.memory_space<vmem>>, %arg4: memref<24x7xf32, #tpu.memory_space<vmem>>, %arg5: memref<24x1xf32, #tpu.memory_space<vmem>>, %arg6: memref<224x128xf32, #tpu.memory_space<vmem>>, %arg7: memref<24x128xf32, #tpu.memory_space<vmem>>, %arg8: memref<24x6xf32, #tpu.memory_space<vmem>>, %arg9: memref<24x1xf32, #tpu.memory_space<vmem>>, %arg10: memref<24x7xf32, #tpu.memory_space<vmem>>) attributes {dimension_semantics = [#tpu.dimension_semantics<parallel>, #tpu.dimension_semantics<arbitrary>], iteration_bounds = array<i64: 1, 1>, scalar_prefetch = 0 : i64, scratch_operands = 3 : i64, tpu.core_type = #tpu.core_type<tc>, window_params = [{transform_indices = @transform_0, window_bounds = array<i64: 24, 6>}, {transform_indices = @transform_1, window_bounds = array<i64: 6, 24>}, {transform_indices = @transform_2, window_bounds = array<i64: 24, 7>}, {transform_indices = @transform_3, window_bounds = array<i64: 24, 1>}, {pipeline_mode = #tpu.pipeline_mode<synchronous>, transform_indices = @transform_4, window_bounds = array<i64: 224, 128>}, {transform_indices = @transform_5, window_bounds = array<i64: 24, 128>}]} {
    %c0 = arith.constant 0 : index
    %c0_0 = arith.constant 0 : index
    %0 = vector.load %arg2[%c0, %c0_0] : memref<24x6xf32, #tpu.memory_space<vmem>>, vector<24x6xf32>
    %c0_i32 = arith.constant 0 : i32
    %1 = arith.cmpi eq, %arg1, %c0_i32 : i32
    %2 = arith.extui %1 : i1 to i32
    %c0_i32_1 = arith.constant 0 : i32
    %3 = arith.cmpi ne, %2, %c0_i32_1 : i32
    scf.if %3 {
      %c0_23 = arith.constant 0 : index
      %c0_24 = arith.constant 0 : index
      %38 = vector.load %arg6[%c0_23, %c0_24] : memref<224x128xf32, #tpu.memory_space<vmem>>, vector<6x6xf32>
      %cst_25 = arith.constant dense<0.000000e+00> : vector<24x6xf32>
      %39 = tpu.matmul %0, %38, %cst_25 {dimension_numbers = #tpu.dot_dimension_numbers<[1], [0], [0], [1], [0, 0, 1, 1], [], []>} : vector<24x6xf32>, vector<6x6xf32>, vector<24x6xf32> -> vector<24x6xf32>
      %c8 = arith.constant 8 : index
      %c0_26 = arith.constant 0 : index
      %40 = vector.load %arg6[%c8, %c0_26] : memref<224x128xf32, #tpu.memory_space<vmem>>, vector<1x6xf32>
      %41 = vector.broadcast %40 : vector<1x6xf32> to vector<24x6xf32>
      %42 = arith.addf %39, %41 : vector<24x6xf32>
      %c0_27 = arith.constant 0 : index
      %c0_28 = arith.constant 0 : index
      %43 = vector.load %arg8[%c0_27, %c0_28] : memref<24x6xf32, #tpu.memory_space<vmem>>, vector<24x6xf32>
      tpu.vector_store %arg8[%c0_27, %c0_28], %42 {strides = array<i32>} : memref<24x6xf32, #tpu.memory_space<vmem>>, vector<24x6xf32>,
      %cst_29 = arith.constant 0xFF800000 : f32
      %44 = vector.broadcast %cst_29 : f32 to vector<24x1xf32>
      %c0_30 = arith.constant 0 : index
      %c0_31 = arith.constant 0 : index
      %45 = vector.load %arg9[%c0_30, %c0_31] : memref<24x1xf32, #tpu.memory_space<vmem>>, vector<24x1xf32>
      tpu.vector_store %arg9[%c0_30, %c0_31], %44 {strides = array<i32>} : memref<24x1xf32, #tpu.memory_space<vmem>>, vector<24x1xf32>,
      %cst_32 = arith.constant 0.000000e+00 : f32
      %46 = vector.broadcast %cst_32 : f32 to vector<24x7xf32>
      %c0_33 = arith.constant 0 : index
      %c0_34 = arith.constant 0 : index
      %47 = vector.load %arg10[%c0_33, %c0_34] : memref<24x7xf32, #tpu.memory_space<vmem>>, vector<24x7xf32>
      tpu.vector_store %arg10[%c0_33, %c0_34], %46 {strides = array<i32>} : memref<24x7xf32, #tpu.memory_space<vmem>>, vector<24x7xf32>,
    } else {
    }
    %c0_2 = arith.constant 0 : index
    %c0_3 = arith.constant 0 : index
    %4 = vector.load %arg8[%c0_2, %c0_3] : memref<24x6xf32, #tpu.memory_space<vmem>>, vector<24x6xf32>
    %c0_4 = arith.constant 0 : index
    %c0_5 = arith.constant 0 : index
    %5 = vector.load %arg3[%c0_4, %c0_5] : memref<6x24xf32, #tpu.memory_space<vmem>>, vector<6x24xf32>
    %cst = arith.constant dense<0.000000e+00> : vector<24x24xf32>
    %6 = tpu.matmul %4, %5, %cst {dimension_numbers = #tpu.dot_dimension_numbers<[1], [0], [0], [1], [0, 0, 1, 1], [], []>} : vector<24x6xf32>, vector<6x24xf32>, vector<24x24xf32> -> vector<24x24xf32>
    %7 = tpu.iota {dimensions = array<i32: 1>} : vector<1x24xi32>
    %c24_i32 = arith.constant 24 : i32
    %8 = arith.muli %arg1, %c24_i32 : i32
    %9 = vector.broadcast %8 : i32 to vector<1x24xi32>
    %10 = arith.addi %7, %9 : vector<1x24xi32>
    %c21_i32 = arith.constant 21 : i32
    %11 = vector.broadcast %c21_i32 : i32 to vector<1x24xi32>
    %12 = arith.cmpi slt, %10, %11 : vector<1x24xi32>
    %cst_6 = arith.constant 0xFF800000 : f32
    %13 = vector.shape_cast %12 : vector<1x24xi1> to vector<1x24xi1>
    %14 = vector.broadcast %13 : vector<1x24xi1> to vector<24x24xi1>
    %15 = vector.broadcast %cst_6 : f32 to vector<24x24xf32>
    %16 = arith.select %14, %6, %15 : vector<24x24xi1>, vector<24x24xf32>
    %c0_7 = arith.constant 0 : index
    %c0_8 = arith.constant 0 : index
    %17 = vector.load %arg9[%c0_7, %c0_8] : memref<24x1xf32, #tpu.memory_space<vmem>>, vector<24x1xf32>
    %cst_9 = arith.constant dense<0xFF800000> : vector<24xf32>
    %18 = vector.multi_reduction <maximumf>, %16, %cst_9 [1] : vector<24x24xf32> to vector<24xf32>
    %19 = vector.shape_cast %18 : vector<24xf32> to vector<24x1xf32>
    %20 = arith.maximumf %17, %19 : vector<24x1xf32>
    %c0_10 = arith.constant 0 : index
    %c0_11 = arith.constant 0 : index
    %21 = vector.load %arg9[%c0_10, %c0_11] : memref<24x1xf32, #tpu.memory_space<vmem>>, vector<24x1xf32>
    %22 = arith.subf %21, %20 : vector<24x1xf32>
    %23 = math.exp %22 : vector<24x1xf32>
    %24 = vector.broadcast %20 : vector<24x1xf32> to vector<24x24xf32>
    %25 = arith.subf %16, %24 : vector<24x24xf32>
    %26 = math.exp %25 : vector<24x24xf32>
    %c0_12 = arith.constant 0 : index
    %c0_13 = arith.constant 0 : index
    %27 = vector.load %arg10[%c0_12, %c0_13] : memref<24x7xf32, #tpu.memory_space<vmem>>, vector<24x7xf32>
    %28 = vector.broadcast %23 : vector<24x1xf32> to vector<24x7xf32>
    %29 = arith.mulf %28, %27 : vector<24x7xf32>
    %c0_14 = arith.constant 0 : index
    %c0_15 = arith.constant 0 : index
    %30 = vector.load %arg4[%c0_14, %c0_15] : memref<24x7xf32, #tpu.memory_space<vmem>>, vector<24x7xf32>
    %cst_16 = arith.constant dense<0.000000e+00> : vector<24x7xf32>
    %31 = tpu.matmul %26, %30, %cst_16 {dimension_numbers = #tpu.dot_dimension_numbers<[1], [0], [0], [1], [0, 0, 1, 1], [], []>} : vector<24x24xf32>, vector<24x7xf32>, vector<24x7xf32> -> vector<24x7xf32>
    %32 = arith.addf %29, %31 : vector<24x7xf32>
    %c0_17 = arith.constant 0 : index
    %c0_18 = arith.constant 0 : index
    %33 = vector.load %arg10[%c0_17, %c0_18] : memref<24x7xf32, #tpu.memory_space<vmem>>, vector<24x7xf32>
    tpu.vector_store %arg10[%c0_17, %c0_18], %32 {strides = array<i32>} : memref<24x7xf32, #tpu.memory_space<vmem>>, vector<24x7xf32>,
    %c0_19 = arith.constant 0 : index
    %c0_20 = arith.constant 0 : index
    %34 = vector.load %arg9[%c0_19, %c0_20] : memref<24x1xf32, #tpu.memory_space<vmem>>, vector<24x1xf32>
    tpu.vector_store %arg9[%c0_19, %c0_20], %20 {strides = array<i32>} : memref<24x1xf32, #tpu.memory_space<vmem>>, vector<24x1xf32>,
    %c0_i32_21 = arith.constant 0 : i32
    %35 = arith.cmpi eq, %arg1, %c0_i32_21 : i32
    %36 = arith.extui %35 : i1 to i32
    %c0_i32_22 = arith.constant 0 : i32
    %37 = arith.cmpi ne, %36, %c0_i32_22 : i32
    scf.if %37 {
      %c0_23 = arith.constant 0 : index
      %c0_24 = arith.constant 0 : index
      %38 = vector.load %arg10[%c0_23, %c0_24] : memref<24x7xf32, #tpu.memory_space<vmem>>, vector<24x7xf32>
      %39 = vector.extract_strided_slice %38 {offsets = [0, 6], sizes = [24, 1], strides = [1, 1]} : vector<24x7xf32> to vector<24x1xf32>
      %40 = vector.extract_strided_slice %38 {offsets = [0, 0], sizes = [24, 6], strides = [1, 1]} : vector<24x7xf32> to vector<24x6xf32>
      %41 = vector.broadcast %39 : vector<24x1xf32> to vector<24x6xf32>
      %42 = arith.divf %40, %41 : vector<24x6xf32>
      %c16 = arith.constant 16 : index
      %c0_25 = arith.constant 0 : index
      %43 = vector.load %arg6[%c16, %c0_25] : memref<224x128xf32, #tpu.memory_space<vmem>>, vector<6x6xf32>
      %cst_26 = arith.constant dense<0.000000e+00> : vector<24x6xf32>
      %44 = tpu.matmul %42, %43, %cst_26 {dimension_numbers = #tpu.dot_dimension_numbers<[1], [0], [0], [1], [0, 0, 1, 1], [], []>} : vector<24x6xf32>, vector<6x6xf32>, vector<24x6xf32> -> vector<24x6xf32>
      %c24 = arith.constant 24 : index
      %c0_27 = arith.constant 0 : index
      %45 = vector.load %arg6[%c24, %c0_27] : memref<224x128xf32, #tpu.memory_space<vmem>>, vector<1x6xf32>
      %46 = vector.broadcast %45 : vector<1x6xf32> to vector<24x6xf32>
      %47 = arith.addf %44, %46 : vector<24x6xf32>
      %48 = arith.addf %47, %0 : vector<24x6xf32>
      %cst_28 = arith.constant dense<0.000000e+00> : vector<24xf32>
      %49 = vector.multi_reduction <add>, %48, %cst_28 [1] : vector<24x6xf32> to vector<24xf32>
      %50 = vector.shape_cast %49 : vector<24xf32> to vector<24x1xf32>
      %cst_29 = arith.constant 6.000000e+00 : f32
      %51 = vector.broadcast %cst_29 : f32 to vector<24x1xf32>
      %52 = arith.divf %50, %51 : vector<24x1xf32>
      %53 = vector.broadcast %52 : vector<24x1xf32> to vector<24x6xf32>
      %54 = arith.subf %48, %53 : vector<24x6xf32>
      %55 = arith.mulf %54, %54 : vector<24x6xf32>
      %cst_30 = arith.constant dense<0.000000e+00> : vector<24xf32>
      %56 = vector.multi_reduction <add>, %55, %cst_30 [1] : vector<24x6xf32> to vector<24xf32>
      %57 = vector.shape_cast %56 : vector<24xf32> to vector<24x1xf32>
      %cst_31 = arith.constant 6.000000e+00 : f32
      %58 = vector.broadcast %cst_31 : f32 to vector<24x1xf32>
      %59 = arith.divf %57, %58 : vector<24x1xf32>
      %cst_32 = arith.constant 9.99999974E-6 : f32
      %60 = vector.broadcast %cst_32 : f32 to vector<24x1xf32>
      %61 = arith.addf %59, %60 : vector<24x1xf32>
      %62 = math.rsqrt %61 : vector<24x1xf32>
      %63 = vector.broadcast %62 : vector<24x1xf32> to vector<24x6xf32>
      %64 = arith.mulf %54, %63 : vector<24x6xf32>
      %c32 = arith.constant 32 : index
      %c0_33 = arith.constant 0 : index
      %65 = vector.load %arg6[%c32, %c0_33] : memref<224x128xf32, #tpu.memory_space<vmem>>, vector<1x6xf32>
      %66 = vector.broadcast %65 : vector<1x6xf32> to vector<24x6xf32>
      %67 = arith.mulf %64, %66 : vector<24x6xf32>
      %c40 = arith.constant 40 : index
      %c0_34 = arith.constant 0 : index
      %68 = vector.load %arg6[%c40, %c0_34] : memref<224x128xf32, #tpu.memory_space<vmem>>, vector<1x6xf32>
      %69 = vector.broadcast %68 : vector<1x6xf32> to vector<24x6xf32>
      %70 = arith.addf %67, %69 : vector<24x6xf32>
      %c48 = arith.constant 48 : index
      %c0_35 = arith.constant 0 : index
      %71 = vector.load %arg6[%c48, %c0_35] : memref<224x128xf32, #tpu.memory_space<vmem>>, vector<6x6xf32>
      %cst_36 = arith.constant dense<0.000000e+00> : vector<24x6xf32>
      %72 = tpu.matmul %70, %71, %cst_36 {dimension_numbers = #tpu.dot_dimension_numbers<[1], [0], [0], [1], [0, 0, 1, 1], [], []>} : vector<24x6xf32>, vector<6x6xf32>, vector<24x6xf32> -> vector<24x6xf32>
      %c56 = arith.constant 56 : index
      %c0_37 = arith.constant 0 : index
      %73 = vector.load %arg6[%c56, %c0_37] : memref<224x128xf32, #tpu.memory_space<vmem>>, vector<1x6xf32>
      %74 = vector.broadcast %73 : vector<1x6xf32> to vector<24x6xf32>
      %75 = arith.addf %72, %74 : vector<24x6xf32>
      %76 = arith.addf %75, %70 : vector<24x6xf32>
      %cst_38 = arith.constant 0.000000e+00 : f32
      %77 = vector.broadcast %cst_38 : f32 to vector<24x6xf32>
      %78 = arith.maximumf %76, %77 : vector<24x6xf32>
      %c64 = arith.constant 64 : index
      %c0_39 = arith.constant 0 : index
      %79 = vector.load %arg6[%c64, %c0_39] : memref<224x128xf32, #tpu.memory_space<vmem>>, vector<6x4xf32>
      %cst_40 = arith.constant dense<0.000000e+00> : vector<24x4xf32>
      %80 = tpu.matmul %78, %79, %cst_40 {dimension_numbers = #tpu.dot_dimension_numbers<[1], [0], [0], [1], [0, 0, 1, 1], [], []>} : vector<24x6xf32>, vector<6x4xf32>, vector<24x4xf32> -> vector<24x4xf32>
      %c72 = arith.constant 72 : index
      %c0_41 = arith.constant 0 : index
      %81 = vector.load %arg6[%c72, %c0_41] : memref<224x128xf32, #tpu.memory_space<vmem>>, vector<1x4xf32>
      %82 = vector.broadcast %81 : vector<1x4xf32> to vector<24x4xf32>
      %83 = arith.addf %80, %82 : vector<24x4xf32>
      %c80 = arith.constant 80 : index
      %c0_42 = arith.constant 0 : index
      %84 = vector.load %arg6[%c80, %c0_42] : memref<224x128xf32, #tpu.memory_space<vmem>>, vector<5x10xf32>
      %c88 = arith.constant 88 : index
      %c0_43 = arith.constant 0 : index
      %85 = vector.load %arg6[%c88, %c0_43] : memref<224x128xf32, #tpu.memory_space<vmem>>, vector<10x10xf32>
      %c104 = arith.constant 104 : index
      %c0_44 = arith.constant 0 : index
      %86 = vector.load %arg6[%c104, %c0_44] : memref<224x128xf32, #tpu.memory_space<vmem>>, vector<10x10xf32>
      %c120 = arith.constant 120 : index
      %c0_45 = arith.constant 0 : index
      %87 = vector.load %arg6[%c120, %c0_45] : memref<224x128xf32, #tpu.memory_space<vmem>>, vector<10x10xf32>
      %c136 = arith.constant 136 : index
      %c0_46 = arith.constant 0 : index
      %88 = vector.load %arg6[%c136, %c0_46] : memref<224x128xf32, #tpu.memory_space<vmem>>, vector<10x10xf32>
      %c152 = arith.constant 152 : index
      %c0_47 = arith.constant 0 : index
      %89 = vector.load %arg6[%c152, %c0_47] : memref<224x128xf32, #tpu.memory_space<vmem>>, vector<10x6xf32>
      %c168 = arith.constant 168 : index
      %c0_48 = arith.constant 0 : index
      %90 = vector.load %arg6[%c168, %c0_48] : memref<224x128xf32, #tpu.memory_space<vmem>>, vector<1x10xf32>
      %c176 = arith.constant 176 : index
      %c0_49 = arith.constant 0 : index
      %91 = vector.load %arg6[%c176, %c0_49] : memref<224x128xf32, #tpu.memory_space<vmem>>, vector<1x10xf32>
      %c184 = arith.constant 184 : index
      %c0_50 = arith.constant 0 : index
      %92 = vector.load %arg6[%c184, %c0_50] : memref<224x128xf32, #tpu.memory_space<vmem>>, vector<1x10xf32>
      %c192 = arith.constant 192 : index
      %c0_51 = arith.constant 0 : index
      %93 = vector.load %arg6[%c192, %c0_51] : memref<224x128xf32, #tpu.memory_space<vmem>>, vector<1x10xf32>
      %c200 = arith.constant 200 : index
      %c0_52 = arith.constant 0 : index
      %94 = vector.load %arg6[%c200, %c0_52] : memref<224x128xf32, #tpu.memory_space<vmem>>, vector<1x10xf32>
      %c208 = arith.constant 208 : index
      %c0_53 = arith.constant 0 : index
      %95 = vector.load %arg6[%c208, %c0_53] : memref<224x128xf32, #tpu.memory_space<vmem>>, vector<1x6xf32>
      %c216 = arith.constant 216 : index
      %c0_54 = arith.constant 0 : index
      %96 = vector.load %arg6[%c216, %c0_54] : memref<224x128xf32, #tpu.memory_space<vmem>>, vector<1x6xf32>
      %c0_55 = arith.constant 0 : index
      %c0_56 = arith.constant 0 : index
      %97 = vector.load %arg5[%c0_55, %c0_56] : memref<24x1xf32, #tpu.memory_space<vmem>>, vector<24x1xf32>
      %98 = tpu.concatenate %83, %97 in 1 : vector<24x4xf32>, vector<24x1xf32> -> vector<24x5xf32>
      %cst_57 = arith.constant dense<0.000000e+00> : vector<24x10xf32>
      %99 = tpu.matmul %98, %84, %cst_57 {dimension_numbers = #tpu.dot_dimension_numbers<[1], [0], [0], [1], [0, 0, 1, 1], [], []>} : vector<24x5xf32>, vector<5x10xf32>, vector<24x10xf32> -> vector<24x10xf32>
      %100 = vector.broadcast %90 : vector<1x10xf32> to vector<24x10xf32>
      %101 = arith.addf %99, %100 : vector<24x10xf32>
      %102 = math.tanh %101 : vector<24x10xf32>
      %cst_58 = arith.constant dense<0.000000e+00> : vector<24x10xf32>
      %103 = tpu.matmul %102, %85, %cst_58 {dimension_numbers = #tpu.dot_dimension_numbers<[1], [0], [0], [1], [0, 0, 1, 1], [], []>} : vector<24x10xf32>, vector<10x10xf32>, vector<24x10xf32> -> vector<24x10xf32>
      %104 = vector.broadcast %91 : vector<1x10xf32> to vector<24x10xf32>
      %105 = arith.addf %103, %104 : vector<24x10xf32>
      %106 = math.tanh %105 : vector<24x10xf32>
      %cst_59 = arith.constant dense<0.000000e+00> : vector<24x10xf32>
      %107 = tpu.matmul %106, %86, %cst_59 {dimension_numbers = #tpu.dot_dimension_numbers<[1], [0], [0], [1], [0, 0, 1, 1], [], []>} : vector<24x10xf32>, vector<10x10xf32>, vector<24x10xf32> -> vector<24x10xf32>
      %108 = vector.broadcast %92 : vector<1x10xf32> to vector<24x10xf32>
      %109 = arith.addf %107, %108 : vector<24x10xf32>
      %110 = math.tanh %109 : vector<24x10xf32>
      %cst_60 = arith.constant dense<0.000000e+00> : vector<24x10xf32>
      %111 = tpu.matmul %110, %87, %cst_60 {dimension_numbers = #tpu.dot_dimension_numbers<[1], [0], [0], [1], [0, 0, 1, 1], [], []>} : vector<24x10xf32>, vector<10x10xf32>, vector<24x10xf32> -> vector<24x10xf32>
      %112 = vector.broadcast %93 : vector<1x10xf32> to vector<24x10xf32>
      %113 = arith.addf %111, %112 : vector<24x10xf32>
      %114 = math.tanh %113 : vector<24x10xf32>
      %cst_61 = arith.constant dense<0.000000e+00> : vector<24x10xf32>
      %115 = tpu.matmul %114, %88, %cst_61 {dimension_numbers = #tpu.dot_dimension_numbers<[1], [0], [0], [1], [0, 0, 1, 1], [], []>} : vector<24x10xf32>, vector<10x10xf32>, vector<24x10xf32> -> vector<24x10xf32>
      %116 = vector.broadcast %94 : vector<1x10xf32> to vector<24x10xf32>
      %117 = arith.addf %115, %116 : vector<24x10xf32>
      %118 = math.tanh %117 : vector<24x10xf32>
      %cst_62 = arith.constant dense<0.000000e+00> : vector<24x6xf32>
      %119 = tpu.matmul %118, %89, %cst_62 {dimension_numbers = #tpu.dot_dimension_numbers<[1], [0], [0], [1], [0, 0, 1, 1], [], []>} : vector<24x10xf32>, vector<10x6xf32>, vector<24x6xf32> -> vector<24x6xf32>
      %120 = vector.broadcast %95 : vector<1x6xf32> to vector<24x6xf32>
      %121 = arith.addf %119, %120 : vector<24x6xf32>
      %122 = vector.broadcast %96 : vector<1x6xf32> to vector<24x6xf32>
      %123 = arith.mulf %121, %122 : vector<24x6xf32>
      %cst_63 = arith.constant dense<0.000000e+00> : vector<24xf32>
      %124 = vector.multi_reduction <add>, %123, %cst_63 [1] : vector<24x6xf32> to vector<24xf32>
      %125 = vector.shape_cast %124 : vector<24xf32> to vector<24x1xf32>
      %126 = vector.shape_cast %96 : vector<1x6xf32> to vector<1x6xf32>
      %127 = vector.broadcast %126 : vector<1x6xf32> to vector<24x6xf32>
      %cst_64 = arith.constant dense<0.000000e+00> : vector<24x10xf32>
      %128 = tpu.matmul %127, %89, %cst_64 {dimension_numbers = #tpu.dot_dimension_numbers<[1], [1], [0], [0], [0, 0, 1, 0], [], []>} : vector<24x6xf32>, vector<10x6xf32>, vector<24x10xf32> -> vector<24x10xf32>
      %129 = arith.mulf %118, %118 : vector<24x10xf32>
      %cst_65 = arith.constant 1.000000e+00 : f32
      %130 = vector.broadcast %cst_65 : f32 to vector<24x10xf32>
      %131 = arith.subf %130, %129 : vector<24x10xf32>
      %132 = arith.mulf %128, %131 : vector<24x10xf32>
      %cst_66 = arith.constant dense<0.000000e+00> : vector<24x10xf32>
      %133 = tpu.matmul %132, %88, %cst_66 {dimension_numbers = #tpu.dot_dimension_numbers<[1], [1], [0], [0], [0, 0, 1, 0], [], []>} : vector<24x10xf32>, vector<10x10xf32>, vector<24x10xf32> -> vector<24x10xf32>
      %134 = arith.mulf %114, %114 : vector<24x10xf32>
      %cst_67 = arith.constant 1.000000e+00 : f32
      %135 = vector.broadcast %cst_67 : f32 to vector<24x10xf32>
      %136 = arith.subf %135, %134 : vector<24x10xf32>
      %137 = arith.mulf %133, %136 : vector<24x10xf32>
      %cst_68 = arith.constant dense<0.000000e+00> : vector<24x10xf32>
      %138 = tpu.matmul %137, %87, %cst_68 {dimension_numbers = #tpu.dot_dimension_numbers<[1], [1], [0], [0], [0, 0, 1, 0], [], []>} : vector<24x10xf32>, vector<10x10xf32>, vector<24x10xf32> -> vector<24x10xf32>
      %139 = arith.mulf %110, %110 : vector<24x10xf32>
      %cst_69 = arith.constant 1.000000e+00 : f32
      %140 = vector.broadcast %cst_69 : f32 to vector<24x10xf32>
      %141 = arith.subf %140, %139 : vector<24x10xf32>
      %142 = arith.mulf %138, %141 : vector<24x10xf32>
      %cst_70 = arith.constant dense<0.000000e+00> : vector<24x10xf32>
      %143 = tpu.matmul %142, %86, %cst_70 {dimension_numbers = #tpu.dot_dimension_numbers<[1], [1], [0], [0], [0, 0, 1, 0], [], []>} : vector<24x10xf32>, vector<10x10xf32>, vector<24x10xf32> -> vector<24x10xf32>
      %144 = arith.mulf %106, %106 : vector<24x10xf32>
      %cst_71 = arith.constant 1.000000e+00 : f32
      %145 = vector.broadcast %cst_71 : f32 to vector<24x10xf32>
      %146 = arith.subf %145, %144 : vector<24x10xf32>
      %147 = arith.mulf %143, %146 : vector<24x10xf32>
      %cst_72 = arith.constant dense<0.000000e+00> : vector<24x10xf32>
      %148 = tpu.matmul %147, %85, %cst_72 {dimension_numbers = #tpu.dot_dimension_numbers<[1], [1], [0], [0], [0, 0, 1, 0], [], []>} : vector<24x10xf32>, vector<10x10xf32>, vector<24x10xf32> -> vector<24x10xf32>
      %149 = arith.mulf %102, %102 : vector<24x10xf32>
      %cst_73 = arith.constant 1.000000e+00 : f32
      %150 = vector.broadcast %cst_73 : f32 to vector<24x10xf32>
      %151 = arith.subf %150, %149 : vector<24x10xf32>
      %152 = arith.mulf %148, %151 : vector<24x10xf32>
      %cst_74 = arith.constant dense<0.000000e+00> : vector<24x5xf32>
      %153 = tpu.matmul %152, %84, %cst_74 {dimension_numbers = #tpu.dot_dimension_numbers<[1], [1], [0], [0], [0, 0, 1, 0], [], []>} : vector<24x10xf32>, vector<5x10xf32>, vector<24x5xf32> -> vector<24x5xf32>
      %154 = vector.extract_strided_slice %153 {offsets = [0, 0], sizes = [24, 4], strides = [1, 1]} : vector<24x5xf32> to vector<24x4xf32>
      %155 = vector.extract_strided_slice %153 {offsets = [0, 4], sizes = [24, 1], strides = [1, 1]} : vector<24x5xf32> to vector<24x1xf32>
      %cst_75 = arith.constant 0.000000e+00 : f32
      %156 = vector.broadcast %cst_75 : f32 to vector<24x118xf32>
      %157 = tpu.concatenate %83, %125, %154, %155, %156 in 1 : vector<24x4xf32>, vector<24x1xf32>, vector<24x4xf32>, vector<24x1xf32>, vector<24x118xf32> -> vector<24x128xf32>
      %c0_76 = arith.constant 0 : index
      %c0_77 = arith.constant 0 : index
      %158 = vector.load %arg7[%c0_76, %c0_77] : memref<24x128xf32, #tpu.memory_space<vmem>>, vector<24x128xf32>
      tpu.vector_store %arg7[%c0_76, %c0_77], %157 {strides = array<i32>} : memref<24x128xf32, #tpu.memory_space<vmem>>, vector<24x128xf32>,
    } else {
    }
    return
  }
  func.func @transform_0(%arg0: i32, %arg1: i32) -> (i32, i32) {
    %c0_i32 = arith.constant 0 : i32
    %c0_i32_0 = arith.constant 0 : i32
    return %arg0, %c0_i32 : i32, i32
  }
  func.func @transform_1(%arg0: i32, %arg1: i32) -> (i32, i32) {
    %c0_i32 = arith.constant 0 : i32
    %c0_i32_0 = arith.constant 0 : i32
    return %c0_i32, %arg1 : i32, i32
  }
  func.func @transform_2(%arg0: i32, %arg1: i32) -> (i32, i32) {
    %c0_i32 = arith.constant 0 : i32
    %c0_i32_0 = arith.constant 0 : i32
    return %arg1, %c0_i32 : i32, i32
  }
  func.func @transform_3(%arg0: i32, %arg1: i32) -> (i32, i32) {
    %c0_i32 = arith.constant 0 : i32
    %c0_i32_0 = arith.constant 0 : i32
    return %arg0, %c0_i32 : i32, i32
  }
  func.func @transform_4(%arg0: i32, %arg1: i32) -> (i32, i32) {
    %c0_i32 = arith.constant 0 : i32
    %c0_i32_0 = arith.constant 0 : i32
    %c0_i32_1 = arith.constant 0 : i32
    return %c0_i32, %c0_i32_0 : i32, i32
  }
  func.func @transform_5(%arg0: i32, %arg1: i32) -> (i32, i32) {
    %c0_i32 = arith.constant 0 : i32
    %c0_i32_0 = arith.constant 0 : i32
    return %arg0, %c0_i32 : i32, i32
  }
}

module attributes {stable_mosaic.version = 11 : i64} {
  func.func @_hpm_kernel(%arg0: i32, %arg1: i32, %arg2: memref<24x128xf32, #tpu.memory_space<vmem>>, %arg3: memref<9x24xf32, #tpu.memory_space<vmem>>, %arg4: memref<24x10xf32, #tpu.memory_space<vmem>>, %arg5: memref<104x128xf32, #tpu.memory_space<vmem>>, %arg6: memref<8x24xf32, #tpu.memory_space<vmem>>, %arg7: memref<24x9xf32, #tpu.memory_space<vmem>>, %arg8: memref<24x1xf32, #tpu.memory_space<vmem>>, %arg9: memref<24x10xf32, #tpu.memory_space<vmem>>) attributes {dimension_semantics = [#tpu.dimension_semantics<parallel>, #tpu.dimension_semantics<arbitrary>], iteration_bounds = array<i64: 1, 1>, scalar_prefetch = 0 : i64, scratch_operands = 3 : i64, tpu.core_type = #tpu.core_type<tc>, window_params = [{transform_indices = @transform_0, window_bounds = array<i64: 24, 128>}, {transform_indices = @transform_1, window_bounds = array<i64: 9, 24>}, {transform_indices = @transform_2, window_bounds = array<i64: 24, 10>}, {pipeline_mode = #tpu.pipeline_mode<synchronous>, transform_indices = @transform_3, window_bounds = array<i64: 104, 128>}, {transform_indices = @transform_4, window_bounds = array<i64: 8, 24>}]} {
    %c0 = arith.constant 0 : index
    %c0_0 = arith.constant 0 : index
    %0 = vector.load %arg2[%c0, %c0_0] : memref<24x128xf32, #tpu.memory_space<vmem>>, vector<24x128xf32>
    %1 = vector.extract_strided_slice %0 {offsets = [0, 0], sizes = [24, 9], strides = [1, 1]} : vector<24x128xf32> to vector<24x9xf32>
    %c0_i32 = arith.constant 0 : i32
    %2 = arith.cmpi eq, %arg1, %c0_i32 : i32
    %3 = arith.extui %2 : i1 to i32
    %c0_i32_1 = arith.constant 0 : i32
    %4 = arith.cmpi ne, %3, %c0_i32_1 : i32
    scf.if %4 {
      %c0_23 = arith.constant 0 : index
      %c0_24 = arith.constant 0 : index
      %39 = vector.load %arg5[%c0_23, %c0_24] : memref<104x128xf32, #tpu.memory_space<vmem>>, vector<9x9xf32>
      %cst_25 = arith.constant dense<0.000000e+00> : vector<24x9xf32>
      %40 = tpu.matmul %1, %39, %cst_25 {dimension_numbers = #tpu.dot_dimension_numbers<[1], [0], [0], [1], [0, 0, 1, 1], [], []>} : vector<24x9xf32>, vector<9x9xf32>, vector<24x9xf32> -> vector<24x9xf32>
      %c16 = arith.constant 16 : index
      %c0_26 = arith.constant 0 : index
      %41 = vector.load %arg5[%c16, %c0_26] : memref<104x128xf32, #tpu.memory_space<vmem>>, vector<1x9xf32>
      %42 = vector.broadcast %41 : vector<1x9xf32> to vector<24x9xf32>
      %43 = arith.addf %40, %42 : vector<24x9xf32>
      %c0_27 = arith.constant 0 : index
      %c0_28 = arith.constant 0 : index
      %44 = vector.load %arg7[%c0_27, %c0_28] : memref<24x9xf32, #tpu.memory_space<vmem>>, vector<24x9xf32>
      tpu.vector_store %arg7[%c0_27, %c0_28], %43 {strides = array<i32>} : memref<24x9xf32, #tpu.memory_space<vmem>>, vector<24x9xf32>,
      %cst_29 = arith.constant 0xFF800000 : f32
      %45 = vector.broadcast %cst_29 : f32 to vector<24x1xf32>
      %c0_30 = arith.constant 0 : index
      %c0_31 = arith.constant 0 : index
      %46 = vector.load %arg8[%c0_30, %c0_31] : memref<24x1xf32, #tpu.memory_space<vmem>>, vector<24x1xf32>
      tpu.vector_store %arg8[%c0_30, %c0_31], %45 {strides = array<i32>} : memref<24x1xf32, #tpu.memory_space<vmem>>, vector<24x1xf32>,
      %cst_32 = arith.constant 0.000000e+00 : f32
      %47 = vector.broadcast %cst_32 : f32 to vector<24x10xf32>
      %c0_33 = arith.constant 0 : index
      %c0_34 = arith.constant 0 : index
      %48 = vector.load %arg9[%c0_33, %c0_34] : memref<24x10xf32, #tpu.memory_space<vmem>>, vector<24x10xf32>
      tpu.vector_store %arg9[%c0_33, %c0_34], %47 {strides = array<i32>} : memref<24x10xf32, #tpu.memory_space<vmem>>, vector<24x10xf32>,
    } else {
    }
    %c0_2 = arith.constant 0 : index
    %c0_3 = arith.constant 0 : index
    %5 = vector.load %arg7[%c0_2, %c0_3] : memref<24x9xf32, #tpu.memory_space<vmem>>, vector<24x9xf32>
    %c0_4 = arith.constant 0 : index
    %c0_5 = arith.constant 0 : index
    %6 = vector.load %arg3[%c0_4, %c0_5] : memref<9x24xf32, #tpu.memory_space<vmem>>, vector<9x24xf32>
    %cst = arith.constant dense<0.000000e+00> : vector<24x24xf32>
    %7 = tpu.matmul %5, %6, %cst {dimension_numbers = #tpu.dot_dimension_numbers<[1], [0], [0], [1], [0, 0, 1, 1], [], []>} : vector<24x9xf32>, vector<9x24xf32>, vector<24x24xf32> -> vector<24x24xf32>
    %8 = tpu.iota {dimensions = array<i32: 1>} : vector<1x24xi32>
    %c24_i32 = arith.constant 24 : i32
    %9 = arith.muli %arg1, %c24_i32 : i32
    %10 = vector.broadcast %9 : i32 to vector<1x24xi32>
    %11 = arith.addi %8, %10 : vector<1x24xi32>
    %c21_i32 = arith.constant 21 : i32
    %12 = vector.broadcast %c21_i32 : i32 to vector<1x24xi32>
    %13 = arith.cmpi slt, %11, %12 : vector<1x24xi32>
    %cst_6 = arith.constant 0xFF800000 : f32
    %14 = vector.shape_cast %13 : vector<1x24xi1> to vector<1x24xi1>
    %15 = vector.broadcast %14 : vector<1x24xi1> to vector<24x24xi1>
    %16 = vector.broadcast %cst_6 : f32 to vector<24x24xf32>
    %17 = arith.select %15, %7, %16 : vector<24x24xi1>, vector<24x24xf32>
    %c0_7 = arith.constant 0 : index
    %c0_8 = arith.constant 0 : index
    %18 = vector.load %arg8[%c0_7, %c0_8] : memref<24x1xf32, #tpu.memory_space<vmem>>, vector<24x1xf32>
    %cst_9 = arith.constant dense<0xFF800000> : vector<24xf32>
    %19 = vector.multi_reduction <maximumf>, %17, %cst_9 [1] : vector<24x24xf32> to vector<24xf32>
    %20 = vector.shape_cast %19 : vector<24xf32> to vector<24x1xf32>
    %21 = arith.maximumf %18, %20 : vector<24x1xf32>
    %c0_10 = arith.constant 0 : index
    %c0_11 = arith.constant 0 : index
    %22 = vector.load %arg8[%c0_10, %c0_11] : memref<24x1xf32, #tpu.memory_space<vmem>>, vector<24x1xf32>
    %23 = arith.subf %22, %21 : vector<24x1xf32>
    %24 = math.exp %23 : vector<24x1xf32>
    %25 = vector.broadcast %21 : vector<24x1xf32> to vector<24x24xf32>
    %26 = arith.subf %17, %25 : vector<24x24xf32>
    %27 = math.exp %26 : vector<24x24xf32>
    %c0_12 = arith.constant 0 : index
    %c0_13 = arith.constant 0 : index
    %28 = vector.load %arg9[%c0_12, %c0_13] : memref<24x10xf32, #tpu.memory_space<vmem>>, vector<24x10xf32>
    %29 = vector.broadcast %24 : vector<24x1xf32> to vector<24x10xf32>
    %30 = arith.mulf %29, %28 : vector<24x10xf32>
    %c0_14 = arith.constant 0 : index
    %c0_15 = arith.constant 0 : index
    %31 = vector.load %arg4[%c0_14, %c0_15] : memref<24x10xf32, #tpu.memory_space<vmem>>, vector<24x10xf32>
    %cst_16 = arith.constant dense<0.000000e+00> : vector<24x10xf32>
    %32 = tpu.matmul %27, %31, %cst_16 {dimension_numbers = #tpu.dot_dimension_numbers<[1], [0], [0], [1], [0, 0, 1, 1], [], []>} : vector<24x24xf32>, vector<24x10xf32>, vector<24x10xf32> -> vector<24x10xf32>
    %33 = arith.addf %30, %32 : vector<24x10xf32>
    %c0_17 = arith.constant 0 : index
    %c0_18 = arith.constant 0 : index
    %34 = vector.load %arg9[%c0_17, %c0_18] : memref<24x10xf32, #tpu.memory_space<vmem>>, vector<24x10xf32>
    tpu.vector_store %arg9[%c0_17, %c0_18], %33 {strides = array<i32>} : memref<24x10xf32, #tpu.memory_space<vmem>>, vector<24x10xf32>,
    %c0_19 = arith.constant 0 : index
    %c0_20 = arith.constant 0 : index
    %35 = vector.load %arg8[%c0_19, %c0_20] : memref<24x1xf32, #tpu.memory_space<vmem>>, vector<24x1xf32>
    tpu.vector_store %arg8[%c0_19, %c0_20], %21 {strides = array<i32>} : memref<24x1xf32, #tpu.memory_space<vmem>>, vector<24x1xf32>,
    %c0_i32_21 = arith.constant 0 : i32
    %36 = arith.cmpi eq, %arg1, %c0_i32_21 : i32
    %37 = arith.extui %36 : i1 to i32
    %c0_i32_22 = arith.constant 0 : i32
    %38 = arith.cmpi ne, %37, %c0_i32_22 : i32
    scf.if %38 {
      %c0_23 = arith.constant 0 : index
      %c0_24 = arith.constant 0 : index
      %39 = vector.load %arg9[%c0_23, %c0_24] : memref<24x10xf32, #tpu.memory_space<vmem>>, vector<24x10xf32>
      %40 = vector.extract_strided_slice %39 {offsets = [0, 9], sizes = [24, 1], strides = [1, 1]} : vector<24x10xf32> to vector<24x1xf32>
      %41 = vector.extract_strided_slice %39 {offsets = [0, 0], sizes = [24, 9], strides = [1, 1]} : vector<24x10xf32> to vector<24x9xf32>
      %42 = vector.broadcast %40 : vector<24x1xf32> to vector<24x9xf32>
      %43 = arith.divf %41, %42 : vector<24x9xf32>
      %c24 = arith.constant 24 : index
      %c0_25 = arith.constant 0 : index
      %44 = vector.load %arg5[%c24, %c0_25] : memref<104x128xf32, #tpu.memory_space<vmem>>, vector<9x9xf32>
      %cst_26 = arith.constant dense<0.000000e+00> : vector<24x9xf32>
      %45 = tpu.matmul %43, %44, %cst_26 {dimension_numbers = #tpu.dot_dimension_numbers<[1], [0], [0], [1], [0, 0, 1, 1], [], []>} : vector<24x9xf32>, vector<9x9xf32>, vector<24x9xf32> -> vector<24x9xf32>
      %c40 = arith.constant 40 : index
      %c0_27 = arith.constant 0 : index
      %46 = vector.load %arg5[%c40, %c0_27] : memref<104x128xf32, #tpu.memory_space<vmem>>, vector<1x9xf32>
      %47 = vector.broadcast %46 : vector<1x9xf32> to vector<24x9xf32>
      %48 = arith.addf %45, %47 : vector<24x9xf32>
      %49 = arith.addf %48, %1 : vector<24x9xf32>
      %cst_28 = arith.constant dense<0.000000e+00> : vector<24xf32>
      %50 = vector.multi_reduction <add>, %49, %cst_28 [1] : vector<24x9xf32> to vector<24xf32>
      %51 = vector.shape_cast %50 : vector<24xf32> to vector<24x1xf32>
      %cst_29 = arith.constant 9.000000e+00 : f32
      %52 = vector.broadcast %cst_29 : f32 to vector<24x1xf32>
      %53 = arith.divf %51, %52 : vector<24x1xf32>
      %54 = vector.broadcast %53 : vector<24x1xf32> to vector<24x9xf32>
      %55 = arith.subf %49, %54 : vector<24x9xf32>
      %56 = arith.mulf %55, %55 : vector<24x9xf32>
      %cst_30 = arith.constant dense<0.000000e+00> : vector<24xf32>
      %57 = vector.multi_reduction <add>, %56, %cst_30 [1] : vector<24x9xf32> to vector<24xf32>
      %58 = vector.shape_cast %57 : vector<24xf32> to vector<24x1xf32>
      %cst_31 = arith.constant 9.000000e+00 : f32
      %59 = vector.broadcast %cst_31 : f32 to vector<24x1xf32>
      %60 = arith.divf %58, %59 : vector<24x1xf32>
      %cst_32 = arith.constant 9.99999974E-6 : f32
      %61 = vector.broadcast %cst_32 : f32 to vector<24x1xf32>
      %62 = arith.addf %60, %61 : vector<24x1xf32>
      %63 = math.rsqrt %62 : vector<24x1xf32>
      %64 = vector.broadcast %63 : vector<24x1xf32> to vector<24x9xf32>
      %65 = arith.mulf %55, %64 : vector<24x9xf32>
      %c48 = arith.constant 48 : index
      %c0_33 = arith.constant 0 : index
      %66 = vector.load %arg5[%c48, %c0_33] : memref<104x128xf32, #tpu.memory_space<vmem>>, vector<1x9xf32>
      %67 = vector.broadcast %66 : vector<1x9xf32> to vector<24x9xf32>
      %68 = arith.mulf %65, %67 : vector<24x9xf32>
      %c56 = arith.constant 56 : index
      %c0_34 = arith.constant 0 : index
      %69 = vector.load %arg5[%c56, %c0_34] : memref<104x128xf32, #tpu.memory_space<vmem>>, vector<1x9xf32>
      %70 = vector.broadcast %69 : vector<1x9xf32> to vector<24x9xf32>
      %71 = arith.addf %68, %70 : vector<24x9xf32>
      %c64 = arith.constant 64 : index
      %c0_35 = arith.constant 0 : index
      %72 = vector.load %arg5[%c64, %c0_35] : memref<104x128xf32, #tpu.memory_space<vmem>>, vector<9x9xf32>
      %cst_36 = arith.constant dense<0.000000e+00> : vector<24x9xf32>
      %73 = tpu.matmul %48, %72, %cst_36 {dimension_numbers = #tpu.dot_dimension_numbers<[1], [0], [0], [1], [0, 0, 1, 1], [], []>} : vector<24x9xf32>, vector<9x9xf32>, vector<24x9xf32> -> vector<24x9xf32>
      %c80 = arith.constant 80 : index
      %c0_37 = arith.constant 0 : index
      %74 = vector.load %arg5[%c80, %c0_37] : memref<104x128xf32, #tpu.memory_space<vmem>>, vector<1x9xf32>
      %75 = vector.broadcast %74 : vector<1x9xf32> to vector<24x9xf32>
      %76 = arith.addf %73, %75 : vector<24x9xf32>
      %77 = arith.addf %76, %71 : vector<24x9xf32>
      %cst_38 = arith.constant 0.000000e+00 : f32
      %78 = vector.broadcast %cst_38 : f32 to vector<24x9xf32>
      %79 = arith.maximumf %77, %78 : vector<24x9xf32>
      %c88 = arith.constant 88 : index
      %c0_39 = arith.constant 0 : index
      %80 = vector.load %arg5[%c88, %c0_39] : memref<104x128xf32, #tpu.memory_space<vmem>>, vector<1x9xf32>
      %cst_40 = arith.constant dense<0.000000e+00> : vector<1x24xf32>
      %81 = tpu.matmul %80, %79, %cst_40 {dimension_numbers = #tpu.dot_dimension_numbers<[1], [1], [0], [0], [0, 0, 1, 0], [], []>} : vector<1x9xf32>, vector<24x9xf32>, vector<1x24xf32> -> vector<1x24xf32>
      %c96 = arith.constant 96 : index
      %c0_41 = arith.constant 0 : index
      %82 = vector.load %arg5[%c96, %c0_41] : memref<104x128xf32, #tpu.memory_space<vmem>>, vector<1x1xf32>
      %83 = vector.broadcast %82 : vector<1x1xf32> to vector<1x24xf32>
      %84 = arith.addf %81, %83 : vector<1x24xf32>
      %85 = tpu.iota {dimensions = array<i32: 1>} : vector<1x128xi32>
      %c9_i32 = arith.constant 9 : i32
      %86 = vector.broadcast %c9_i32 : i32 to vector<1x128xi32>
      %87 = arith.cmpi eq, %85, %86 : vector<1x128xi32>
      %88 = arith.extui %87 : vector<1x128xi1> to vector<1x128xi32>
      %89 = arith.sitofp %88 : vector<1x128xi32> to vector<1x128xf32>
      %cst_42 = arith.constant dense<0.000000e+00> : vector<1x24xf32>
      %90 = tpu.matmul %89, %0, %cst_42 {dimension_numbers = #tpu.dot_dimension_numbers<[1], [1], [0], [0], [0, 0, 1, 0], [], []>} : vector<1x128xf32>, vector<24x128xf32>, vector<1x24xf32> -> vector<1x24xf32>
      %91 = arith.subf %90, %84 : vector<1x24xf32>
      %92 = vector.shape_cast %91 : vector<1x24xf32> to vector<1x24xf32>
      %93 = vector.broadcast %92 : vector<1x24xf32> to vector<8x24xf32>
      %c0_43 = arith.constant 0 : index
      %c0_44 = arith.constant 0 : index
      %94 = vector.load %arg6[%c0_43, %c0_44] : memref<8x24xf32, #tpu.memory_space<vmem>>, vector<8x24xf32>
      tpu.vector_store %arg6[%c0_43, %c0_44], %93 {strides = array<i32>} : memref<8x24xf32, #tpu.memory_space<vmem>>, vector<8x24xf32>,
    } else {
    }
    return
  }
  func.func @transform_0(%arg0: i32, %arg1: i32) -> (i32, i32) {
    %c0_i32 = arith.constant 0 : i32
    %c0_i32_0 = arith.constant 0 : i32
    return %arg0, %c0_i32 : i32, i32
  }
  func.func @transform_1(%arg0: i32, %arg1: i32) -> (i32, i32) {
    %c0_i32 = arith.constant 0 : i32
    %c0_i32_0 = arith.constant 0 : i32
    return %c0_i32, %arg1 : i32, i32
  }
  func.func @transform_2(%arg0: i32, %arg1: i32) -> (i32, i32) {
    %c0_i32 = arith.constant 0 : i32
    %c0_i32_0 = arith.constant 0 : i32
    return %arg1, %c0_i32 : i32, i32
  }
  func.func @transform_3(%arg0: i32, %arg1: i32) -> (i32, i32) {
    %c0_i32 = arith.constant 0 : i32
    %c0_i32_0 = arith.constant 0 : i32
    %c0_i32_1 = arith.constant 0 : i32
    return %c0_i32, %c0_i32_0 : i32, i32
  }
  func.func @transform_4(%arg0: i32, %arg1: i32) -> (i32, i32) {
    %c0_i32 = arith.constant 0 : i32
    %c0_i32_0 = arith.constant 0 : i32
    return %c0_i32, %arg0 : i32, i32
  }
}

</mosaic_0001>

<llo_original>
// kernel: pinn_forward.4
$region0: #{pinn_forward.4}
  #allocation0 [shape = 'u32[]', space=smem, size = 0x4, offset = 0x4, fixed_abs, tag = 'smem constant byte address 0x4 - core index']
  #allocation1 [shape = 'u32[144,128]{1,0:T(1,128)}', space=vmem, size = 0x12000, scoped, tag = 'internal scratch']
  %s0 = inlined_call_operand.vmem [shape: f32[24,6], index: 0, kind: input, shape index: {}]
  %s1 = inlined_call_operand.vmem [shape: f32[32,128], index: 1, kind: input, shape index: {}]
  %s2 = inlined_call_operand.vmem [shape: f32[6,24], index: 2, kind: output, shape index: {0}]
  %s3 = inlined_call_operand.vmem [shape: f32[24,7], index: 3, kind: output, shape index: {1}]
  %4 = xla_tuple %s2, %s3
  %s5 = sld [smem:[#allocation0]]
  $region26: #{pinn_forward.4} parent=0
    _
  %s7 = ssub.s32 1, %s5
  %s8 = scalar_select 0, %s7, %s5
  // Predicated region
  $region2: #{pinn_forward.4} parent=0 // pred_check
    _
  $region3: #{pinn_forward.4} parent=0 // pred_check_branch
    %10 = sbr.rel (0) target = $region5
  $region4: #{pinn_forward.4} parent=0 // pred_region
    _
  $region5: #{pinn_forward.4} parent=0 // pred_fallthru
    _
  // Predicated region
  $region6: #{pinn_forward.4} parent=0 // pred_check
    _
  $region7: #{pinn_forward.4} parent=0 // pred_check_branch
    %12 = sbr.rel (0) target = $region9
  $region8: #{pinn_forward.4} parent=0 // pred_region
    _
  $region9: #{pinn_forward.4} parent=0 // pred_fallthru
    _
  %v13 = vld [vmem:[%s0] sm:$0xff]
  %v14 = vld [vmem:[%s0 + $0x8] sm:$0xff]
  %v15 = vld [vmem:[%s0 + $0x10] sm:$0xff]
  %v16 = vld [vmem:[%s1] sm:$0x3f]
  %v17 = vld [vmem:[%s1 + $0x8] sm:$0x3f]
  %v18 = vld [vmem:[%s1 + $0x10] sm:$0x3f]
  %v19 = vld [vmem:[%s1 + $0x18] sm:$0x1]
  %21 = vset.pattern.permute.xlu0 0
  %22 = vperm.xlu0 %21, %v17
  %v23 = vpop.permute.xlu0 %22
  %vm25 = vcmask 48128
  %v27 = vsel %vm25, %v16, 0
  %v30 = vsel %vm25, %v13, 0
  %v33 = vsel %vm25, %v14, 0
  %v36 = vsel %vm25, %v15, 0
  %38 = vmatprep.subr.mxu0 0.0
  %39 = vmatpush1.xpose.msra.mxu0 %v30
  %40 = vmatprep.subr.mxu0 0.0
  %41 = vmatpush1.xpose.msra.mxu0 %v33
  %42 = vmatprep.subr.mxu0 0.0
  %43 = vmatpush1.xpose.msra.mxu0 %v36
  %44 = vmatprep.subr.mxu0 0.0
  %45 = vmatpush1.xpose.msra.mxu0 0.0
  %46 = vmatprep.subr.mxu0 0.0
  %47 = vmatpush1.xpose.msra.mxu0 0.0
  %48 = vmatprep.subr.mxu0 0.0
  %49 = vmatpush1.xpose.msra.mxu0 0.0
  %50 = vmatprep.subr.mxu0 0.0
  %51 = vmatpush1.xpose.msra.mxu0 0.0
  %52 = vmatprep.subr.mxu0 0.0
  %53 = vmatpush1.xpose.msra.mxu0 0.0
  %54 = vmatprep.subr.mxu0 0.0
  %55 = vmatpush1.xpose.msra.mxu0 0.0
  %56 = vmatprep.subr.mxu0 0.0
  %57 = vmatpush1.xpose.msra.mxu0 0.0
  %58 = vmatprep.subr.mxu0 0.0
  %59 = vmatpush1.xpose.msra.mxu0 0.0
  %60 = vmatprep.subr.mxu0 0.0
  %61 = vmatpush1.xpose.msra.mxu0 0.0
  %62 = vmatprep.subr.mxu0 0.0
  %63 = vmatpush1.xpose.msra.mxu0 0.0
  %64 = vmatprep.subr.mxu0 0.0
  %65 = vmatpush1.xpose.msra.mxu0 0.0
  %66 = vmatprep.subr.mxu0 0.0
  %67 = vmatpush1.xpose.msra.mxu0 0.0
  %68 = vmatprep.subr.mxu0 0.0
  %69 = vmatpush1.xpose.msra.mxu0 0.0
  %70 = vmatprep.subr.mxu0 0.0
  %71 = vmatpush1.xpose.msra.mxu0 0.0
  %72 = vmatprep.subr.mxu0 0.0
  %73 = vmatpush1.xpose.msra.mxu0 0.0
  %74 = vmatprep.subr.mxu0 0.0
  %75 = vmatpush1.xpose.msra.mxu0 0.0
  %76 = vmatprep.subr.mxu0 0.0
  %77 = vmatpush1.xpose.msra.mxu0 0.0
  %78 = vmatprep.subr.mxu0 0.0
  %79 = vmatpush1.xpose.msra.mxu0 0.0
  %80 = vmatprep.subr.mxu0 0.0
  %81 = vmatpush1.xpose.msra.mxu0 0.0
  %82 = vmatprep.subr.mxu0 0.0
  %83 = vmatpush1.xpose.msra.mxu0 0.0
  %84 = vmatprep.subr.mxu0 0.0
  %85 = vmatpush1.xpose.msra.mxu0 0.0
  %86 = vmatprep.subr.mxu0 0.0
  %87 = vmatpush1.xpose.msra.mxu0 0.0
  %88 = vmatprep.subr.mxu0 0.0
  %89 = vmatpush1.xpose.msra.mxu0 0.0
  %90 = vmatprep.subr.mxu0 0.0
  %91 = vmatpush1.xpose.msra.mxu0 0.0
  %92 = vmatprep.subr.mxu0 0.0
  %93 = vmatpush1.xpose.msra.mxu0 0.0
  %94 = vmatprep.subr.mxu0 0.0
  %95 = vmatpush1.xpose.msra.mxu0 0.0
  %96 = vmatprep.subr.mxu0 0.0
  %97 = vmatpush1.xpose.msra.mxu0 0.0
  %98 = vmatprep.subr.mxu0 0.0
  %99 = vmatpush1.xpose.msra.mxu0 0.0
  %100 = vmatprep.subr.mxu0 0.0
  %101 = vmatpush1.xpose.msra.mxu0 0.0
  %102 = vmatprep.mubr.f32.mxu0 0.0
  %103 = vmatmul.mubr.f32.gmra.mrb[0].mxu0 %v27
  %v104 = vpop.f32.mrb[0].mxu0
  %v105 = vadd.f32 %v23, %v104
  %v106 = vpop.f32.mrb[0].mxu0
  %107 = vdwg.mxu0
  %vm108 = vcmask 193536
  %109 = vst.msk [vmem:[%s2] sm:$0x3f] %vm108, %v105
  %v110 = vlaneseq
  %v111 = vshrl.u32 %v110, 7
  %v112 = vsub.s32 0, %v111
  %v113 = vrot.slane %v19, %v112
  %vm114 = vcmask 1045504
  %v116 = vsel %vm114, %v18, 0
  %118 = vmatprep.subr.mxu0 0.0
  %119 = vmatpush1.msra.mxu0 %v116
  %120 = vmatprep.subr.mxu0 0.0
  %121 = vmatpush1.msra.mxu0 0.0
  %122 = vmatprep.subr.mxu0 0.0
  %123 = vmatpush1.msra.mxu0 0.0
  %124 = vmatprep.subr.mxu0 0.0
  %125 = vmatpush1.msra.mxu0 0.0
  %126 = vmatprep.subr.mxu0 0.0
  %127 = vmatpush1.msra.mxu0 0.0
  %128 = vmatprep.subr.mxu0 0.0
  %129 = vmatpush1.msra.mxu0 0.0
  %130 = vmatprep.subr.mxu0 0.0
  %131 = vmatpush1.msra.mxu0 0.0
  %132 = vmatprep.subr.mxu0 0.0
  %133 = vmatpush1.msra.mxu0 0.0
  %134 = vmatprep.subr.mxu0 0.0
  %135 = vmatpush1.msra.mxu0 0.0
  %136 = vmatprep.subr.mxu0 0.0
  %137 = vmatpush1.msra.mxu0 0.0
  %138 = vmatprep.subr.mxu0 0.0
  %139 = vmatpush1.msra.mxu0 0.0
  %140 = vmatprep.subr.mxu0 0.0
  %141 = vmatpush1.msra.mxu0 0.0
  %142 = vmatprep.subr.mxu0 0.0
  %143 = vmatpush1.msra.mxu0 0.0
  %144 = vmatprep.subr.mxu0 0.0
  %145 = vmatpush1.msra.mxu0 0.0
  %146 = vmatprep.subr.mxu0 0.0
  %147 = vmatpush1.msra.mxu0 0.0
  %148 = vmatprep.subr.mxu0 0.0
  %149 = vmatpush1.msra.mxu0 0.0
  %150 = vmatprep.subr.mxu0 0.0
  %151 = vmatpush1.msra.mxu0 0.0
  %152 = vmatprep.subr.mxu0 0.0
  %153 = vmatpush1.msra.mxu0 0.0
  %154 = vmatprep.subr.mxu0 0.0
  %155 = vmatpush1.msra.mxu0 0.0
  %156 = vmatprep.subr.mxu0 0.0
  %157 = vmatpush1.msra.mxu0 0.0
  %158 = vmatprep.subr.mxu0 0.0
  %159 = vmatpush1.msra.mxu0 0.0
  %160 = vmatprep.subr.mxu0 0.0
  %161 = vmatpush1.msra.mxu0 0.0
  %162 = vmatprep.subr.mxu0 0.0
  %163 = vmatpush1.msra.mxu0 0.0
  %164 = vmatprep.subr.mxu0 0.0
  %165 = vmatpush1.msra.mxu0 0.0
  %166 = vmatprep.subr.mxu0 0.0
  %167 = vmatpush1.msra.mxu0 0.0
  %168 = vmatprep.subr.mxu0 0.0
  %169 = vmatpush1.msra.mxu0 0.0
  %170 = vmatprep.subr.mxu0 0.0
  %171 = vmatpush1.msra.mxu0 0.0
  %172 = vmatprep.subr.mxu0 0.0
  %173 = vmatpush1.msra.mxu0 0.0
  %174 = vmatprep.subr.mxu0 0.0
  %175 = vmatpush1.msra.mxu0 0.0
  %176 = vmatprep.subr.mxu0 0.0
  %177 = vmatpush1.msra.mxu0 0.0
  %178 = vmatprep.subr.mxu0 0.0
  %179 = vmatpush1.msra.mxu0 0.0
  %180 = vmatprep.subr.mxu0 0.0
  %181 = vmatpush1.msra.mxu0 0.0
  %182 = vmatprep.mubr.f32.mxu0 0.0
  %183 = vmatmul.mubr.f32.gmra.mrb[0].mxu0 %v30
  %v184 = vpop.f32.mrb[0].mxu0
  %v185 = vadd.f32 %v113, %v184
  %v186 = vpop.f32.mrb[0].mxu0
  %187 = vmatprep.mubr.f32.mxu0 0.0
  %188 = vmatmul.mubr.f32.gmra.mrb[0].mxu0 %v33
  %v189 = vpop.f32.mrb[0].mxu0
  %v190 = vadd.f32 %v113, %v189
  %v191 = vpop.f32.mrb[0].mxu0
  %192 = vmatprep.mubr.f32.mxu0 0.0
  %193 = vmatmul.mubr.f32.gmra.mrb[0].mxu0 %v36
  %v194 = vpop.f32.mrb[0].mxu0
  %v195 = vadd.f32 %v113, %v194
  %v196 = vpop.f32.mrb[0].mxu0
  %197 = vdwg.mxu0
  %v198 = vsel %vm25, %v185, 1.0
  %v199 = vsel %vm25, %v190, 1.0
  %v200 = vsel %vm25, %v195, 1.0
  %vm201 = vcmask 56320
  %202 = vst.msk [vmem:[%s3] sm:$0xff] %vm201, %v198
  %203 = vst.msk [vmem:[%s3 + $0x8] sm:$0xff] %vm201, %v199
  %204 = vst.msk [vmem:[%s3 + $0x10] sm:$0xff] %vm201, %v200
  // Predicated region
  $region10: #{pinn_forward.4} parent=0 // pred_check
    _
  $region11: #{pinn_forward.4} parent=0 // pred_check_branch
    %206 = sbr.rel (0) target = $region13
  $region12: #{pinn_forward.4} parent=0 // pred_region
    _
  $region13: #{pinn_forward.4} parent=0 // pred_fallthru
    _
  // Predicated region
  $region14: #{pinn_forward.4} parent=0 // pred_check
    _
  $region15: #{pinn_forward.4} parent=0 // pred_check_branch
    %208 = sbr.rel (0) target = $region17
  $region16: #{pinn_forward.4} parent=0 // pred_region
    _
  $region17: #{pinn_forward.4} parent=0 // pred_fallthru
    _
  // Predicated region
  $region18: #{pinn_forward.4} parent=0 // pred_check
    _
  $region19: #{pinn_forward.4} parent=0 // pred_check_branch
    %210 = sbr.rel (0) target = $region21
  $region20: #{pinn_forward.4} parent=0 // pred_region
    _
  $region21: #{pinn_forward.4} parent=0 // pred_fallthru
    _
  // Predicated region
  $region22: #{pinn_forward.4} parent=0 // pred_check
    _
  $region23: #{pinn_forward.4} parent=0 // pred_check_branch
    %212 = sbr.rel (0) target = $region25
  $region24: #{pinn_forward.4} parent=0 // pred_region
    _
  $region25: #{pinn_forward.4} parent=0 // pred_fallthru
    _

// kernel: pinn_forward.6
$region0: #{pinn_forward.6}
  #allocation0 [shape = 'u32[]', space=smem, size = 0x4, offset = 0x4, fixed_abs, tag = 'smem constant byte address 0x4 - core index']
  #allocation1 [shape = 'u32[144,128]{1,0:T(1,128)}', space=vmem, size = 0x12000, scoped, tag = 'internal scratch']
  %s0 = inlined_call_operand.vmem [shape: f32[24,128], index: 0, kind: input, shape index: {}]
  %s1 = inlined_call_operand.vmem [shape: f32[56,128], index: 1, kind: input, shape index: {}]
  %s2 = inlined_call_operand.vmem [shape: f32[9,24], index: 2, kind: output, shape index: {0}]
  %s3 = inlined_call_operand.vmem [shape: f32[24,10], index: 3, kind: output, shape index: {1}]
  %4 = xla_tuple %s2, %s3
  %s5 = sld [smem:[#allocation0]]
  $region26: #{pinn_forward.6} parent=0
    _
  %s7 = ssub.s32 1, %s5
  %s8 = scalar_select 0, %s7, %s5
  // Predicated region
  $region2: #{pinn_forward.6} parent=0 // pred_check
    _
  $region3: #{pinn_forward.6} parent=0 // pred_check_branch
    %10 = sbr.rel (0) target = $region5
  $region4: #{pinn_forward.6} parent=0 // pred_region
    _
  $region5: #{pinn_forward.6} parent=0 // pred_fallthru
    _
  // Predicated region
  $region6: #{pinn_forward.6} parent=0 // pred_check
    _
  $region7: #{pinn_forward.6} parent=0 // pred_check_branch
    %12 = sbr.rel (0) target = $region9
  $region8: #{pinn_forward.6} parent=0 // pred_region
    _
  $region9: #{pinn_forward.6} parent=0 // pred_fallthru
    _
  %v13 = vld [vmem:[%s0] sm:$0xff]
  %v14 = vld [vmem:[%s0 + $0x8] sm:$0xff]
  %v15 = vld [vmem:[%s0 + $0x10] sm:$0xff]
  %v16 = vld [vmem:[%s1] sm:$0xff]
  %v17 = vld [vmem:[%s1 + $0x8] sm:$0x1]
  %v18 = vld [vmem:[%s1 + $0x10] sm:$0xff]
  %v19 = vld [vmem:[%s1 + $0x18] sm:$0x1]
  %v20 = vld [vmem:[%s1 + $0x20] sm:$0xff]
  %v21 = vld [vmem:[%s1 + $0x28] sm:$0x1]
  %v22 = vld [vmem:[%s1 + $0x30] sm:$0x1]
  %24 = vset.pattern.permute.xlu0 0
  %25 = vperm.xlu0 %24, %v18
  %v26 = vpop.permute.xlu0 %25
  %29 = vset.pattern.permute.xlu0 0
  %30 = vperm.xlu0 %29, %v19
  %v31 = vpop.permute.xlu0 %30
  %vm33 = vcmask 72704
  %v35 = vsel %vm33, %v16, 0
  %v38 = vsel %vm33, %v17, 0
  %v41 = vsel %vm33, %v13, 0
  %v44 = vsel %vm33, %v14, 0
  %v47 = vsel %vm33, %v15, 0
  %49 = vmatprep.subr.mxu0 0.0
  %50 = vmatpush1.xpose.msra.mxu0 %v41
  %51 = vmatprep.subr.mxu0 0.0
  %52 = vmatpush1.xpose.msra.mxu0 %v44
  %53 = vmatprep.subr.mxu0 0.0
  %54 = vmatpush1.xpose.msra.mxu0 %v47
  %55 = vmatprep.subr.mxu0 0.0
  %56 = vmatpush1.xpose.msra.mxu0 0.0
  %57 = vmatprep.subr.mxu0 0.0
  %58 = vmatpush1.xpose.msra.mxu0 0.0
  %59 = vmatprep.subr.mxu0 0.0
  %60 = vmatpush1.xpose.msra.mxu0 0.0
  %61 = vmatprep.subr.mxu0 0.0
  %62 = vmatpush1.xpose.msra.mxu0 0.0
  %63 = vmatprep.subr.mxu0 0.0
  %64 = vmatpush1.xpose.msra.mxu0 0.0
  %65 = vmatprep.subr.mxu0 0.0
  %66 = vmatpush1.xpose.msra.mxu0 0.0
  %67 = vmatprep.subr.mxu0 0.0
  %68 = vmatpush1.xpose.msra.mxu0 0.0
  %69 = vmatprep.subr.mxu0 0.0
  %70 = vmatpush1.xpose.msra.mxu0 0.0
  %71 = vmatprep.subr.mxu0 0.0
  %72 = vmatpush1.xpose.msra.mxu0 0.0
  %73 = vmatprep.subr.mxu0 0.0
  %74 = vmatpush1.xpose.msra.mxu0 0.0
  %75 = vmatprep.subr.mxu0 0.0
  %76 = vmatpush1.xpose.msra.mxu0 0.0
  %77 = vmatprep.subr.mxu0 0.0
  %78 = vmatpush1.xpose.msra.mxu0 0.0
  %79 = vmatprep.subr.mxu0 0.0
  %80 = vmatpush1.xpose.msra.mxu0 0.0
  %81 = vmatprep.subr.mxu0 0.0
  %82 = vmatpush1.xpose.msra.mxu0 0.0
  %83 = vmatprep.subr.mxu0 0.0
  %84 = vmatpush1.xpose.msra.mxu0 0.0
  %85 = vmatprep.subr.mxu0 0.0
  %86 = vmatpush1.xpose.msra.mxu0 0.0
  %87 = vmatprep.subr.mxu0 0.0
  %88 = vmatpush1.xpose.msra.mxu0 0.0
  %89 = vmatprep.subr.mxu0 0.0
  %90 = vmatpush1.xpose.msra.mxu0 0.0
  %91 = vmatprep.subr.mxu0 0.0
  %92 = vmatpush1.xpose.msra.mxu0 0.0
  %93 = vmatprep.subr.mxu0 0.0
  %94 = vmatpush1.xpose.msra.mxu0 0.0
  %95 = vmatprep.subr.mxu0 0.0
  %96 = vmatpush1.xpose.msra.mxu0 0.0
  %97 = vmatprep.subr.mxu0 0.0
  %98 = vmatpush1.xpose.msra.mxu0 0.0
  %99 = vmatprep.subr.mxu0 0.0
  %100 = vmatpush1.xpose.msra.mxu0 0.0
  %101 = vmatprep.subr.mxu0 0.0
  %102 = vmatpush1.xpose.msra.mxu0 0.0
  %103 = vmatprep.subr.mxu0 0.0
  %104 = vmatpush1.xpose.msra.mxu0 0.0
  %105 = vmatprep.subr.mxu0 0.0
  %106 = vmatpush1.xpose.msra.mxu0 0.0
  %107 = vmatprep.subr.mxu0 0.0
  %108 = vmatpush1.xpose.msra.mxu0 0.0
  %109 = vmatprep.subr.mxu0 0.0
  %110 = vmatpush1.xpose.msra.mxu0 0.0
  %111 = vmatprep.subr.mxu0 0.0
  %112 = vmatpush1.xpose.msra.mxu0 0.0
  %113 = vmatprep.mubr.f32.mxu0 0.0
  %114 = vmatmul.mubr.f32.gmra.mrb[0].mxu0 %v35
  %v115 = vpop.f32.mrb[0].mxu0
  %v116 = vadd.f32 %v26, %v115
  %v117 = vpop.f32.mrb[0].mxu0
  %118 = vmatprep.mubr.f32.mxu0 0.0
  %119 = vmatmul.mubr.f32.gmra.mrb[0].mxu0 %v38
  %v120 = vpop.f32.mrb[0].mxu0
  %v121 = vadd.f32 %v31, %v120
  %v122 = vpop.f32.mrb[0].mxu0
  %123 = vdwg.mxu0
  %vm124 = vcmask 195584
  %125 = vst.msk [vmem:[%s2] sm:$0xff] %vm124, %v116
  %vm126 = vcmask 188416
  %127 = vst.msk [vmem:[%s2 + $0x8] sm:$0x1] %vm126, %v121
  %v128 = vlaneseq
  %v129 = vshrl.u32 %v128, 7
  %v130 = vsub.s32 0, %v129
  %v131 = vrot.slane %v22, %v130
  %vm132 = vcmask 1040384
  %v134 = vsel %vm132, %v21, 0
  %136 = vmatprep.subr.mxu0 0.0
  %137 = vmatpush1.msra.mxu0 %v20
  %138 = vmatprep.subr.mxu0 0.0
  %139 = vmatpush1.msra.mxu0 %v134
  %140 = vmatprep.subr.mxu0 0.0
  %141 = vmatpush1.msra.mxu0 0.0
  %142 = vmatprep.subr.mxu0 0.0
  %143 = vmatpush1.msra.mxu0 0.0
  %144 = vmatprep.subr.mxu0 0.0
  %145 = vmatpush1.msra.mxu0 0.0
  %146 = vmatprep.subr.mxu0 0.0
  %147 = vmatpush1.msra.mxu0 0.0
  %148 = vmatprep.subr.mxu0 0.0
  %149 = vmatpush1.msra.mxu0 0.0
  %150 = vmatprep.subr.mxu0 0.0
  %151 = vmatpush1.msra.mxu0 0.0
  %152 = vmatprep.subr.mxu0 0.0
  %153 = vmatpush1.msra.mxu0 0.0
  %154 = vmatprep.subr.mxu0 0.0
  %155 = vmatpush1.msra.mxu0 0.0
  %156 = vmatprep.subr.mxu0 0.0
  %157 = vmatpush1.msra.mxu0 0.0
  %158 = vmatprep.subr.mxu0 0.0
  %159 = vmatpush1.msra.mxu0 0.0
  %160 = vmatprep.subr.mxu0 0.0
  %161 = vmatpush1.msra.mxu0 0.0
  %162 = vmatprep.subr.mxu0 0.0
  %163 = vmatpush1.msra.mxu0 0.0
  %164 = vmatprep.subr.mxu0 0.0
  %165 = vmatpush1.msra.mxu0 0.0
  %166 = vmatprep.subr.mxu0 0.0
  %167 = vmatpush1.msra.mxu0 0.0
  %168 = vmatprep.subr.mxu0 0.0
  %169 = vmatpush1.msra.mxu0 0.0
  %170 = vmatprep.subr.mxu0 0.0
  %171 = vmatpush1.msra.mxu0 0.0
  %172 = vmatprep.subr.mxu0 0.0
  %173 = vmatpush1.msra.mxu0 0.0
  %174 = vmatprep.subr.mxu0 0.0
  %175 = vmatpush1.msra.mxu0 0.0
  %176 = vmatprep.subr.mxu0 0.0
  %177 = vmatpush1.msra.mxu0 0.0
  %178 = vmatprep.subr.mxu0 0.0
  %179 = vmatpush1.msra.mxu0 0.0
  %180 = vmatprep.subr.mxu0 0.0
  %181 = vmatpush1.msra.mxu0 0.0
  %182 = vmatprep.subr.mxu0 0.0
  %183 = vmatpush1.msra.mxu0 0.0
  %184 = vmatprep.subr.mxu0 0.0
  %185 = vmatpush1.msra.mxu0 0.0
  %186 = vmatprep.subr.mxu0 0.0
  %187 = vmatpush1.msra.mxu0 0.0
  %188 = vmatprep.subr.mxu0 0.0
  %189 = vmatpush1.msra.mxu0 0.0
  %190 = vmatprep.subr.mxu0 0.0
  %191 = vmatpush1.msra.mxu0 0.0
  %192 = vmatprep.subr.mxu0 0.0
  %193 = vmatpush1.msra.mxu0 0.0
  %194 = vmatprep.subr.mxu0 0.0
  %195 = vmatpush1.msra.mxu0 0.0
  %196 = vmatprep.subr.mxu0 0.0
  %197 = vmatpush1.msra.mxu0 0.0
  %198 = vmatprep.subr.mxu0 0.0
  %199 = vmatpush1.msra.mxu0 0.0
  %200 = vmatprep.mubr.f32.mxu0 0.0
  %201 = vmatmul.mubr.f32.gmra.mrb[0].mxu0 %v41
  %v202 = vpop.f32.mrb[0].mxu0
  %v203 = vadd.f32 %v131, %v202
  %v204 = vpop.f32.mrb[0].mxu0
  %205 = vmatprep.mubr.f32.mxu0 0.0
  %206 = vmatmul.mubr.f32.gmra.mrb[0].mxu0 %v44
  %v207 = vpop.f32.mrb[0].mxu0
  %v208 = vadd.f32 %v131, %v207
  %v209 = vpop.f32.mrb[0].mxu0
  %210 = vmatprep.mubr.f32.mxu0 0.0
  %211 = vmatmul.mubr.f32.gmra.mrb[0].mxu0 %v47
  %v212 = vpop.f32.mrb[0].mxu0
  %v213 = vadd.f32 %v131, %v212
  %v214 = vpop.f32.mrb[0].mxu0
  %215 = vdwg.mxu0
  %v216 = vsel %vm33, %v203, 1.0
  %v217 = vsel %vm33, %v208, 1.0
  %v218 = vsel %vm33, %v213, 1.0
  %vm219 = vcmask 80896
  %220 = vst.msk [vmem:[%s3] sm:$0xff] %vm219, %v216
  %221 = vst.msk [vmem:[%s3 + $0x8] sm:$0xff] %vm219, %v217
  %222 = vst.msk [vmem:[%s3 + $0x10] sm:$0xff] %vm219, %v218
  // Predicated region
  $region10: #{pinn_forward.6} parent=0 // pred_check
    _
  $region11: #{pinn_forward.6} parent=0 // pred_check_branch
    %224 = sbr.rel (0) target = $region13
  $region12: #{pinn_forward.6} parent=0 // pred_region
    _
  $region13: #{pinn_forward.6} parent=0 // pred_fallthru
    _
  // Predicated region
  $region14: #{pinn_forward.6} parent=0 // pred_check
    _
  $region15: #{pinn_forward.6} parent=0 // pred_check_branch
    %226 = sbr.rel (0) target = $region17
  $region16: #{pinn_forward.6} parent=0 // pred_region
    _
  $region17: #{pinn_forward.6} parent=0 // pred_fallthru
    _
  // Predicated region
  $region18: #{pinn_forward.6} parent=0 // pred_check
    _
  $region19: #{pinn_forward.6} parent=0 // pred_check_branch
    %228 = sbr.rel (0) target = $region21
  $region20: #{pinn_forward.6} parent=0 // pred_region
    _
  $region21: #{pinn_forward.6} parent=0 // pred_fallthru
    _
  // Predicated region
  $region22: #{pinn_forward.6} parent=0 // pred_check
    _
  $region23: #{pinn_forward.6} parent=0 // pred_check_branch
    %230 = sbr.rel (0) target = $region25
  $region24: #{pinn_forward.6} parent=0 // pred_region
    _
  $region25: #{pinn_forward.6} parent=0 // pred_fallthru
    _

// kernel: pinn_forward.7
$region0: #{pinn_forward.7}
  #allocation0 [shape = 'u32[]', space=smem, size = 0x4, offset = 0x4, fixed_abs, tag = 'smem constant byte address 0x4 - core index']
  #allocation1 [shape = 'u32[144,128]{1,0:T(1,128)}', space=vmem, size = 0x12000, scoped, tag = 'internal scratch']
  #allocation2 [shape = 'f32[24,9]{1,0:T(8,128)}', space=vmem, size = 0x3000, scoped, tag = 'scratch operand']
  #allocation3 [shape = 'f32[24,1]{1,0:T(8,128)}', space=vmem, size = 0x3000, scoped, tag = 'scratch operand']
  #allocation4 [shape = 'f32[24,10]{1,0:T(8,128)}', space=vmem, size = 0x3000, scoped, tag = 'scratch operand']
  %s0 = inlined_call_operand.vmem [shape: f32[24,128], index: 0, kind: input, shape index: {}]
  %s1 = inlined_call_operand.vmem [shape: f32[9,24], index: 1, kind: input, shape index: {}]
  %s2 = inlined_call_operand.vmem [shape: f32[24,10], index: 2, kind: input, shape index: {}]
  %s3 = inlined_call_operand.vmem [shape: f32[104,128], index: 3, kind: input, shape index: {}]
  %s4 = inlined_call_operand.vmem [shape: f32[8,24], index: 4, kind: output, shape index: {}]
  %s5 = sld [smem:[#allocation0]]
  $region34: #{pinn_forward.7} parent=0
    _
  %s7 = ssub.s32 1, %s5
  %s8 = scalar_select 0, %s7, %s5
  // Predicated region
  $region2: #{pinn_forward.7} parent=0 // pred_check
    _
  $region3: #{pinn_forward.7} parent=0 // pred_check_branch
    %10 = sbr.rel (0) target = $region5
  $region4: #{pinn_forward.7} parent=0 // pred_region
    _
  $region5: #{pinn_forward.7} parent=0 // pred_fallthru
    _
  // Predicated region
  $region6: #{pinn_forward.7} parent=0 // pred_check
    _
  $region7: #{pinn_forward.7} parent=0 // pred_check_branch
    %12 = sbr.rel (0) target = $region9
  $region8: #{pinn_forward.7} parent=0 // pred_region
    _
  $region9: #{pinn_forward.7} parent=0 // pred_fallthru
    _
  // Predicated region
  $region10: #{pinn_forward.7} parent=0 // pred_check
    _
  $region11: #{pinn_forward.7} parent=0 // pred_check_branch
    %14 = sbr.rel (0) target = $region13
  $region12: #{pinn_forward.7} parent=0 // pred_region
    _
  $region13: #{pinn_forward.7} parent=0 // pred_fallthru
    _
  // Predicated region
  $region14: #{pinn_forward.7} parent=0 // pred_check
    _
  $region15: #{pinn_forward.7} parent=0 // pred_check_branch
    %16 = sbr.rel (0) target = $region17
  $region16: #{pinn_forward.7} parent=0 // pred_region
    _
  $region17: #{pinn_forward.7} parent=0 // pred_fallthru
    _
  %v17 = vld [vmem:[%s0] sm:$0xff]
  %v18 = vld [vmem:[%s0 + $0x8] sm:$0xff]
  %v19 = vld [vmem:[%s0 + $0x10] sm:$0xff]
  %p20 = scmp.eq.s32.totalorder 0, 0
  // Predicated region
  $region18: #{pinn_forward.7} parent=0 // pred_check
    %p21 = pneg %p20
  $region19: #{pinn_forward.7} parent=0 // pred_check_branch
    %23 = sbr.rel (%p21) target = $region21
  $region20: #{pinn_forward.7} parent=0 // pred_region
    %v24 = vld [vmem:[%s3] sm:$0xff]
    %v25 = vld [vmem:[%s3 + $0x8] sm:$0x1]
    %v26 = vld [vmem:[%s3 + $0x10] sm:$0x1]
    %v27 = vlaneseq
    %v28 = vshrl.u32 %v27, 7
    %v29 = vsub.s32 0, %v28
    %v30 = vrot.slane %v26, %v29
    %vm31 = vcmask 72704
    %v33 = vsel %vm31, %v17, 0
    %v36 = vsel %vm31, %v18, 0
    %v39 = vsel %vm31, %v19, 0
    %vm41 = vcmask 1040384
    %v43 = vsel %vm41, %v25, 0
    %45 = vmatprep.subr.mxu0 0.0
    %46 = vmatpush1.msra.mxu0 %v24
    %47 = vmatprep.subr.mxu0 0.0
    %48 = vmatpush1.msra.mxu0 %v43
    %49 = vmatprep.subr.mxu0 0.0
    %50 = vmatpush1.msra.mxu0 0.0
    %51 = vmatprep.subr.mxu0 0.0
    %52 = vmatpush1.msra.mxu0 0.0
    %53 = vmatprep.subr.mxu0 0.0
    %54 = vmatpush1.msra.mxu0 0.0
    %55 = vmatprep.subr.mxu0 0.0
    %56 = vmatpush1.msra.mxu0 0.0
    %57 = vmatprep.subr.mxu0 0.0
    %58 = vmatpush1.msra.mxu0 0.0
    %59 = vmatprep.subr.mxu0 0.0
    %60 = vmatpush1.msra.mxu0 0.0
    %61 = vmatprep.subr.mxu0 0.0
    %62 = vmatpush1.msra.mxu0 0.0
    %63 = vmatprep.subr.mxu0 0.0
    %64 = vmatpush1.msra.mxu0 0.0
    %65 = vmatprep.subr.mxu0 0.0
    %66 = vmatpush1.msra.mxu0 0.0
    %67 = vmatprep.subr.mxu0 0.0
    %68 = vmatpush1.msra.mxu0 0.0
    %69 = vmatprep.subr.mxu0 0.0
    %70 = vmatpush1.msra.mxu0 0.0
    %71 = vmatprep.subr.mxu0 0.0
    %72 = vmatpush1.msra.mxu0 0.0
    %73 = vmatprep.subr.mxu0 0.0
    %74 = vmatpush1.msra.mxu0 0.0
    %75 = vmatprep.subr.mxu0 0.0
    %76 = vmatpush1.msra.mxu0 0.0
    %77 = vmatprep.subr.mxu0 0.0
    %78 = vmatpush1.msra.mxu0 0.0
    %79 = vmatprep.subr.mxu0 0.0
    %80 = vmatpush1.msra.mxu0 0.0
    %81 = vmatprep.subr.mxu0 0.0
    %82 = vmatpush1.msra.mxu0 0.0
    %83 = vmatprep.subr.mxu0 0.0
    %84 = vmatpush1.msra.mxu0 0.0
    %85 = vmatprep.subr.mxu0 0.0
    %86 = vmatpush1.msra.mxu0 0.0
    %87 = vmatprep.subr.mxu0 0.0
    %88 = vmatpush1.msra.mxu0 0.0
    %89 = vmatprep.subr.mxu0 0.0
    %90 = vmatpush1.msra.mxu0 0.0
    %91 = vmatprep.subr.mxu0 0.0
    %92 = vmatpush1.msra.mxu0 0.0
    %93 = vmatprep.subr.mxu0 0.0
    %94 = vmatpush1.msra.mxu0 0.0
    %95 = vmatprep.subr.mxu0 0.0
    %96 = vmatpush1.msra.mxu0 0.0
    %97 = vmatprep.subr.mxu0 0.0
    %98 = vmatpush1.msra.mxu0 0.0
    %99 = vmatprep.subr.mxu0 0.0
    %100 = vmatpush1.msra.mxu0 0.0
    %101 = vmatprep.subr.mxu0 0.0
    %102 = vmatpush1.msra.mxu0 0.0
    %103 = vmatprep.subr.mxu0 0.0
    %104 = vmatpush1.msra.mxu0 0.0
    %105 = vmatprep.subr.mxu0 0.0
    %106 = vmatpush1.msra.mxu0 0.0
    %107 = vmatprep.subr.mxu0 0.0
    %108 = vmatpush1.msra.mxu0 0.0
    %109 = vmatprep.mubr.f32.mxu0 0.0
    %110 = vmatmul.mubr.f32.gmra.mrb[0].mxu0 %v33
    %v111 = vpop.f32.mrb[0].mxu0
    %v112 = vadd.f32 %v30, %v111
    %v113 = vpop.f32.mrb[0].mxu0
    %114 = vmatprep.mubr.f32.mxu0 0.0
    %115 = vmatmul.mubr.f32.gmra.mrb[0].mxu0 %v36
    %v116 = vpop.f32.mrb[0].mxu0
    %v117 = vadd.f32 %v30, %v116
    %v118 = vpop.f32.mrb[0].mxu0
    %119 = vmatprep.mubr.f32.mxu0 0.0
    %120 = vmatmul.mubr.f32.gmra.mrb[0].mxu0 %v39
    %v121 = vpop.f32.mrb[0].mxu0
    %v122 = vadd.f32 %v30, %v121
    %v123 = vpop.f32.mrb[0].mxu0
    %124 = vdwg.mxu0
    %125 = vst.msk [vmem:[#allocation2] sm:$0xff] %vm31, %v112
    %126 = vst.msk [vmem:[#allocation2 + $0x8] sm:$0xff] %vm31, %v117
    %127 = vst.msk [vmem:[#allocation2 + $0x10] sm:$0xff] %vm31, %v122
    %vm128 = vcmask 7168
    %129 = vst.msk [vmem:[#allocation3] sm:$0xff] %vm128, -inf
    %130 = vst.msk [vmem:[#allocation3 + $0x8] sm:$0xff] %vm128, -inf
    %131 = vst.msk [vmem:[#allocation3 + $0x10] sm:$0xff] %vm128, -inf
    %vm132 = vcmask 80896
    %133 = vst.msk [vmem:[#allocation4] sm:$0xff] %vm132, 0.0
    %134 = vst.msk [vmem:[#allocation4 + $0x8] sm:$0xff] %vm132, 0.0
    %135 = vst.msk [vmem:[#allocation4 + $0x10] sm:$0xff] %vm132, 0.0
  $region21: #{pinn_forward.7} parent=0 // pred_fallthru
    _
  %v136 = vld [vmem:[#allocation2] sm:$0xff]
  %v137 = vld [vmem:[#allocation2 + $0x8] sm:$0xff]
  %v138 = vld [vmem:[#allocation2 + $0x10] sm:$0xff]
  %v139 = vld [vmem:[%s1] sm:$0xff]
  %v140 = vld [vmem:[%s1 + $0x8] sm:$0x1]
  %vm141 = vcmask 72704
  %v143 = vsel %vm141, %v136, 0
  %v146 = vsel %vm141, %v137, 0
  %v149 = vsel %vm141, %v138, 0
  %vm151 = vcmask 1040384
  %v153 = vsel %vm151, %v140, 0
  %155 = vmatprep.subr.mxu0 0.0
  %156 = vmatpush1.msra.mxu0 %v139
  %157 = vmatprep.subr.mxu0 0.0
  %158 = vmatpush1.msra.mxu0 %v153
  %159 = vmatprep.subr.mxu0 0.0
  %160 = vmatpush1.msra.mxu0 0.0
  %161 = vmatprep.subr.mxu0 0.0
  %162 = vmatpush1.msra.mxu0 0.0
  %163 = vmatprep.subr.mxu0 0.0
  %164 = vmatpush1.msra.mxu0 0.0
  %165 = vmatprep.subr.mxu0 0.0
  %166 = vmatpush1.msra.mxu0 0.0
  %167 = vmatprep.subr.mxu0 0.0
  %168 = vmatpush1.msra.mxu0 0.0
  %169 = vmatprep.subr.mxu0 0.0
  %170 = vmatpush1.msra.mxu0 0.0
  %171 = vmatprep.subr.mxu0 0.0
  %172 = vmatpush1.msra.mxu0 0.0
  %173 = vmatprep.subr.mxu0 0.0
  %174 = vmatpush1.msra.mxu0 0.0
  %175 = vmatprep.subr.mxu0 0.0
  %176 = vmatpush1.msra.mxu0 0.0
  %177 = vmatprep.subr.mxu0 0.0
  %178 = vmatpush1.msra.mxu0 0.0
  %179 = vmatprep.subr.mxu0 0.0
  %180 = vmatpush1.msra.mxu0 0.0
  %181 = vmatprep.subr.mxu0 0.0
  %182 = vmatpush1.msra.mxu0 0.0
  %183 = vmatprep.subr.mxu0 0.0
  %184 = vmatpush1.msra.mxu0 0.0
  %185 = vmatprep.subr.mxu0 0.0
  %186 = vmatpush1.msra.mxu0 0.0
  %187 = vmatprep.subr.mxu0 0.0
  %188 = vmatpush1.msra.mxu0 0.0
  %189 = vmatprep.subr.mxu0 0.0
  %190 = vmatpush1.msra.mxu0 0.0
  %191 = vmatprep.subr.mxu0 0.0
  %192 = vmatpush1.msra.mxu0 0.0
  %193 = vmatprep.subr.mxu0 0.0
  %194 = vmatpush1.msra.mxu0 0.0
  %195 = vmatprep.subr.mxu0 0.0
  %196 = vmatpush1.msra.mxu0 0.0
  %197 = vmatprep.subr.mxu0 0.0
  %198 = vmatpush1.msra.mxu0 0.0
  %199 = vmatprep.subr.mxu0 0.0
  %200 = vmatpush1.msra.mxu0 0.0
  %201 = vmatprep.subr.mxu0 0.0
  %202 = vmatpush1.msra.mxu0 0.0
  %203 = vmatprep.subr.mxu0 0.0
  %204 = vmatpush1.msra.mxu0 0.0
  %205 = vmatprep.subr.mxu0 0.0
  %206 = vmatpush1.msra.mxu0 0.0
  %207 = vmatprep.subr.mxu0 0.0
  %208 = vmatpush1.msra.mxu0 0.0
  %209 = vmatprep.subr.mxu0 0.0
  %210 = vmatpush1.msra.mxu0 0.0
  %211 = vmatprep.subr.mxu0 0.0
  %212 = vmatpush1.msra.mxu0 0.0
  %213 = vmatprep.subr.mxu0 0.0
  %214 = vmatpush1.msra.mxu0 0.0
  %215 = vmatprep.subr.mxu0 0.0
  %216 = vmatpush1.msra.mxu0 0.0
  %217 = vmatprep.subr.mxu0 0.0
  %218 = vmatpush1.msra.mxu0 0.0
  %219 = vmatprep.mubr.f32.mxu0 0.0
  %220 = vmatmul.mubr.f32.gmra.mrb[0].mxu0 %v143
  %v221 = vpop.f32.mrb[0].mxu0
  %v222 = vadd.f32 0.0, %v221
  %v223 = vpop.f32.mrb[0].mxu0
  %224 = vmatprep.mubr.f32.mxu0 0.0
  %225 = vmatmul.mubr.f32.gmra.mrb[0].mxu0 %v146
  %v226 = vpop.f32.mrb[0].mxu0
  %v227 = vadd.f32 0.0, %v226
  %v228 = vpop.f32.mrb[0].mxu0
  %229 = vmatprep.mubr.f32.mxu0 0.0
  %230 = vmatmul.mubr.f32.gmra.mrb[0].mxu0 %v149
  %v231 = vpop.f32.mrb[0].mxu0
  %v232 = vadd.f32 0.0, %v231
  %v233 = vpop.f32.mrb[0].mxu0
  %234 = vdwg.mxu0
  %v235 = vlaneseq
  %v236 = vand.u32 %v235, 127
  %s237 = smul.u32 0, 24
  %v238 = vstv %s237
  %v239 = vadd.s32 %v236, %v238
  %vm240 = vcmp.lt.s32.totalorder %v239, 21
  %v241 = vsel %vm240, 1, 0
  %vm242 = vcmp.eq.s32.totalorder %v241, 1
  %v243 = vsel %vm242, %v222, -inf
  %v244 = vsel %vm242, %v227, -inf
  %v245 = vsel %vm242, %v232, -inf
  %v246 = vld [vmem:[#allocation3] sm:$0xff]
  %v247 = vld [vmem:[#allocation3 + $0x8] sm:$0xff]
  %v248 = vld [vmem:[#allocation3 + $0x10] sm:$0xff]
  %vm249 = vcmask 195584
  %v250 = vsel %vm249, %v243, -inf
  %251 = vmax.xlane.f32.xlu0 %v250
  %v252 = vpop.xlane.xlu0 %251
  %v253 = vsel %vm249, %v244, -inf
  %254 = vmax.xlane.f32.xlu0 %v253
  %v255 = vpop.xlane.xlu0 %254
  %v256 = vsel %vm249, %v245, -inf
  %257 = vmax.xlane.f32.xlu0 %v256
  %v258 = vpop.xlane.xlu0 %257
  %v259 = vmax.f32 %v246, %v252
  %v260 = vmax.f32 %v247, %v255
  %v261 = vmax.f32 %v248, %v258
  %v262 = vsub.f32 %v246, %v259
  %v263 = vsub.f32 %v247, %v260
  %v264 = vsub.f32 %v248, %v261
  %v265 = vmul.f32 %v262, 1.442695
  %v266 = vpow.pop %v265
  %v267 = vmul.f32 %v263, 1.442695
  %v268 = vpow.pop %v267
  %v269 = vmul.f32 %v264, 1.442695
  %v270 = vpow.pop %v269
  %272 = vset.pattern.permute.xlu0 0
  %273 = vperm.xlu0 %272, %v259
  %v274 = vpop.permute.xlu0 %273
  %277 = vset.pattern.permute.xlu0 0
  %278 = vperm.xlu0 %277, %v260
  %v279 = vpop.permute.xlu0 %278
  %282 = vset.pattern.permute.xlu0 0
  %283 = vperm.xlu0 %282, %v261
  %v284 = vpop.permute.xlu0 %283
  %v286 = vsub.f32 %v243, %v274
  %v287 = vsub.f32 %v244, %v279
  %v288 = vsub.f32 %v245, %v284
  %v289 = vmul.f32 %v286, 1.442695
  %v290 = vpow.pop %v289
  %v291 = vmul.f32 %v287, 1.442695
  %v292 = vpow.pop %v291
  %v293 = vmul.f32 %v288, 1.442695
  %v294 = vpow.pop %v293
  %v295 = vld [vmem:[#allocation4] sm:$0xff]
  %v296 = vld [vmem:[#allocation4 + $0x8] sm:$0xff]
  %v297 = vld [vmem:[#allocation4 + $0x10] sm:$0xff]
  %299 = vset.pattern.permute.xlu0 0
  %300 = vperm.xlu0 %299, %v266
  %v301 = vpop.permute.xlu0 %300
  %304 = vset.pattern.permute.xlu0 0
  %305 = vperm.xlu0 %304, %v268
  %v306 = vpop.permute.xlu0 %305
  %309 = vset.pattern.permute.xlu0 0
  %310 = vperm.xlu0 %309, %v270
  %v311 = vpop.permute.xlu0 %310
  %v313 = vmul.f32 %v301, %v295
  %v314 = vmul.f32 %v306, %v296
  %v315 = vmul.f32 %v311, %v297
  %v316 = vld [vmem:[%s2] sm:$0xff]
  %v317 = vld [vmem:[%s2 + $0x8] sm:$0xff]
  %v318 = vld [vmem:[%s2 + $0x10] sm:$0xff]
  %v320 = vsel %vm249, %v290, 0
  %v323 = vsel %vm249, %v292, 0
  %v326 = vsel %vm249, %v294, 0
  %328 = vmatprep.subr.mxu0 0.0
  %329 = vmatpush1.msra.mxu0 %v316
  %330 = vmatprep.subr.mxu0 0.0
  %331 = vmatpush1.msra.mxu0 %v317
  %332 = vmatprep.subr.mxu0 0.0
  %333 = vmatpush1.msra.mxu0 %v318
  %334 = vmatprep.subr.mxu0 0.0
  %335 = vmatpush1.msra.mxu0 0.0
  %336 = vmatprep.subr.mxu0 0.0
  %337 = vmatpush1.msra.mxu0 0.0
  %338 = vmatprep.subr.mxu0 0.0
  %339 = vmatpush1.msra.mxu0 0.0
  %340 = vmatprep.subr.mxu0 0.0
  %341 = vmatpush1.msra.mxu0 0.0
  %342 = vmatprep.subr.mxu0 0.0
  %343 = vmatpush1.msra.mxu0 0.0
  %344 = vmatprep.subr.mxu0 0.0
  %345 = vmatpush1.msra.mxu0 0.0
  %346 = vmatprep.subr.mxu0 0.0
  %347 = vmatpush1.msra.mxu0 0.0
  %348 = vmatprep.subr.mxu0 0.0
  %349 = vmatpush1.msra.mxu0 0.0
  %350 = vmatprep.subr.mxu0 0.0
  %351 = vmatpush1.msra.mxu0 0.0
  %352 = vmatprep.subr.mxu0 0.0
  %353 = vmatpush1.msra.mxu0 0.0
  %354 = vmatprep.subr.mxu0 0.0
  %355 = vmatpush1.msra.mxu0 0.0
  %356 = vmatprep.subr.mxu0 0.0
  %357 = vmatpush1.msra.mxu0 0.0
  %358 = vmatprep.subr.mxu0 0.0
  %359 = vmatpush1.msra.mxu0 0.0
  %360 = vmatprep.subr.mxu0 0.0
  %361 = vmatpush1.msra.mxu0 0.0
  %362 = vmatprep.subr.mxu0 0.0
  %363 = vmatpush1.msra.mxu0 0.0
  %364 = vmatprep.subr.mxu0 0.0
  %365 = vmatpush1.msra.mxu0 0.0
  %366 = vmatprep.subr.mxu0 0.0
  %367 = vmatpush1.msra.mxu0 0.0
  %368 = vmatprep.subr.mxu0 0.0
  %369 = vmatpush1.msra.mxu0 0.0
  %370 = vmatprep.subr.mxu0 0.0
  %371 = vmatpush1.msra.mxu0 0.0
  %372 = vmatprep.subr.mxu0 0.0
  %373 = vmatpush1.msra.mxu0 0.0
  %374 = vmatprep.subr.mxu0 0.0
  %375 = vmatpush1.msra.mxu0 0.0
  %376 = vmatprep.subr.mxu0 0.0
  %377 = vmatpush1.msra.mxu0 0.0
  %378 = vmatprep.subr.mxu0 0.0
  %379 = vmatpush1.msra.mxu0 0.0
  %380 = vmatprep.subr.mxu0 0.0
  %381 = vmatpush1.msra.mxu0 0.0
  %382 = vmatprep.subr.mxu0 0.0
  %383 = vmatpush1.msra.mxu0 0.0
  %384 = vmatprep.subr.mxu0 0.0
  %385 = vmatpush1.msra.mxu0 0.0
  %386 = vmatprep.subr.mxu0 0.0
  %387 = vmatpush1.msra.mxu0 0.0
  %388 = vmatprep.subr.mxu0 0.0
  %389 = vmatpush1.msra.mxu0 0.0
  %390 = vmatprep.subr.mxu0 0.0
  %391 = vmatpush1.msra.mxu0 0.0
  %392 = vmatprep.mubr.f32.mxu0 0.0
  %393 = vmatmul.mubr.f32.gmra.mrb[0].mxu0 %v320
  %v394 = vpop.f32.mrb[0].mxu0
  %v395 = vadd.f32 0.0, %v394
  %v396 = vpop.f32.mrb[0].mxu0
  %397 = vmatprep.mubr.f32.mxu0 0.0
  %398 = vmatmul.mubr.f32.gmra.mrb[0].mxu0 %v323
  %v399 = vpop.f32.mrb[0].mxu0
  %v400 = vadd.f32 0.0, %v399
  %v401 = vpop.f32.mrb[0].mxu0
  %402 = vmatprep.mubr.f32.mxu0 0.0
  %403 = vmatmul.mubr.f32.gmra.mrb[0].mxu0 %v326
  %v404 = vpop.f32.mrb[0].mxu0
  %v405 = vadd.f32 0.0, %v404
  %v406 = vpop.f32.mrb[0].mxu0
  %407 = vdwg.mxu0
  %v408 = vadd.f32 %v313, %v395
  %v409 = vadd.f32 %v314, %v400
  %v410 = vadd.f32 %v315, %v405
  %vm411 = vcmask 80896
  %412 = vst.msk [vmem:[#allocation4] sm:$0xff] %vm411, %v408
  %413 = vst.msk [vmem:[#allocation4 + $0x8] sm:$0xff] %vm411, %v409
  %414 = vst.msk [vmem:[#allocation4 + $0x10] sm:$0xff] %vm411, %v410
  %vm415 = vcmask 7168
  %416 = vst.msk [vmem:[#allocation3] sm:$0xff] %vm415, %v259
  %417 = vst.msk [vmem:[#allocation3 + $0x8] sm:$0xff] %vm415, %v260
  %418 = vst.msk [vmem:[#allocation3 + $0x10] sm:$0xff] %vm415, %v261
  // Predicated region
  $region22: #{pinn_forward.7} parent=0 // pred_check
    %p419 = pneg %p20
  $region23: #{pinn_forward.7} parent=0 // pred_check_branch
    %421 = sbr.rel (%p419) target = $region25
  $region24: #{pinn_forward.7} parent=0 // pred_region
    %v422 = vld [vmem:[#allocation4] sm:$0xff]
    %v423 = vld [vmem:[#allocation4 + $0x8] sm:$0xff]
    %v424 = vld [vmem:[#allocation4 + $0x10] sm:$0xff]
    %426 = vset.pattern.permute.xlu0 9
    %427 = vperm.xlu0 %426, %v422
    %v428 = vpop.permute.xlu0 %427
    %431 = vset.pattern.permute.xlu0 9
    %432 = vperm.xlu0 %431, %v423
    %v433 = vpop.permute.xlu0 %432
    %436 = vset.pattern.permute.xlu0 9
    %437 = vperm.xlu0 %436, %v424
    %v438 = vpop.permute.xlu0 %437
    %v440 = vrcp.pop %v428
    %v441 = vmul.f32 %v422, %v440
    %v442 = vrcp.pop %v433
    %v443 = vmul.f32 %v423, %v442
    %v444 = vrcp.pop %v438
    %v445 = vmul.f32 %v424, %v444
    %v446 = vld [vmem:[%s3 + $0x18] sm:$0xff]
    %v447 = vld [vmem:[%s3 + $0x20] sm:$0x1]
    %v448 = vld [vmem:[%s3 + $0x28] sm:$0x1]
    %v449 = vlaneseq
    %v450 = vshrl.u32 %v449, 7
    %v451 = vsub.s32 0, %v450
    %v452 = vrot.slane %v448, %v451
    %v454 = vsel %vm141, %v441, 0
    %v457 = vsel %vm141, %v443, 0
    %v460 = vsel %vm141, %v445, 0
    %v463 = vsel %vm151, %v447, 0
    %465 = vmatprep.subr.mxu0 0.0
    %466 = vmatpush1.msra.mxu0 %v446
    %467 = vmatprep.subr.mxu0 0.0
    %468 = vmatpush1.msra.mxu0 %v463
    %469 = vmatprep.subr.mxu0 0.0
    %470 = vmatpush1.msra.mxu0 0.0
    %471 = vmatprep.subr.mxu0 0.0
    %472 = vmatpush1.msra.mxu0 0.0
    %473 = vmatprep.subr.mxu0 0.0
    %474 = vmatpush1.msra.mxu0 0.0
    %475 = vmatprep.subr.mxu0 0.0
    %476 = vmatpush1.msra.mxu0 0.0
    %477 = vmatprep.subr.mxu0 0.0
    %478 = vmatpush1.msra.mxu0 0.0
    %479 = vmatprep.subr.mxu0 0.0
    %480 = vmatpush1.msra.mxu0 0.0
    %481 = vmatprep.subr.mxu0 0.0
    %482 = vmatpush1.msra.mxu0 0.0
    %483 = vmatprep.subr.mxu0 0.0
    %484 = vmatpush1.msra.mxu0 0.0
    %485 = vmatprep.subr.mxu0 0.0
    %486 = vmatpush1.msra.mxu0 0.0
    %487 = vmatprep.subr.mxu0 0.0
    %488 = vmatpush1.msra.mxu0 0.0
    %489 = vmatprep.subr.mxu0 0.0
    %490 = vmatpush1.msra.mxu0 0.0
    %491 = vmatprep.subr.mxu0 0.0
    %492 = vmatpush1.msra.mxu0 0.0
    %493 = vmatprep.subr.mxu0 0.0
    %494 = vmatpush1.msra.mxu0 0.0
    %495 = vmatprep.subr.mxu0 0.0
    %496 = vmatpush1.msra.mxu0 0.0
    %497 = vmatprep.subr.mxu0 0.0
    %498 = vmatpush1.msra.mxu0 0.0
    %499 = vmatprep.subr.mxu0 0.0
    %500 = vmatpush1.msra.mxu0 0.0
    %501 = vmatprep.subr.mxu0 0.0
    %502 = vmatpush1.msra.mxu0 0.0
    %503 = vmatprep.subr.mxu0 0.0
    %504 = vmatpush1.msra.mxu0 0.0
    %505 = vmatprep.subr.mxu0 0.0
    %506 = vmatpush1.msra.mxu0 0.0
    %507 = vmatprep.subr.mxu0 0.0
    %508 = vmatpush1.msra.mxu0 0.0
    %509 = vmatprep.subr.mxu0 0.0
    %510 = vmatpush1.msra.mxu0 0.0
    %511 = vmatprep.subr.mxu0 0.0
    %512 = vmatpush1.msra.mxu0 0.0
    %513 = vmatprep.subr.mxu0 0.0
    %514 = vmatpush1.msra.mxu0 0.0
    %515 = vmatprep.subr.mxu0 0.0
    %516 = vmatpush1.msra.mxu0 0.0
    %517 = vmatprep.subr.mxu0 0.0
    %518 = vmatpush1.msra.mxu0 0.0
    %519 = vmatprep.subr.mxu0 0.0
    %520 = vmatpush1.msra.mxu0 0.0
    %521 = vmatprep.subr.mxu0 0.0
    %522 = vmatpush1.msra.mxu0 0.0
    %523 = vmatprep.subr.mxu0 0.0
    %524 = vmatpush1.msra.mxu0 0.0
    %525 = vmatprep.subr.mxu0 0.0
    %526 = vmatpush1.msra.mxu0 0.0
    %527 = vmatprep.subr.mxu0 0.0
    %528 = vmatpush1.msra.mxu0 0.0
    %529 = vmatprep.mubr.f32.mxu0 0.0
    %530 = vmatmul.mubr.f32.gmra.mrb[0].mxu0 %v454
    %v531 = vpop.f32.mrb[0].mxu0
    %v532 = vadd.f32 %v452, %v531
    %v533 = vpop.f32.mrb[0].mxu0
    %534 = vmatprep.mubr.f32.mxu0 0.0
    %535 = vmatmul.mubr.f32.gmra.mrb[0].mxu0 %v457
    %v536 = vpop.f32.mrb[0].mxu0
    %v537 = vadd.f32 %v452, %v536
    %v538 = vpop.f32.mrb[0].mxu0
    %539 = vmatprep.mubr.f32.mxu0 0.0
    %540 = vmatmul.mubr.f32.gmra.mrb[0].mxu0 %v460
    %v541 = vpop.f32.mrb[0].mxu0
    %v542 = vadd.f32 %v452, %v541
    %v543 = vpop.f32.mrb[0].mxu0
    %544 = vdwg.mxu0
    %v545 = vadd.f32 %v532, %v17
    %v546 = vadd.f32 %v537, %v18
    %v547 = vadd.f32 %v542, %v19
    %v548 = vsel %vm141, %v545, 0.0
    %549 = vadd.xlane.f32.xlu0 %v548
    %v550 = vpop.xlane.xlu0 %549
    %v551 = vsel %vm141, %v546, 0.0
    %552 = vadd.xlane.f32.xlu0 %v551
    %v553 = vpop.xlane.xlu0 %552
    %v554 = vsel %vm141, %v547, 0.0
    %555 = vadd.xlane.f32.xlu0 %v554
    %v556 = vpop.xlane.xlu0 %555
    %v557 = vrcp.pop 9.0
    %v558 = vmul.f32 %v550, %v557
    %v559 = vmul.f32 %v553, %v557
    %v560 = vmul.f32 %v556, %v557
    %v561 = vsub.f32 %v545, %v558
    %v562 = vsub.f32 %v546, %v559
    %v563 = vsub.f32 %v547, %v560
    %v564 = vmul.f32 %v561, %v561
    %v565 = vmul.f32 %v562, %v562
    %v566 = vmul.f32 %v563, %v563
    %v567 = vsel %vm141, %v564, 0.0
    %568 = vadd.xlane.f32.xlu0 %v567
    %v569 = vpop.xlane.xlu0 %568
    %v570 = vsel %vm141, %v565, 0.0
    %571 = vadd.xlane.f32.xlu0 %v570
    %v572 = vpop.xlane.xlu0 %571
    %v573 = vsel %vm141, %v566, 0.0
    %574 = vadd.xlane.f32.xlu0 %v573
    %v575 = vpop.xlane.xlu0 %574
    %v576 = vmul.f32 %v569, %v557
    %v577 = vmul.f32 %v572, %v557
    %v578 = vmul.f32 %v575, %v557
    %v579 = vadd.f32 %v576, 1e-05
    %v580 = vadd.f32 %v577, 1e-05
    %v581 = vadd.f32 %v578, 1e-05
    %v582 = vrsqrt.pop %v579
    %v583 = vrsqrt.pop %v580
    %v584 = vrsqrt.pop %v581
    %v585 = vmul.f32 %v561, %v582
    %v586 = vmul.f32 %v562, %v583
    %v587 = vmul.f32 %v563, %v584
    %v588 = vld [vmem:[%s3 + $0x30] sm:$0x1]
    %v589 = vlaneseq
    %v590 = vshrl.u32 %v589, 7
    %v591 = vsub.s32 0, %v590
    %v592 = vrot.slane %v588, %v591
    %v593 = vmul.f32 %v585, %v592
    %v594 = vmul.f32 %v586, %v592
    %v595 = vmul.f32 %v587, %v592
    %v596 = vld [vmem:[%s3 + $0x38] sm:$0x1]
    %v597 = vlaneseq
    %v598 = vshrl.u32 %v597, 7
    %v599 = vsub.s32 0, %v598
    %v600 = vrot.slane %v596, %v599
    %v601 = vadd.f32 %v593, %v600
    %v602 = vadd.f32 %v594, %v600
    %v603 = vadd.f32 %v595, %v600
    %v604 = vld [vmem:[%s3 + $0x40] sm:$0xff]
    %v605 = vld [vmem:[%s3 + $0x48] sm:$0x1]
    %v606 = vld [vmem:[%s3 + $0x50] sm:$0x1]
    %v607 = vlaneseq
    %v608 = vshrl.u32 %v607, 7
    %v609 = vsub.s32 0, %v608
    %v610 = vrot.slane %v606, %v609
    %v612 = vsel %vm141, %v532, 0
    %v615 = vsel %vm141, %v537, 0
    %v618 = vsel %vm141, %v542, 0
    %v621 = vsel %vm151, %v605, 0
    %623 = vmatprep.subr.mxu0 0.0
    %624 = vmatpush1.msra.mxu0 %v604
    %625 = vmatprep.subr.mxu0 0.0
    %626 = vmatpush1.msra.mxu0 %v621
    %627 = vmatprep.subr.mxu0 0.0
    %628 = vmatpush1.msra.mxu0 0.0
    %629 = vmatprep.subr.mxu0 0.0
    %630 = vmatpush1.msra.mxu0 0.0
    %631 = vmatprep.subr.mxu0 0.0
    %632 = vmatpush1.msra.mxu0 0.0
    %633 = vmatprep.subr.mxu0 0.0
    %634 = vmatpush1.msra.mxu0 0.0
    %635 = vmatprep.subr.mxu0 0.0
    %636 = vmatpush1.msra.mxu0 0.0
    %637 = vmatprep.subr.mxu0 0.0
    %638 = vmatpush1.msra.mxu0 0.0
    %639 = vmatprep.subr.mxu0 0.0
    %640 = vmatpush1.msra.mxu0 0.0
    %641 = vmatprep.subr.mxu0 0.0
    %642 = vmatpush1.msra.mxu0 0.0
    %643 = vmatprep.subr.mxu0 0.0
    %644 = vmatpush1.msra.mxu0 0.0
    %645 = vmatprep.subr.mxu0 0.0
    %646 = vmatpush1.msra.mxu0 0.0
    %647 = vmatprep.subr.mxu0 0.0
    %648 = vmatpush1.msra.mxu0 0.0
    %649 = vmatprep.subr.mxu0 0.0
    %650 = vmatpush1.msra.mxu0 0.0
    %651 = vmatprep.subr.mxu0 0.0
    %652 = vmatpush1.msra.mxu0 0.0
    %653 = vmatprep.subr.mxu0 0.0
    %654 = vmatpush1.msra.mxu0 0.0
    %655 = vmatprep.subr.mxu0 0.0
    %656 = vmatpush1.msra.mxu0 0.0
    %657 = vmatprep.subr.mxu0 0.0
    %658 = vmatpush1.msra.mxu0 0.0
    %659 = vmatprep.subr.mxu0 0.0
    %660 = vmatpush1.msra.mxu0 0.0
    %661 = vmatprep.subr.mxu0 0.0
    %662 = vmatpush1.msra.mxu0 0.0
    %663 = vmatprep.subr.mxu0 0.0
    %664 = vmatpush1.msra.mxu0 0.0
    %665 = vmatprep.subr.mxu0 0.0
    %666 = vmatpush1.msra.mxu0 0.0
    %667 = vmatprep.subr.mxu0 0.0
    %668 = vmatpush1.msra.mxu0 0.0
    %669 = vmatprep.subr.mxu0 0.0
    %670 = vmatpush1.msra.mxu0 0.0
    %671 = vmatprep.subr.mxu0 0.0
    %672 = vmatpush1.msra.mxu0 0.0
    %673 = vmatprep.subr.mxu0 0.0
    %674 = vmatpush1.msra.mxu0 0.0
    %675 = vmatprep.subr.mxu0 0.0
    %676 = vmatpush1.msra.mxu0 0.0
    %677 = vmatprep.subr.mxu0 0.0
    %678 = vmatpush1.msra.mxu0 0.0
    %679 = vmatprep.subr.mxu0 0.0
    %680 = vmatpush1.msra.mxu0 0.0
    %681 = vmatprep.subr.mxu0 0.0
    %682 = vmatpush1.msra.mxu0 0.0
    %683 = vmatprep.subr.mxu0 0.0
    %684 = vmatpush1.msra.mxu0 0.0
    %685 = vmatprep.subr.mxu0 0.0
    %686 = vmatpush1.msra.mxu0 0.0
    %687 = vmatprep.mubr.f32.mxu0 0.0
    %688 = vmatmul.mubr.f32.gmra.mrb[0].mxu0 %v612
    %v689 = vpop.f32.mrb[0].mxu0
    %v690 = vadd.f32 %v610, %v689
    %v691 = vpop.f32.mrb[0].mxu0
    %692 = vmatprep.mubr.f32.mxu0 0.0
    %693 = vmatmul.mubr.f32.gmra.mrb[0].mxu0 %v615
    %v694 = vpop.f32.mrb[0].mxu0
    %v695 = vadd.f32 %v610, %v694
    %v696 = vpop.f32.mrb[0].mxu0
    %697 = vmatprep.mubr.f32.mxu0 0.0
    %698 = vmatmul.mubr.f32.gmra.mrb[0].mxu0 %v618
    %v699 = vpop.f32.mrb[0].mxu0
    %v700 = vadd.f32 %v610, %v699
    %v701 = vpop.f32.mrb[0].mxu0
    %702 = vdwg.mxu0
    %v703 = vadd.f32 %v690, %v601
    %v704 = vadd.f32 %v695, %v602
    %v705 = vadd.f32 %v700, %v603
    %v706 = vmax.f32 %v703, 0.0
    %v707 = vmax.f32 %v704, 0.0
    %v708 = vmax.f32 %v705, 0.0
    %v709 = vld [vmem:[%s3 + $0x58] sm:$0x1]
    %v710 = vld [vmem:[%s3 + $0x60] sm:$0x1]
    %712 = vset.pattern.permute.xlu0 0
    %713 = vperm.xlu0 %712, %v710
    %v714 = vpop.permute.xlu0 %713
    %v717 = vsel %vm141, %v709, 0
    %v720 = vsel %vm141, %v706, 0
    %v723 = vsel %vm141, %v707, 0
    %v726 = vsel %vm141, %v708, 0
    %728 = vmatprep.subr.mxu0 0.0
    %729 = vmatpush1.xpose.msra.mxu0 %v720
    %730 = vmatprep.subr.mxu0 0.0
    %731 = vmatpush1.xpose.msra.mxu0 %v723
    %732 = vmatprep.subr.mxu0 0.0
    %733 = vmatpush1.xpose.msra.mxu0 %v726
    %734 = vmatprep.subr.mxu0 0.0
    %735 = vmatpush1.xpose.msra.mxu0 0.0
    %736 = vmatprep.subr.mxu0 0.0
    %737 = vmatpush1.xpose.msra.mxu0 0.0
    %738 = vmatprep.subr.mxu0 0.0
    %739 = vmatpush1.xpose.msra.mxu0 0.0
    %740 = vmatprep.subr.mxu0 0.0
    %741 = vmatpush1.xpose.msra.mxu0 0.0
    %742 = vmatprep.subr.mxu0 0.0
    %743 = vmatpush1.xpose.msra.mxu0 0.0
    %744 = vmatprep.subr.mxu0 0.0
    %745 = vmatpush1.xpose.msra.mxu0 0.0
    %746 = vmatprep.subr.mxu0 0.0
    %747 = vmatpush1.xpose.msra.mxu0 0.0
    %748 = vmatprep.subr.mxu0 0.0
    %749 = vmatpush1.xpose.msra.mxu0 0.0
    %750 = vmatprep.subr.mxu0 0.0
    %751 = vmatpush1.xpose.msra.mxu0 0.0
    %752 = vmatprep.subr.mxu0 0.0
    %753 = vmatpush1.xpose.msra.mxu0 0.0
    %754 = vmatprep.subr.mxu0 0.0
    %755 = vmatpush1.xpose.msra.mxu0 0.0
    %756 = vmatprep.subr.mxu0 0.0
    %757 = vmatpush1.xpose.msra.mxu0 0.0
    %758 = vmatprep.subr.mxu0 0.0
    %759 = vmatpush1.xpose.msra.mxu0 0.0
    %760 = vmatprep.subr.mxu0 0.0
    %761 = vmatpush1.xpose.msra.mxu0 0.0
    %762 = vmatprep.subr.mxu0 0.0
    %763 = vmatpush1.xpose.msra.mxu0 0.0
    %764 = vmatprep.subr.mxu0 0.0
    %765 = vmatpush1.xpose.msra.mxu0 0.0
    %766 = vmatprep.subr.mxu0 0.0
    %767 = vmatpush1.xpose.msra.mxu0 0.0
    %768 = vmatprep.subr.mxu0 0.0
    %769 = vmatpush1.xpose.msra.mxu0 0.0
    %770 = vmatprep.subr.mxu0 0.0
    %771 = vmatpush1.xpose.msra.mxu0 0.0
    %772 = vmatprep.subr.mxu0 0.0
    %773 = vmatpush1.xpose.msra.mxu0 0.0
    %774 = vmatprep.subr.mxu0 0.0
    %775 = vmatpush1.xpose.msra.mxu0 0.0
    %776 = vmatprep.subr.mxu0 0.0
    %777 = vmatpush1.xpose.msra.mxu0 0.0
    %778 = vmatprep.subr.mxu0 0.0
    %779 = vmatpush1.xpose.msra.mxu0 0.0
    %780 = vmatprep.subr.mxu0 0.0
    %781 = vmatpush1.xpose.msra.mxu0 0.0
    %782 = vmatprep.subr.mxu0 0.0
    %783 = vmatpush1.xpose.msra.mxu0 0.0
    %784 = vmatprep.subr.mxu0 0.0
    %785 = vmatpush1.xpose.msra.mxu0 0.0
    %786 = vmatprep.subr.mxu0 0.0
    %787 = vmatpush1.xpose.msra.mxu0 0.0
    %788 = vmatprep.subr.mxu0 0.0
    %789 = vmatpush1.xpose.msra.mxu0 0.0
    %790 = vmatprep.subr.mxu0 0.0
    %791 = vmatpush1.xpose.msra.mxu0 0.0
    %792 = vmatprep.mubr.f32.mxu0 0.0
    %793 = vmatmul.mubr.f32.gmra.mrb[0].mxu0 %v717
    %v794 = vpop.f32.mrb[0].mxu0
    %v795 = vadd.f32 %v714, %v794
    %v796 = vpop.f32.mrb[0].mxu0
    %797 = vdwg.mxu0
    %vm798 = vcmp.eq.s32.totalorder %v236, 9
    %v799 = vsel %vm798, 1, 0
    %v800 = vcvt.s32.f32 %v799
    %801 = vmatprep.subr.mxu0 0.0
    %802 = vmatpush1.xpose.msra.mxu0 %v17
    %803 = vmatprep.subr.mxu0 0.0
    %804 = vmatpush1.xpose.msra.mxu0 %v18
    %805 = vmatprep.subr.mxu0 0.0
    %806 = vmatpush1.xpose.msra.mxu0 %v19
    %807 = vmatprep.subr.mxu0 0.0
    %808 = vmatpush1.xpose.msra.mxu0 0.0
    %809 = vmatprep.subr.mxu0 0.0
    %810 = vmatpush1.xpose.msra.mxu0 0.0
    %811 = vmatprep.subr.mxu0 0.0
    %812 = vmatpush1.xpose.msra.mxu0 0.0
    %813 = vmatprep.subr.mxu0 0.0
    %814 = vmatpush1.xpose.msra.mxu0 0.0
    %815 = vmatprep.subr.mxu0 0.0
    %816 = vmatpush1.xpose.msra.mxu0 0.0
    %817 = vmatprep.subr.mxu0 0.0
    %818 = vmatpush1.xpose.msra.mxu0 0.0
    %819 = vmatprep.subr.mxu0 0.0
    %820 = vmatpush1.xpose.msra.mxu0 0.0
    %821 = vmatprep.subr.mxu0 0.0
    %822 = vmatpush1.xpose.msra.mxu0 0.0
    %823 = vmatprep.subr.mxu0 0.0
    %824 = vmatpush1.xpose.msra.mxu0 0.0
    %825 = vmatprep.subr.mxu0 0.0
    %826 = vmatpush1.xpose.msra.mxu0 0.0
    %827 = vmatprep.subr.mxu0 0.0
    %828 = vmatpush1.xpose.msra.mxu0 0.0
    %829 = vmatprep.subr.mxu0 0.0
    %830 = vmatpush1.xpose.msra.mxu0 0.0
    %831 = vmatprep.subr.mxu0 0.0
    %832 = vmatpush1.xpose.msra.mxu0 0.0
    %833 = vmatprep.subr.mxu0 0.0
    %834 = vmatpush1.xpose.msra.mxu0 0.0
    %835 = vmatprep.subr.mxu0 0.0
    %836 = vmatpush1.xpose.msra.mxu0 0.0
    %837 = vmatprep.subr.mxu0 0.0
    %838 = vmatpush1.xpose.msra.mxu0 0.0
    %839 = vmatprep.subr.mxu0 0.0
    %840 = vmatpush1.xpose.msra.mxu0 0.0
    %841 = vmatprep.subr.mxu0 0.0
    %842 = vmatpush1.xpose.msra.mxu0 0.0
    %843 = vmatprep.subr.mxu0 0.0
    %844 = vmatpush1.xpose.msra.mxu0 0.0
    %845 = vmatprep.subr.mxu0 0.0
    %846 = vmatpush1.xpose.msra.mxu0 0.0
    %847 = vmatprep.subr.mxu0 0.0
    %848 = vmatpush1.xpose.msra.mxu0 0.0
    %849 = vmatprep.subr.mxu0 0.0
    %850 = vmatpush1.xpose.msra.mxu0 0.0
    %851 = vmatprep.subr.mxu0 0.0
    %852 = vmatpush1.xpose.msra.mxu0 0.0
    %853 = vmatprep.subr.mxu0 0.0
    %854 = vmatpush1.xpose.msra.mxu0 0.0
    %855 = vmatprep.subr.mxu0 0.0
    %856 = vmatpush1.xpose.msra.mxu0 0.0
    %857 = vmatprep.subr.mxu0 0.0
    %858 = vmatpush1.xpose.msra.mxu0 0.0
    %859 = vmatprep.subr.mxu0 0.0
    %860 = vmatpush1.xpose.msra.mxu0 0.0
    %861 = vmatprep.subr.mxu0 0.0
    %862 = vmatpush1.xpose.msra.mxu0 0.0
    %863 = vmatprep.subr.mxu0 0.0
    %864 = vmatpush1.xpose.msra.mxu0 0.0
    %865 = vmatprep.mubr.f32.mxu0 0.0
    %866 = vmatmul.mubr.f32.gmra.mrb[0].mxu0 %v800
    %v867 = vpop.f32.mrb[0].mxu0
    %v868 = vadd.f32 0.0, %v867
    %v869 = vpop.f32.mrb[0].mxu0
    %870 = vdwg.mxu0
    %v871 = vsub.f32 %v868, %v795
    %v872 = vlaneseq
    %v873 = vshrl.u32 %v872, 7
    %v874 = vsub.s32 0, %v873
    %v875 = vrot.slane %v871, %v874
    %876 = vst.msk [vmem:[%s4] sm:$0xff] %vm249, %v875
  $region25: #{pinn_forward.7} parent=0 // pred_fallthru
    _
  // Predicated region
  $region26: #{pinn_forward.7} parent=0 // pred_check
    _
  $region27: #{pinn_forward.7} parent=0 // pred_check_branch
    %878 = sbr.rel (0) target = $region29
  $region28: #{pinn_forward.7} parent=0 // pred_region
    _
  $region29: #{pinn_forward.7} parent=0 // pred_fallthru
    _
  // Predicated region
  $region30: #{pinn_forward.7} parent=0 // pred_check
    _
  $region31: #{pinn_forward.7} parent=0 // pred_check_branch
    %880 = sbr.rel (0) target = $region33
  $region32: #{pinn_forward.7} parent=0 // pred_region
    _
  $region33: #{pinn_forward.7} parent=0 // pred_fallthru
    _

// kernel: pinn_forward.5
$region0: #{pinn_forward.5}
  #allocation0 [shape = 'u32[]', space=smem, size = 0x4, offset = 0x4, fixed_abs, tag = 'smem constant byte address 0x4 - core index']
  #allocation1 [shape = 'u32[144,128]{1,0:T(1,128)}', space=vmem, size = 0x12000, scoped, tag = 'internal scratch']
  #allocation2 [shape = 'f32[24,6]{1,0:T(8,128)}', space=vmem, size = 0x3000, scoped, tag = 'scratch operand']
  #allocation3 [shape = 'f32[24,1]{1,0:T(8,128)}', space=vmem, size = 0x3000, scoped, tag = 'scratch operand']
  #allocation4 [shape = 'f32[24,7]{1,0:T(8,128)}', space=vmem, size = 0x3000, scoped, tag = 'scratch operand']
  %s0 = inlined_call_operand.vmem [shape: f32[24,6], index: 0, kind: input, shape index: {}]
  %s1 = inlined_call_operand.vmem [shape: f32[6,24], index: 1, kind: input, shape index: {}]
  %s2 = inlined_call_operand.vmem [shape: f32[24,7], index: 2, kind: input, shape index: {}]
  %s3 = inlined_call_operand.vmem [shape: f32[24,1], index: 3, kind: input, shape index: {}]
  %s4 = inlined_call_operand.vmem [shape: f32[224,128], index: 4, kind: input, shape index: {}]
  %s5 = inlined_call_operand.vmem [shape: f32[24,128], index: 5, kind: output, shape index: {}]
  %s6 = sld [smem:[#allocation0]]
  $region38: #{pinn_forward.5} parent=0
    _
  %s8 = ssub.s32 1, %s6
  %s9 = scalar_select 0, %s8, %s6
  // Predicated region
  $region2: #{pinn_forward.5} parent=0 // pred_check
    _
  $region3: #{pinn_forward.5} parent=0 // pred_check_branch
    %11 = sbr.rel (0) target = $region5
  $region4: #{pinn_forward.5} parent=0 // pred_region
    _
  $region5: #{pinn_forward.5} parent=0 // pred_fallthru
    _
  // Predicated region
  $region6: #{pinn_forward.5} parent=0 // pred_check
    _
  $region7: #{pinn_forward.5} parent=0 // pred_check_branch
    %13 = sbr.rel (0) target = $region9
  $region8: #{pinn_forward.5} parent=0 // pred_region
    _
  $region9: #{pinn_forward.5} parent=0 // pred_fallthru
    _
  // Predicated region
  $region10: #{pinn_forward.5} parent=0 // pred_check
    _
  $region11: #{pinn_forward.5} parent=0 // pred_check_branch
    %15 = sbr.rel (0) target = $region13
  $region12: #{pinn_forward.5} parent=0 // pred_region
    _
  $region13: #{pinn_forward.5} parent=0 // pred_fallthru
    _
  // Predicated region
  $region14: #{pinn_forward.5} parent=0 // pred_check
    _
  $region15: #{pinn_forward.5} parent=0 // pred_check_branch
    %17 = sbr.rel (0) target = $region17
  $region16: #{pinn_forward.5} parent=0 // pred_region
    _
  $region17: #{pinn_forward.5} parent=0 // pred_fallthru
    _
  // Predicated region
  $region18: #{pinn_forward.5} parent=0 // pred_check
    _
  $region19: #{pinn_forward.5} parent=0 // pred_check_branch
    %19 = sbr.rel (0) target = $region21
  $region20: #{pinn_forward.5} parent=0 // pred_region
    _
  $region21: #{pinn_forward.5} parent=0 // pred_fallthru
    _
  %v20 = vld [vmem:[%s0] sm:$0xff]
  %v21 = vld [vmem:[%s0 + $0x8] sm:$0xff]
  %v22 = vld [vmem:[%s0 + $0x10] sm:$0xff]
  %p23 = scmp.eq.s32.totalorder 0, 0
  // Predicated region
  $region22: #{pinn_forward.5} parent=0 // pred_check
    %p24 = pneg %p23
  $region23: #{pinn_forward.5} parent=0 // pred_check_branch
    %26 = sbr.rel (%p24) target = $region25
  $region24: #{pinn_forward.5} parent=0 // pred_region
    %v27 = vld [vmem:[%s4] sm:$0x3f]
    %v28 = vld [vmem:[%s4 + $0x8] sm:$0x1]
    %v29 = vlaneseq
    %v30 = vshrl.u32 %v29, 7
    %v31 = vsub.s32 0, %v30
    %v32 = vrot.slane %v28, %v31
    %vm33 = vcmask 48128
    %v35 = vsel %vm33, %v20, 0
    %v38 = vsel %vm33, %v21, 0
    %v41 = vsel %vm33, %v22, 0
    %vm43 = vcmask 1045504
    %v45 = vsel %vm43, %v27, 0
    %47 = vmatprep.subr.mxu0 0.0
    %48 = vmatpush1.msra.mxu0 %v45
    %49 = vmatprep.subr.mxu0 0.0
    %50 = vmatpush1.msra.mxu0 0.0
    %51 = vmatprep.subr.mxu0 0.0
    %52 = vmatpush1.msra.mxu0 0.0
    %53 = vmatprep.subr.mxu0 0.0
    %54 = vmatpush1.msra.mxu0 0.0
    %55 = vmatprep.subr.mxu0 0.0
    %56 = vmatpush1.msra.mxu0 0.0
    %57 = vmatprep.subr.mxu0 0.0
    %58 = vmatpush1.msra.mxu0 0.0
    %59 = vmatprep.subr.mxu0 0.0
    %60 = vmatpush1.msra.mxu0 0.0
    %61 = vmatprep.subr.mxu0 0.0
    %62 = vmatpush1.msra.mxu0 0.0
    %63 = vmatprep.subr.mxu0 0.0
    %64 = vmatpush1.msra.mxu0 0.0
    %65 = vmatprep.subr.mxu0 0.0
    %66 = vmatpush1.msra.mxu0 0.0
    %67 = vmatprep.subr.mxu0 0.0
    %68 = vmatpush1.msra.mxu0 0.0
    %69 = vmatprep.subr.mxu0 0.0
    %70 = vmatpush1.msra.mxu0 0.0
    %71 = vmatprep.subr.mxu0 0.0
    %72 = vmatpush1.msra.mxu0 0.0
    %73 = vmatprep.subr.mxu0 0.0
    %74 = vmatpush1.msra.mxu0 0.0
    %75 = vmatprep.subr.mxu0 0.0
    %76 = vmatpush1.msra.mxu0 0.0
    %77 = vmatprep.subr.mxu0 0.0
    %78 = vmatpush1.msra.mxu0 0.0
    %79 = vmatprep.subr.mxu0 0.0
    %80 = vmatpush1.msra.mxu0 0.0
    %81 = vmatprep.subr.mxu0 0.0
    %82 = vmatpush1.msra.mxu0 0.0
    %83 = vmatprep.subr.mxu0 0.0
    %84 = vmatpush1.msra.mxu0 0.0
    %85 = vmatprep.subr.mxu0 0.0
    %86 = vmatpush1.msra.mxu0 0.0
    %87 = vmatprep.subr.mxu0 0.0
    %88 = vmatpush1.msra.mxu0 0.0
    %89 = vmatprep.subr.mxu0 0.0
    %90 = vmatpush1.msra.mxu0 0.0
    %91 = vmatprep.subr.mxu0 0.0
    %92 = vmatpush1.msra.mxu0 0.0
    %93 = vmatprep.subr.mxu0 0.0
    %94 = vmatpush1.msra.mxu0 0.0
    %95 = vmatprep.subr.mxu0 0.0
    %96 = vmatpush1.msra.mxu0 0.0
    %97 = vmatprep.subr.mxu0 0.0
    %98 = vmatpush1.msra.mxu0 0.0
    %99 = vmatprep.subr.mxu0 0.0
    %100 = vmatpush1.msra.mxu0 0.0
    %101 = vmatprep.subr.mxu0 0.0
    %102 = vmatpush1.msra.mxu0 0.0
    %103 = vmatprep.subr.mxu0 0.0
    %104 = vmatpush1.msra.mxu0 0.0
    %105 = vmatprep.subr.mxu0 0.0
    %106 = vmatpush1.msra.mxu0 0.0
    %107 = vmatprep.subr.mxu0 0.0
    %108 = vmatpush1.msra.mxu0 0.0
    %109 = vmatprep.subr.mxu0 0.0
    %110 = vmatpush1.msra.mxu0 0.0
    %111 = vmatprep.mubr.f32.mxu0 0.0
    %112 = vmatmul.mubr.f32.gmra.mrb[0].mxu0 %v35
    %v113 = vpop.f32.mrb[0].mxu0
    %v114 = vadd.f32 %v32, %v113
    %v115 = vpop.f32.mrb[0].mxu0
    %116 = vmatprep.mubr.f32.mxu0 0.0
    %117 = vmatmul.mubr.f32.gmra.mrb[0].mxu0 %v38
    %v118 = vpop.f32.mrb[0].mxu0
    %v119 = vadd.f32 %v32, %v118
    %v120 = vpop.f32.mrb[0].mxu0
    %121 = vmatprep.mubr.f32.mxu0 0.0
    %122 = vmatmul.mubr.f32.gmra.mrb[0].mxu0 %v41
    %v123 = vpop.f32.mrb[0].mxu0
    %v124 = vadd.f32 %v32, %v123
    %v125 = vpop.f32.mrb[0].mxu0
    %126 = vdwg.mxu0
    %127 = vst.msk [vmem:[#allocation2] sm:$0xff] %vm33, %v114
    %128 = vst.msk [vmem:[#allocation2 + $0x8] sm:$0xff] %vm33, %v119
    %129 = vst.msk [vmem:[#allocation2 + $0x10] sm:$0xff] %vm33, %v124
    %vm130 = vcmask 7168
    %131 = vst.msk [vmem:[#allocation3] sm:$0xff] %vm130, -inf
    %132 = vst.msk [vmem:[#allocation3 + $0x8] sm:$0xff] %vm130, -inf
    %133 = vst.msk [vmem:[#allocation3 + $0x10] sm:$0xff] %vm130, -inf
    %vm134 = vcmask 56320
    %135 = vst.msk [vmem:[#allocation4] sm:$0xff] %vm134, 0.0
    %136 = vst.msk [vmem:[#allocation4 + $0x8] sm:$0xff] %vm134, 0.0
    %137 = vst.msk [vmem:[#allocation4 + $0x10] sm:$0xff] %vm134, 0.0
  $region25: #{pinn_forward.5} parent=0 // pred_fallthru
    _
  %v138 = vld [vmem:[#allocation2] sm:$0xff]
  %v139 = vld [vmem:[#allocation2 + $0x8] sm:$0xff]
  %v140 = vld [vmem:[#allocation2 + $0x10] sm:$0xff]
  %v141 = vld [vmem:[%s1] sm:$0x3f]
  %vm142 = vcmask 48128
  %v144 = vsel %vm142, %v138, 0
  %v147 = vsel %vm142, %v139, 0
  %v150 = vsel %vm142, %v140, 0
  %vm152 = vcmask 1045504
  %v154 = vsel %vm152, %v141, 0
  %156 = vmatprep.subr.mxu0 0.0
  %157 = vmatpush1.msra.mxu0 %v154
  %158 = vmatprep.subr.mxu0 0.0
  %159 = vmatpush1.msra.mxu0 0.0
  %160 = vmatprep.subr.mxu0 0.0
  %161 = vmatpush1.msra.mxu0 0.0
  %162 = vmatprep.subr.mxu0 0.0
  %163 = vmatpush1.msra.mxu0 0.0
  %164 = vmatprep.subr.mxu0 0.0
  %165 = vmatpush1.msra.mxu0 0.0
  %166 = vmatprep.subr.mxu0 0.0
  %167 = vmatpush1.msra.mxu0 0.0
  %168 = vmatprep.subr.mxu0 0.0
  %169 = vmatpush1.msra.mxu0 0.0
  %170 = vmatprep.subr.mxu0 0.0
  %171 = vmatpush1.msra.mxu0 0.0
  %172 = vmatprep.subr.mxu0 0.0
  %173 = vmatpush1.msra.mxu0 0.0
  %174 = vmatprep.subr.mxu0 0.0
  %175 = vmatpush1.msra.mxu0 0.0
  %176 = vmatprep.subr.mxu0 0.0
  %177 = vmatpush1.msra.mxu0 0.0
  %178 = vmatprep.subr.mxu0 0.0
  %179 = vmatpush1.msra.mxu0 0.0
  %180 = vmatprep.subr.mxu0 0.0
  %181 = vmatpush1.msra.mxu0 0.0
  %182 = vmatprep.subr.mxu0 0.0
  %183 = vmatpush1.msra.mxu0 0.0
  %184 = vmatprep.subr.mxu0 0.0
  %185 = vmatpush1.msra.mxu0 0.0
  %186 = vmatprep.subr.mxu0 0.0
  %187 = vmatpush1.msra.mxu0 0.0
  %188 = vmatprep.subr.mxu0 0.0
  %189 = vmatpush1.msra.mxu0 0.0
  %190 = vmatprep.subr.mxu0 0.0
  %191 = vmatpush1.msra.mxu0 0.0
  %192 = vmatprep.subr.mxu0 0.0
  %193 = vmatpush1.msra.mxu0 0.0
  %194 = vmatprep.subr.mxu0 0.0
  %195 = vmatpush1.msra.mxu0 0.0
  %196 = vmatprep.subr.mxu0 0.0
  %197 = vmatpush1.msra.mxu0 0.0
  %198 = vmatprep.subr.mxu0 0.0
  %199 = vmatpush1.msra.mxu0 0.0
  %200 = vmatprep.subr.mxu0 0.0
  %201 = vmatpush1.msra.mxu0 0.0
  %202 = vmatprep.subr.mxu0 0.0
  %203 = vmatpush1.msra.mxu0 0.0
  %204 = vmatprep.subr.mxu0 0.0
  %205 = vmatpush1.msra.mxu0 0.0
  %206 = vmatprep.subr.mxu0 0.0
  %207 = vmatpush1.msra.mxu0 0.0
  %208 = vmatprep.subr.mxu0 0.0
  %209 = vmatpush1.msra.mxu0 0.0
  %210 = vmatprep.subr.mxu0 0.0
  %211 = vmatpush1.msra.mxu0 0.0
  %212 = vmatprep.subr.mxu0 0.0
  %213 = vmatpush1.msra.mxu0 0.0
  %214 = vmatprep.subr.mxu0 0.0
  %215 = vmatpush1.msra.mxu0 0.0
  %216 = vmatprep.subr.mxu0 0.0
  %217 = vmatpush1.msra.mxu0 0.0
  %218 = vmatprep.subr.mxu0 0.0
  %219 = vmatpush1.msra.mxu0 0.0
  %220 = vmatprep.mubr.f32.mxu0 0.0
  %221 = vmatmul.mubr.f32.gmra.mrb[0].mxu0 %v144
  %v222 = vpop.f32.mrb[0].mxu0
  %v223 = vadd.f32 0.0, %v222
  %v224 = vpop.f32.mrb[0].mxu0
  %225 = vmatprep.mubr.f32.mxu0 0.0
  %226 = vmatmul.mubr.f32.gmra.mrb[0].mxu0 %v147
  %v227 = vpop.f32.mrb[0].mxu0
  %v228 = vadd.f32 0.0, %v227
  %v229 = vpop.f32.mrb[0].mxu0
  %230 = vmatprep.mubr.f32.mxu0 0.0
  %231 = vmatmul.mubr.f32.gmra.mrb[0].mxu0 %v150
  %v232 = vpop.f32.mrb[0].mxu0
  %v233 = vadd.f32 0.0, %v232
  %v234 = vpop.f32.mrb[0].mxu0
  %235 = vdwg.mxu0
  %v236 = vlaneseq
  %v237 = vand.u32 %v236, 127
  %s238 = smul.u32 0, 24
  %v239 = vstv %s238
  %v240 = vadd.s32 %v237, %v239
  %vm241 = vcmp.lt.s32.totalorder %v240, 21
  %v242 = vsel %vm241, 1, 0
  %vm243 = vcmp.eq.s32.totalorder %v242, 1
  %v244 = vsel %vm243, %v223, -inf
  %v245 = vsel %vm243, %v228, -inf
  %v246 = vsel %vm243, %v233, -inf
  %v247 = vld [vmem:[#allocation3] sm:$0xff]
  %v248 = vld [vmem:[#allocation3 + $0x8] sm:$0xff]
  %v249 = vld [vmem:[#allocation3 + $0x10] sm:$0xff]
  %vm250 = vcmask 195584
  %v251 = vsel %vm250, %v244, -inf
  %252 = vmax.xlane.f32.xlu0 %v251
  %v253 = vpop.xlane.xlu0 %252
  %v254 = vsel %vm250, %v245, -inf
  %255 = vmax.xlane.f32.xlu0 %v254
  %v256 = vpop.xlane.xlu0 %255
  %v257 = vsel %vm250, %v246, -inf
  %258 = vmax.xlane.f32.xlu0 %v257
  %v259 = vpop.xlane.xlu0 %258
  %v260 = vmax.f32 %v247, %v253
  %v261 = vmax.f32 %v248, %v256
  %v262 = vmax.f32 %v249, %v259
  %v263 = vsub.f32 %v247, %v260
  %v264 = vsub.f32 %v248, %v261
  %v265 = vsub.f32 %v249, %v262
  %v266 = vmul.f32 %v263, 1.442695
  %v267 = vpow.pop %v266
  %v268 = vmul.f32 %v264, 1.442695
  %v269 = vpow.pop %v268
  %v270 = vmul.f32 %v265, 1.442695
  %v271 = vpow.pop %v270
  %273 = vset.pattern.permute.xlu0 0
  %274 = vperm.xlu0 %273, %v260
  %v275 = vpop.permute.xlu0 %274
  %278 = vset.pattern.permute.xlu0 0
  %279 = vperm.xlu0 %278, %v261
  %v280 = vpop.permute.xlu0 %279
  %283 = vset.pattern.permute.xlu0 0
  %284 = vperm.xlu0 %283, %v262
  %v285 = vpop.permute.xlu0 %284
  %v287 = vsub.f32 %v244, %v275
  %v288 = vsub.f32 %v245, %v280
  %v289 = vsub.f32 %v246, %v285
  %v290 = vmul.f32 %v287, 1.442695
  %v291 = vpow.pop %v290
  %v292 = vmul.f32 %v288, 1.442695
  %v293 = vpow.pop %v292
  %v294 = vmul.f32 %v289, 1.442695
  %v295 = vpow.pop %v294
  %v296 = vld [vmem:[#allocation4] sm:$0xff]
  %v297 = vld [vmem:[#allocation4 + $0x8] sm:$0xff]
  %v298 = vld [vmem:[#allocation4 + $0x10] sm:$0xff]
  %300 = vset.pattern.permute.xlu0 0
  %301 = vperm.xlu0 %300, %v267
  %v302 = vpop.permute.xlu0 %301
  %305 = vset.pattern.permute.xlu0 0
  %306 = vperm.xlu0 %305, %v269
  %v307 = vpop.permute.xlu0 %306
  %310 = vset.pattern.permute.xlu0 0
  %311 = vperm.xlu0 %310, %v271
  %v312 = vpop.permute.xlu0 %311
  %v314 = vmul.f32 %v302, %v296
  %v315 = vmul.f32 %v307, %v297
  %v316 = vmul.f32 %v312, %v298
  %v317 = vld [vmem:[%s2] sm:$0xff]
  %v318 = vld [vmem:[%s2 + $0x8] sm:$0xff]
  %v319 = vld [vmem:[%s2 + $0x10] sm:$0xff]
  %v321 = vsel %vm250, %v291, 0
  %v324 = vsel %vm250, %v293, 0
  %v327 = vsel %vm250, %v295, 0
  %329 = vmatprep.subr.mxu0 0.0
  %330 = vmatpush1.msra.mxu0 %v317
  %331 = vmatprep.subr.mxu0 0.0
  %332 = vmatpush1.msra.mxu0 %v318
  %333 = vmatprep.subr.mxu0 0.0
  %334 = vmatpush1.msra.mxu0 %v319
  %335 = vmatprep.subr.mxu0 0.0
  %336 = vmatpush1.msra.mxu0 0.0
  %337 = vmatprep.subr.mxu0 0.0
  %338 = vmatpush1.msra.mxu0 0.0
  %339 = vmatprep.subr.mxu0 0.0
  %340 = vmatpush1.msra.mxu0 0.0
  %341 = vmatprep.subr.mxu0 0.0
  %342 = vmatpush1.msra.mxu0 0.0
  %343 = vmatprep.subr.mxu0 0.0
  %344 = vmatpush1.msra.mxu0 0.0
  %345 = vmatprep.subr.mxu0 0.0
  %346 = vmatpush1.msra.mxu0 0.0
  %347 = vmatprep.subr.mxu0 0.0
  %348 = vmatpush1.msra.mxu0 0.0
  %349 = vmatprep.subr.mxu0 0.0
  %350 = vmatpush1.msra.mxu0 0.0
  %351 = vmatprep.subr.mxu0 0.0
  %352 = vmatpush1.msra.mxu0 0.0
  %353 = vmatprep.subr.mxu0 0.0
  %354 = vmatpush1.msra.mxu0 0.0
  %355 = vmatprep.subr.mxu0 0.0
  %356 = vmatpush1.msra.mxu0 0.0
  %357 = vmatprep.subr.mxu0 0.0
  %358 = vmatpush1.msra.mxu0 0.0
  %359 = vmatprep.subr.mxu0 0.0
  %360 = vmatpush1.msra.mxu0 0.0
  %361 = vmatprep.subr.mxu0 0.0
  %362 = vmatpush1.msra.mxu0 0.0
  %363 = vmatprep.subr.mxu0 0.0
  %364 = vmatpush1.msra.mxu0 0.0
  %365 = vmatprep.subr.mxu0 0.0
  %366 = vmatpush1.msra.mxu0 0.0
  %367 = vmatprep.subr.mxu0 0.0
  %368 = vmatpush1.msra.mxu0 0.0
  %369 = vmatprep.subr.mxu0 0.0
  %370 = vmatpush1.msra.mxu0 0.0
  %371 = vmatprep.subr.mxu0 0.0
  %372 = vmatpush1.msra.mxu0 0.0
  %373 = vmatprep.subr.mxu0 0.0
  %374 = vmatpush1.msra.mxu0 0.0
  %375 = vmatprep.subr.mxu0 0.0
  %376 = vmatpush1.msra.mxu0 0.0
  %377 = vmatprep.subr.mxu0 0.0
  %378 = vmatpush1.msra.mxu0 0.0
  %379 = vmatprep.subr.mxu0 0.0
  %380 = vmatpush1.msra.mxu0 0.0
  %381 = vmatprep.subr.mxu0 0.0
  %382 = vmatpush1.msra.mxu0 0.0
  %383 = vmatprep.subr.mxu0 0.0
  %384 = vmatpush1.msra.mxu0 0.0
  %385 = vmatprep.subr.mxu0 0.0
  %386 = vmatpush1.msra.mxu0 0.0
  %387 = vmatprep.subr.mxu0 0.0
  %388 = vmatpush1.msra.mxu0 0.0
  %389 = vmatprep.subr.mxu0 0.0
  %390 = vmatpush1.msra.mxu0 0.0
  %391 = vmatprep.subr.mxu0 0.0
  %392 = vmatpush1.msra.mxu0 0.0
  %393 = vmatprep.mubr.f32.mxu0 0.0
  %394 = vmatmul.mubr.f32.gmra.mrb[0].mxu0 %v321
  %v395 = vpop.f32.mrb[0].mxu0
  %v396 = vadd.f32 0.0, %v395
  %v397 = vpop.f32.mrb[0].mxu0
  %398 = vmatprep.mubr.f32.mxu0 0.0
  %399 = vmatmul.mubr.f32.gmra.mrb[0].mxu0 %v324
  %v400 = vpop.f32.mrb[0].mxu0
  %v401 = vadd.f32 0.0, %v400
  %v402 = vpop.f32.mrb[0].mxu0
  %403 = vmatprep.mubr.f32.mxu0 0.0
  %404 = vmatmul.mubr.f32.gmra.mrb[0].mxu0 %v327
  %v405 = vpop.f32.mrb[0].mxu0
  %v406 = vadd.f32 0.0, %v405
  %v407 = vpop.f32.mrb[0].mxu0
  %408 = vdwg.mxu0
  %v409 = vadd.f32 %v314, %v396
  %v410 = vadd.f32 %v315, %v401
  %v411 = vadd.f32 %v316, %v406
  %vm412 = vcmask 56320
  %413 = vst.msk [vmem:[#allocation4] sm:$0xff] %vm412, %v409
  %414 = vst.msk [vmem:[#allocation4 + $0x8] sm:$0xff] %vm412, %v410
  %415 = vst.msk [vmem:[#allocation4 + $0x10] sm:$0xff] %vm412, %v411
  %vm416 = vcmask 7168
  %417 = vst.msk [vmem:[#allocation3] sm:$0xff] %vm416, %v260
  %418 = vst.msk [vmem:[#allocation3 + $0x8] sm:$0xff] %vm416, %v261
  %419 = vst.msk [vmem:[#allocation3 + $0x10] sm:$0xff] %vm416, %v262
  // Predicated region
  $region26: #{pinn_forward.5} parent=0 // pred_check
    %p420 = pneg %p23
  $region27: #{pinn_forward.5} parent=0 // pred_check_branch
    %422 = sbr.rel (%p420) target = $region29
  $region28: #{pinn_forward.5} parent=0 // pred_region
    %v423 = vld [vmem:[#allocation4] sm:$0xff]
    %v424 = vld [vmem:[#allocation4 + $0x8] sm:$0xff]
    %v425 = vld [vmem:[#allocation4 + $0x10] sm:$0xff]
    %427 = vset.pattern.permute.xlu0 6
    %428 = vperm.xlu0 %427, %v423
    %v429 = vpop.permute.xlu0 %428
    %432 = vset.pattern.permute.xlu0 6
    %433 = vperm.xlu0 %432, %v424
    %v434 = vpop.permute.xlu0 %433
    %437 = vset.pattern.permute.xlu0 6
    %438 = vperm.xlu0 %437, %v425
    %v439 = vpop.permute.xlu0 %438
    %v441 = vrcp.pop %v429
    %v442 = vmul.f32 %v423, %v441
    %v443 = vrcp.pop %v434
    %v444 = vmul.f32 %v424, %v443
    %v445 = vrcp.pop %v439
    %v446 = vmul.f32 %v425, %v445
    %v447 = vld [vmem:[%s4 + $0x10] sm:$0x3f]
    %v448 = vld [vmem:[%s4 + $0x18] sm:$0x1]
    %v449 = vlaneseq
    %v450 = vshrl.u32 %v449, 7
    %v451 = vsub.s32 0, %v450
    %v452 = vrot.slane %v448, %v451
    %v454 = vsel %vm142, %v442, 0
    %v457 = vsel %vm142, %v444, 0
    %v460 = vsel %vm142, %v446, 0
    %v463 = vsel %vm152, %v447, 0
    %465 = vmatprep.subr.mxu0 0.0
    %466 = vmatpush1.msra.mxu0 %v463
    %467 = vmatprep.subr.mxu0 0.0
    %468 = vmatpush1.msra.mxu0 0.0
    %469 = vmatprep.subr.mxu0 0.0
    %470 = vmatpush1.msra.mxu0 0.0
    %471 = vmatprep.subr.mxu0 0.0
    %472 = vmatpush1.msra.mxu0 0.0
    %473 = vmatprep.subr.mxu0 0.0
    %474 = vmatpush1.msra.mxu0 0.0
    %475 = vmatprep.subr.mxu0 0.0
    %476 = vmatpush1.msra.mxu0 0.0
    %477 = vmatprep.subr.mxu0 0.0
    %478 = vmatpush1.msra.mxu0 0.0
    %479 = vmatprep.subr.mxu0 0.0
    %480 = vmatpush1.msra.mxu0 0.0
    %481 = vmatprep.subr.mxu0 0.0
    %482 = vmatpush1.msra.mxu0 0.0
    %483 = vmatprep.subr.mxu0 0.0
    %484 = vmatpush1.msra.mxu0 0.0
    %485 = vmatprep.subr.mxu0 0.0
    %486 = vmatpush1.msra.mxu0 0.0
    %487 = vmatprep.subr.mxu0 0.0
    %488 = vmatpush1.msra.mxu0 0.0
    %489 = vmatprep.subr.mxu0 0.0
    %490 = vmatpush1.msra.mxu0 0.0
    %491 = vmatprep.subr.mxu0 0.0
    %492 = vmatpush1.msra.mxu0 0.0
    %493 = vmatprep.subr.mxu0 0.0
    %494 = vmatpush1.msra.mxu0 0.0
    %495 = vmatprep.subr.mxu0 0.0
    %496 = vmatpush1.msra.mxu0 0.0
    %497 = vmatprep.subr.mxu0 0.0
    %498 = vmatpush1.msra.mxu0 0.0
    %499 = vmatprep.subr.mxu0 0.0
    %500 = vmatpush1.msra.mxu0 0.0
    %501 = vmatprep.subr.mxu0 0.0
    %502 = vmatpush1.msra.mxu0 0.0
    %503 = vmatprep.subr.mxu0 0.0
    %504 = vmatpush1.msra.mxu0 0.0
    %505 = vmatprep.subr.mxu0 0.0
    %506 = vmatpush1.msra.mxu0 0.0
    %507 = vmatprep.subr.mxu0 0.0
    %508 = vmatpush1.msra.mxu0 0.0
    %509 = vmatprep.subr.mxu0 0.0
    %510 = vmatpush1.msra.mxu0 0.0
    %511 = vmatprep.subr.mxu0 0.0
    %512 = vmatpush1.msra.mxu0 0.0
    %513 = vmatprep.subr.mxu0 0.0
    %514 = vmatpush1.msra.mxu0 0.0
    %515 = vmatprep.subr.mxu0 0.0
    %516 = vmatpush1.msra.mxu0 0.0
    %517 = vmatprep.subr.mxu0 0.0
    %518 = vmatpush1.msra.mxu0 0.0
    %519 = vmatprep.subr.mxu0 0.0
    %520 = vmatpush1.msra.mxu0 0.0
    %521 = vmatprep.subr.mxu0 0.0
    %522 = vmatpush1.msra.mxu0 0.0
    %523 = vmatprep.subr.mxu0 0.0
    %524 = vmatpush1.msra.mxu0 0.0
    %525 = vmatprep.subr.mxu0 0.0
    %526 = vmatpush1.msra.mxu0 0.0
    %527 = vmatprep.subr.mxu0 0.0
    %528 = vmatpush1.msra.mxu0 0.0
    %529 = vmatprep.mubr.f32.mxu0 0.0
    %530 = vmatmul.mubr.f32.gmra.mrb[0].mxu0 %v454
    %v531 = vpop.f32.mrb[0].mxu0
    %v532 = vadd.f32 %v452, %v531
    %v533 = vpop.f32.mrb[0].mxu0
    %534 = vmatprep.mubr.f32.mxu0 0.0
    %535 = vmatmul.mubr.f32.gmra.mrb[0].mxu0 %v457
    %v536 = vpop.f32.mrb[0].mxu0
    %v537 = vadd.f32 %v452, %v536
    %v538 = vpop.f32.mrb[0].mxu0
    %539 = vmatprep.mubr.f32.mxu0 0.0
    %540 = vmatmul.mubr.f32.gmra.mrb[0].mxu0 %v460
    %v541 = vpop.f32.mrb[0].mxu0
    %v542 = vadd.f32 %v452, %v541
    %v543 = vpop.f32.mrb[0].mxu0
    %544 = vdwg.mxu0
    %v545 = vadd.f32 %v532, %v20
    %v546 = vadd.f32 %v537, %v21
    %v547 = vadd.f32 %v542, %v22
    %v548 = vsel %vm142, %v545, 0.0
    %549 = vadd.xlane.f32.xlu0 %v548
    %v550 = vpop.xlane.xlu0 %549
    %v551 = vsel %vm142, %v546, 0.0
    %552 = vadd.xlane.f32.xlu0 %v551
    %v553 = vpop.xlane.xlu0 %552
    %v554 = vsel %vm142, %v547, 0.0
    %555 = vadd.xlane.f32.xlu0 %v554
    %v556 = vpop.xlane.xlu0 %555
    %v557 = vrcp.pop 6.0
    %v558 = vmul.f32 %v550, %v557
    %v559 = vmul.f32 %v553, %v557
    %v560 = vmul.f32 %v556, %v557
    %v561 = vsub.f32 %v545, %v558
    %v562 = vsub.f32 %v546, %v559
    %v563 = vsub.f32 %v547, %v560
    %v564 = vmul.f32 %v561, %v561
    %v565 = vmul.f32 %v562, %v562
    %v566 = vmul.f32 %v563, %v563
    %v567 = vsel %vm142, %v564, 0.0
    %568 = vadd.xlane.f32.xlu0 %v567
    %v569 = vpop.xlane.xlu0 %568
    %v570 = vsel %vm142, %v565, 0.0
    %571 = vadd.xlane.f32.xlu0 %v570
    %v572 = vpop.xlane.xlu0 %571
    %v573 = vsel %vm142, %v566, 0.0
    %574 = vadd.xlane.f32.xlu0 %v573
    %v575 = vpop.xlane.xlu0 %574
    %v576 = vmul.f32 %v569, %v557
    %v577 = vmul.f32 %v572, %v557
    %v578 = vmul.f32 %v575, %v557
    %v579 = vadd.f32 %v576, 1e-05
    %v580 = vadd.f32 %v577, 1e-05
    %v581 = vadd.f32 %v578, 1e-05
    %v582 = vrsqrt.pop %v579
    %v583 = vrsqrt.pop %v580
    %v584 = vrsqrt.pop %v581
    %v585 = vmul.f32 %v561, %v582
    %v586 = vmul.f32 %v562, %v583
    %v587 = vmul.f32 %v563, %v584
    %v588 = vld [vmem:[%s4 + $0x20] sm:$0x1]
    %v589 = vlaneseq
    %v590 = vshrl.u32 %v589, 7
    %v591 = vsub.s32 0, %v590
    %v592 = vrot.slane %v588, %v591
    %v593 = vmul.f32 %v585, %v592
    %v594 = vmul.f32 %v586, %v592
    %v595 = vmul.f32 %v587, %v592
    %v596 = vld [vmem:[%s4 + $0x28] sm:$0x1]
    %v597 = vlaneseq
    %v598 = vshrl.u32 %v597, 7
    %v599 = vsub.s32 0, %v598
    %v600 = vrot.slane %v596, %v599
    %v601 = vadd.f32 %v593, %v600
    %v602 = vadd.f32 %v594, %v600
    %v603 = vadd.f32 %v595, %v600
    %v604 = vld [vmem:[%s4 + $0x30] sm:$0x3f]
    %v605 = vld [vmem:[%s4 + $0x38] sm:$0x1]
    %v606 = vlaneseq
    %v607 = vshrl.u32 %v606, 7
    %v608 = vsub.s32 0, %v607
    %v609 = vrot.slane %v605, %v608
    %v611 = vsel %vm142, %v601, 0
    %v614 = vsel %vm142, %v602, 0
    %v617 = vsel %vm142, %v603, 0
    %v620 = vsel %vm152, %v604, 0
    %622 = vmatprep.subr.mxu0 0.0
    %623 = vmatpush1.msra.mxu0 %v620
    %624 = vmatprep.subr.mxu0 0.0
    %625 = vmatpush1.msra.mxu0 0.0
    %626 = vmatprep.subr.mxu0 0.0
    %627 = vmatpush1.msra.mxu0 0.0
    %628 = vmatprep.subr.mxu0 0.0
    %629 = vmatpush1.msra.mxu0 0.0
    %630 = vmatprep.subr.mxu0 0.0
    %631 = vmatpush1.msra.mxu0 0.0
    %632 = vmatprep.subr.mxu0 0.0
    %633 = vmatpush1.msra.mxu0 0.0
    %634 = vmatprep.subr.mxu0 0.0
    %635 = vmatpush1.msra.mxu0 0.0
    %636 = vmatprep.subr.mxu0 0.0
    %637 = vmatpush1.msra.mxu0 0.0
    %638 = vmatprep.subr.mxu0 0.0
    %639 = vmatpush1.msra.mxu0 0.0
    %640 = vmatprep.subr.mxu0 0.0
    %641 = vmatpush1.msra.mxu0 0.0
    %642 = vmatprep.subr.mxu0 0.0
    %643 = vmatpush1.msra.mxu0 0.0
    %644 = vmatprep.subr.mxu0 0.0
    %645 = vmatpush1.msra.mxu0 0.0
    %646 = vmatprep.subr.mxu0 0.0
    %647 = vmatpush1.msra.mxu0 0.0
    %648 = vmatprep.subr.mxu0 0.0
    %649 = vmatpush1.msra.mxu0 0.0
    %650 = vmatprep.subr.mxu0 0.0
    %651 = vmatpush1.msra.mxu0 0.0
    %652 = vmatprep.subr.mxu0 0.0
    %653 = vmatpush1.msra.mxu0 0.0
    %654 = vmatprep.subr.mxu0 0.0
    %655 = vmatpush1.msra.mxu0 0.0
    %656 = vmatprep.subr.mxu0 0.0
    %657 = vmatpush1.msra.mxu0 0.0
    %658 = vmatprep.subr.mxu0 0.0
    %659 = vmatpush1.msra.mxu0 0.0
    %660 = vmatprep.subr.mxu0 0.0
    %661 = vmatpush1.msra.mxu0 0.0
    %662 = vmatprep.subr.mxu0 0.0
    %663 = vmatpush1.msra.mxu0 0.0
    %664 = vmatprep.subr.mxu0 0.0
    %665 = vmatpush1.msra.mxu0 0.0
    %666 = vmatprep.subr.mxu0 0.0
    %667 = vmatpush1.msra.mxu0 0.0
    %668 = vmatprep.subr.mxu0 0.0
    %669 = vmatpush1.msra.mxu0 0.0
    %670 = vmatprep.subr.mxu0 0.0
    %671 = vmatpush1.msra.mxu0 0.0
    %672 = vmatprep.subr.mxu0 0.0
    %673 = vmatpush1.msra.mxu0 0.0
    %674 = vmatprep.subr.mxu0 0.0
    %675 = vmatpush1.msra.mxu0 0.0
    %676 = vmatprep.subr.mxu0 0.0
    %677 = vmatpush1.msra.mxu0 0.0
    %678 = vmatprep.subr.mxu0 0.0
    %679 = vmatpush1.msra.mxu0 0.0
    %680 = vmatprep.subr.mxu0 0.0
    %681 = vmatpush1.msra.mxu0 0.0
    %682 = vmatprep.subr.mxu0 0.0
    %683 = vmatpush1.msra.mxu0 0.0
    %684 = vmatprep.subr.mxu0 0.0
    %685 = vmatpush1.msra.mxu0 0.0
    %686 = vmatprep.mubr.f32.mxu0 0.0
    %687 = vmatmul.mubr.f32.gmra.mrb[0].mxu0 %v611
    %v688 = vpop.f32.mrb[0].mxu0
    %v689 = vadd.f32 %v609, %v688
    %v690 = vpop.f32.mrb[0].mxu0
    %691 = vmatprep.mubr.f32.mxu0 0.0
    %692 = vmatmul.mubr.f32.gmra.mrb[0].mxu0 %v614
    %v693 = vpop.f32.mrb[0].mxu0
    %v694 = vadd.f32 %v609, %v693
    %v695 = vpop.f32.mrb[0].mxu0
    %696 = vmatprep.mubr.f32.mxu0 0.0
    %697 = vmatmul.mubr.f32.gmra.mrb[0].mxu0 %v617
    %v698 = vpop.f32.mrb[0].mxu0
    %v699 = vadd.f32 %v609, %v698
    %v700 = vpop.f32.mrb[0].mxu0
    %701 = vdwg.mxu0
    %v702 = vadd.f32 %v689, %v601
    %v703 = vadd.f32 %v694, %v602
    %v704 = vadd.f32 %v699, %v603
    %v705 = vmax.f32 %v702, 0.0
    %v706 = vmax.f32 %v703, 0.0
    %v707 = vmax.f32 %v704, 0.0
    %v708 = vld [vmem:[%s4 + $0x40] sm:$0x3f]
    %v709 = vld [vmem:[%s4 + $0x48] sm:$0x1]
    %v710 = vlaneseq
    %v711 = vshrl.u32 %v710, 7
    %v712 = vsub.s32 0, %v711
    %v713 = vrot.slane %v709, %v712
    %v715 = vsel %vm142, %v705, 0
    %v718 = vsel %vm142, %v706, 0
    %v721 = vsel %vm142, %v707, 0
    %v724 = vsel %vm152, %v708, 0
    %726 = vmatprep.subr.mxu0 0.0
    %727 = vmatpush1.msra.mxu0 %v724
    %728 = vmatprep.subr.mxu0 0.0
    %729 = vmatpush1.msra.mxu0 0.0
    %730 = vmatprep.subr.mxu0 0.0
    %731 = vmatpush1.msra.mxu0 0.0
    %732 = vmatprep.subr.mxu0 0.0
    %733 = vmatpush1.msra.mxu0 0.0
    %734 = vmatprep.subr.mxu0 0.0
    %735 = vmatpush1.msra.mxu0 0.0
    %736 = vmatprep.subr.mxu0 0.0
    %737 = vmatpush1.msra.mxu0 0.0
    %738 = vmatprep.subr.mxu0 0.0
    %739 = vmatpush1.msra.mxu0 0.0
    %740 = vmatprep.subr.mxu0 0.0
    %741 = vmatpush1.msra.mxu0 0.0
    %742 = vmatprep.subr.mxu0 0.0
    %743 = vmatpush1.msra.mxu0 0.0
    %744 = vmatprep.subr.mxu0 0.0
    %745 = vmatpush1.msra.mxu0 0.0
    %746 = vmatprep.subr.mxu0 0.0
    %747 = vmatpush1.msra.mxu0 0.0
    %748 = vmatprep.subr.mxu0 0.0
    %749 = vmatpush1.msra.mxu0 0.0
    %750 = vmatprep.subr.mxu0 0.0
    %751 = vmatpush1.msra.mxu0 0.0
    %752 = vmatprep.subr.mxu0 0.0
    %753 = vmatpush1.msra.mxu0 0.0
    %754 = vmatprep.subr.mxu0 0.0
    %755 = vmatpush1.msra.mxu0 0.0
    %756 = vmatprep.subr.mxu0 0.0
    %757 = vmatpush1.msra.mxu0 0.0
    %758 = vmatprep.subr.mxu0 0.0
    %759 = vmatpush1.msra.mxu0 0.0
    %760 = vmatprep.subr.mxu0 0.0
    %761 = vmatpush1.msra.mxu0 0.0
    %762 = vmatprep.subr.mxu0 0.0
    %763 = vmatpush1.msra.mxu0 0.0
    %764 = vmatprep.subr.mxu0 0.0
    %765 = vmatpush1.msra.mxu0 0.0
    %766 = vmatprep.subr.mxu0 0.0
    %767 = vmatpush1.msra.mxu0 0.0
    %768 = vmatprep.subr.mxu0 0.0
    %769 = vmatpush1.msra.mxu0 0.0
    %770 = vmatprep.subr.mxu0 0.0
    %771 = vmatpush1.msra.mxu0 0.0
    %772 = vmatprep.subr.mxu0 0.0
    %773 = vmatpush1.msra.mxu0 0.0
    %774 = vmatprep.subr.mxu0 0.0
    %775 = vmatpush1.msra.mxu0 0.0
    %776 = vmatprep.subr.mxu0 0.0
    %777 = vmatpush1.msra.mxu0 0.0
    %778 = vmatprep.subr.mxu0 0.0
    %779 = vmatpush1.msra.mxu0 0.0
    %780 = vmatprep.subr.mxu0 0.0
    %781 = vmatpush1.msra.mxu0 0.0
    %782 = vmatprep.subr.mxu0 0.0
    %783 = vmatpush1.msra.mxu0 0.0
    %784 = vmatprep.subr.mxu0 0.0
    %785 = vmatpush1.msra.mxu0 0.0
    %786 = vmatprep.subr.mxu0 0.0
    %787 = vmatpush1.msra.mxu0 0.0
    %788 = vmatprep.subr.mxu0 0.0
    %789 = vmatpush1.msra.mxu0 0.0
    %790 = vmatprep.mubr.f32.mxu0 0.0
    %791 = vmatmul.mubr.f32.gmra.mrb[0].mxu0 %v715
    %v792 = vpop.f32.mrb[0].mxu0
    %v793 = vadd.f32 %v713, %v792
    %v794 = vpop.f32.mrb[0].mxu0
    %795 = vmatprep.mubr.f32.mxu0 0.0
    %796 = vmatmul.mubr.f32.gmra.mrb[0].mxu0 %v718
    %v797 = vpop.f32.mrb[0].mxu0
    %v798 = vadd.f32 %v713, %v797
    %v799 = vpop.f32.mrb[0].mxu0
    %800 = vmatprep.mubr.f32.mxu0 0.0
    %801 = vmatmul.mubr.f32.gmra.mrb[0].mxu0 %v721
    %v802 = vpop.f32.mrb[0].mxu0
    %v803 = vadd.f32 %v713, %v802
    %v804 = vpop.f32.mrb[0].mxu0
    %805 = vdwg.mxu0
    %v806 = vld [vmem:[%s4 + $0x50] sm:$0x1f]
    %v807 = vld [vmem:[%s4 + $0x58] sm:$0xff]
    %v808 = vld [vmem:[%s4 + $0x60] sm:$0x3]
    %v809 = vld [vmem:[%s4 + $0x68] sm:$0xff]
    %v810 = vld [vmem:[%s4 + $0x70] sm:$0x3]
    %v811 = vld [vmem:[%s4 + $0x78] sm:$0xff]
    %v812 = vld [vmem:[%s4 + $0x80] sm:$0x3]
    %v813 = vld [vmem:[%s4 + $0x88] sm:$0xff]
    %v814 = vld [vmem:[%s4 + $0x90] sm:$0x3]
    %v815 = vld [vmem:[%s4 + $0x98] sm:$0xff]
    %v816 = vld [vmem:[%s4 + $0xa0] sm:$0x3]
    %v817 = vld [vmem:[%s4 + $0xa8] sm:$0x1]
    %v818 = vld [vmem:[%s4 + $0xb0] sm:$0x1]
    %v819 = vld [vmem:[%s4 + $0xb8] sm:$0x1]
    %v820 = vld [vmem:[%s4 + $0xc0] sm:$0x1]
    %v821 = vld [vmem:[%s4 + $0xc8] sm:$0x1]
    %v822 = vld [vmem:[%s4 + $0xd0] sm:$0x1]
    %v823 = vld [vmem:[%s4 + $0xd8] sm:$0x1]
    %v824 = vld [vmem:[%s3] sm:$0xff]
    %v825 = vld [vmem:[%s3 + $0x8] sm:$0xff]
    %v826 = vld [vmem:[%s3 + $0x10] sm:$0xff]
    %830 = vrot.lane.b32.xlu0 %v824, 4
    %v831 = vpop.permute.xlu0 %830
    %832 = vrot.lane.b32.xlu0 %v825, 4
    %v833 = vpop.permute.xlu0 %832
    %834 = vrot.lane.b32.xlu0 %v826, 4
    %v835 = vpop.permute.xlu0 %834
    %vm839 = vcmask 31744
    %v840 = vsel %vm839, %v793, %v831
    %v841 = vsel %vm839, %v798, %v833
    %v842 = vsel %vm839, %v803, %v835
    %v843 = vlaneseq
    %v844 = vshrl.u32 %v843, 7
    %v845 = vsub.s32 0, %v844
    %v846 = vrot.slane %v817, %v845
    %vm847 = vcmask 39936
    %v849 = vsel %vm847, %v840, 0
    %v852 = vsel %vm847, %v841, 0
    %v855 = vsel %vm847, %v842, 0
    %vm857 = vcmask 1044480
    %v859 = vsel %vm857, %v806, 0
    %861 = vmatprep.subr.mxu0 0.0
    %862 = vmatpush1.msra.mxu0 %v859
    %863 = vmatprep.subr.mxu0 0.0
    %864 = vmatpush1.msra.mxu0 0.0
    %865 = vmatprep.subr.mxu0 0.0
    %866 = vmatpush1.msra.mxu0 0.0
    %867 = vmatprep.subr.mxu0 0.0
    %868 = vmatpush1.msra.mxu0 0.0
    %869 = vmatprep.subr.mxu0 0.0
    %870 = vmatpush1.msra.mxu0 0.0
    %871 = vmatprep.subr.mxu0 0.0
    %872 = vmatpush1.msra.mxu0 0.0
    %873 = vmatprep.subr.mxu0 0.0
    %874 = vmatpush1.msra.mxu0 0.0
    %875 = vmatprep.subr.mxu0 0.0
    %876 = vmatpush1.msra.mxu0 0.0
    %877 = vmatprep.subr.mxu0 0.0
    %878 = vmatpush1.msra.mxu0 0.0
    %879 = vmatprep.subr.mxu0 0.0
    %880 = vmatpush1.msra.mxu0 0.0
    %881 = vmatprep.subr.mxu0 0.0
    %882 = vmatpush1.msra.mxu0 0.0
    %883 = vmatprep.subr.mxu0 0.0
    %884 = vmatpush1.msra.mxu0 0.0
    %885 = vmatprep.subr.mxu0 0.0
    %886 = vmatpush1.msra.mxu0 0.0
    %887 = vmatprep.subr.mxu0 0.0
    %888 = vmatpush1.msra.mxu0 0.0
    %889 = vmatprep.subr.mxu0 0.0
    %890 = vmatpush1.msra.mxu0 0.0
    %891 = vmatprep.subr.mxu0 0.0
    %892 = vmatpush1.msra.mxu0 0.0
    %893 = vmatprep.subr.mxu0 0.0
    %894 = vmatpush1.msra.mxu0 0.0
    %895 = vmatprep.subr.mxu0 0.0
    %896 = vmatpush1.msra.mxu0 0.0
    %897 = vmatprep.subr.mxu0 0.0
    %898 = vmatpush1.msra.mxu0 0.0
    %899 = vmatprep.subr.mxu0 0.0
    %900 = vmatpush1.msra.mxu0 0.0
    %901 = vmatprep.subr.mxu0 0.0
    %902 = vmatpush1.msra.mxu0 0.0
    %903 = vmatprep.subr.mxu0 0.0
    %904 = vmatpush1.msra.mxu0 0.0
    %905 = vmatprep.subr.mxu0 0.0
    %906 = vmatpush1.msra.mxu0 0.0
    %907 = vmatprep.subr.mxu0 0.0
    %908 = vmatpush1.msra.mxu0 0.0
    %909 = vmatprep.subr.mxu0 0.0
    %910 = vmatpush1.msra.mxu0 0.0
    %911 = vmatprep.subr.mxu0 0.0
    %912 = vmatpush1.msra.mxu0 0.0
    %913 = vmatprep.subr.mxu0 0.0
    %914 = vmatpush1.msra.mxu0 0.0
    %915 = vmatprep.subr.mxu0 0.0
    %916 = vmatpush1.msra.mxu0 0.0
    %917 = vmatprep.subr.mxu0 0.0
    %918 = vmatpush1.msra.mxu0 0.0
    %919 = vmatprep.subr.mxu0 0.0
    %920 = vmatpush1.msra.mxu0 0.0
    %921 = vmatprep.subr.mxu0 0.0
    %922 = vmatpush1.msra.mxu0 0.0
    %923 = vmatprep.subr.mxu0 0.0
    %924 = vmatpush1.msra.mxu0 0.0
    %925 = vmatprep.mubr.f32.mxu0 0.0
    %926 = vmatmul.mubr.f32.gmra.mrb[0].mxu0 %v849
    %v927 = vpop.f32.mrb[0].mxu0
    %v928 = vadd.f32 %v846, %v927
    %v929 = vpop.f32.mrb[0].mxu0
    %930 = vmatprep.mubr.f32.mxu0 0.0
    %931 = vmatmul.mubr.f32.gmra.mrb[0].mxu0 %v852
    %v932 = vpop.f32.mrb[0].mxu0
    %v933 = vadd.f32 %v846, %v932
    %v934 = vpop.f32.mrb[0].mxu0
    %935 = vmatprep.mubr.f32.mxu0 0.0
    %936 = vmatmul.mubr.f32.gmra.mrb[0].mxu0 %v855
    %v937 = vpop.f32.mrb[0].mxu0
    %v938 = vadd.f32 %v846, %v937
    %v939 = vpop.f32.mrb[0].mxu0
    %940 = vdwg.mxu0
    %v941 = vtanh.pop %v928
    %v942 = vtanh.pop %v933
    %v943 = vtanh.pop %v938
    %v944 = vlaneseq
    %v945 = vshrl.u32 %v944, 7
    %v946 = vsub.s32 0, %v945
    %v947 = vrot.slane %v818, %v946
    %vm948 = vcmask 80896
    %v950 = vsel %vm948, %v941, 0
    %v953 = vsel %vm948, %v942, 0
    %v956 = vsel %vm948, %v943, 0
    %vm958 = vcmask 1041408
    %v960 = vsel %vm958, %v808, 0
    %962 = vmatprep.subr.mxu0 0.0
    %963 = vmatpush1.msra.mxu0 %v807
    %964 = vmatprep.subr.mxu0 0.0
    %965 = vmatpush1.msra.mxu0 %v960
    %966 = vmatprep.subr.mxu0 0.0
    %967 = vmatpush1.msra.mxu0 0.0
    %968 = vmatprep.subr.mxu0 0.0
    %969 = vmatpush1.msra.mxu0 0.0
    %970 = vmatprep.subr.mxu0 0.0
    %971 = vmatpush1.msra.mxu0 0.0
    %972 = vmatprep.subr.mxu0 0.0
    %973 = vmatpush1.msra.mxu0 0.0
    %974 = vmatprep.subr.mxu0 0.0
    %975 = vmatpush1.msra.mxu0 0.0
    %976 = vmatprep.subr.mxu0 0.0
    %977 = vmatpush1.msra.mxu0 0.0
    %978 = vmatprep.subr.mxu0 0.0
    %979 = vmatpush1.msra.mxu0 0.0
    %980 = vmatprep.subr.mxu0 0.0
    %981 = vmatpush1.msra.mxu0 0.0
    %982 = vmatprep.subr.mxu0 0.0
    %983 = vmatpush1.msra.mxu0 0.0
    %984 = vmatprep.subr.mxu0 0.0
    %985 = vmatpush1.msra.mxu0 0.0
    %986 = vmatprep.subr.mxu0 0.0
    %987 = vmatpush1.msra.mxu0 0.0
    %988 = vmatprep.subr.mxu0 0.0
    %989 = vmatpush1.msra.mxu0 0.0
    %990 = vmatprep.subr.mxu0 0.0
    %991 = vmatpush1.msra.mxu0 0.0
    %992 = vmatprep.subr.mxu0 0.0
    %993 = vmatpush1.msra.mxu0 0.0
    %994 = vmatprep.subr.mxu0 0.0
    %995 = vmatpush1.msra.mxu0 0.0
    %996 = vmatprep.subr.mxu0 0.0
    %997 = vmatpush1.msra.mxu0 0.0
    %998 = vmatprep.subr.mxu0 0.0
    %999 = vmatpush1.msra.mxu0 0.0
    %1000 = vmatprep.subr.mxu0 0.0
    %1001 = vmatpush1.msra.mxu0 0.0
    %1002 = vmatprep.subr.mxu0 0.0
    %1003 = vmatpush1.msra.mxu0 0.0
    %1004 = vmatprep.subr.mxu0 0.0
    %1005 = vmatpush1.msra.mxu0 0.0
    %1006 = vmatprep.subr.mxu0 0.0
    %1007 = vmatpush1.msra.mxu0 0.0
    %1008 = vmatprep.subr.mxu0 0.0
    %1009 = vmatpush1.msra.mxu0 0.0
    %1010 = vmatprep.subr.mxu0 0.0
    %1011 = vmatpush1.msra.mxu0 0.0
    %1012 = vmatprep.subr.mxu0 0.0
    %1013 = vmatpush1.msra.mxu0 0.0
    %1014 = vmatprep.subr.mxu0 0.0
    %1015 = vmatpush1.msra.mxu0 0.0
    %1016 = vmatprep.subr.mxu0 0.0
    %1017 = vmatpush1.msra.mxu0 0.0
    %1018 = vmatprep.subr.mxu0 0.0
    %1019 = vmatpush1.msra.mxu0 0.0
    %1020 = vmatprep.subr.mxu0 0.0
    %1021 = vmatpush1.msra.mxu0 0.0
    %1022 = vmatprep.subr.mxu0 0.0
    %1023 = vmatpush1.msra.mxu0 0.0
    %1024 = vmatprep.subr.mxu0 0.0
    %1025 = vmatpush1.msra.mxu0 0.0
    %1026 = vmatprep.mubr.f32.mxu0 0.0
    %1027 = vmatmul.mubr.f32.gmra.mrb[0].mxu0 %v950
    %v1028 = vpop.f32.mrb[0].mxu0
    %v1029 = vadd.f32 %v947, %v1028
    %v1030 = vpop.f32.mrb[0].mxu0
    %1031 = vmatprep.mubr.f32.mxu0 0.0
    %1032 = vmatmul.mubr.f32.gmra.mrb[0].mxu0 %v953
    %v1033 = vpop.f32.mrb[0].mxu0
    %v1034 = vadd.f32 %v947, %v1033
    %v1035 = vpop.f32.mrb[0].mxu0
    %1036 = vmatprep.mubr.f32.mxu0 0.0
    %1037 = vmatmul.mubr.f32.gmra.mrb[0].mxu0 %v956
    %v1038 = vpop.f32.mrb[0].mxu0
    %v1039 = vadd.f32 %v947, %v1038
    %v1040 = vpop.f32.mrb[0].mxu0
    %1041 = vdwg.mxu0
    %v1042 = vtanh.pop %v1029
    %v1043 = vtanh.pop %v1034
    %v1044 = vtanh.pop %v1039
    %v1045 = vlaneseq
    %v1046 = vshrl.u32 %v1045, 7
    %v1047 = vsub.s32 0, %v1046
    %v1048 = vrot.slane %v819, %v1047
    %v1050 = vsel %vm948, %v1042, 0
    %v1053 = vsel %vm948, %v1043, 0
    %v1056 = vsel %vm948, %v1044, 0
    %v1059 = vsel %vm958, %v810, 0
    %1061 = vmatprep.subr.mxu0 0.0
    %1062 = vmatpush1.msra.mxu0 %v809
    %1063 = vmatprep.subr.mxu0 0.0
    %1064 = vmatpush1.msra.mxu0 %v1059
    %1065 = vmatprep.subr.mxu0 0.0
    %1066 = vmatpush1.msra.mxu0 0.0
    %1067 = vmatprep.subr.mxu0 0.0
    %1068 = vmatpush1.msra.mxu0 0.0
    %1069 = vmatprep.subr.mxu0 0.0
    %1070 = vmatpush1.msra.mxu0 0.0
    %1071 = vmatprep.subr.mxu0 0.0
    %1072 = vmatpush1.msra.mxu0 0.0
    %1073 = vmatprep.subr.mxu0 0.0
    %1074 = vmatpush1.msra.mxu0 0.0
    %1075 = vmatprep.subr.mxu0 0.0
    %1076 = vmatpush1.msra.mxu0 0.0
    %1077 = vmatprep.subr.mxu0 0.0
    %1078 = vmatpush1.msra.mxu0 0.0
    %1079 = vmatprep.subr.mxu0 0.0
    %1080 = vmatpush1.msra.mxu0 0.0
    %1081 = vmatprep.subr.mxu0 0.0
    %1082 = vmatpush1.msra.mxu0 0.0
    %1083 = vmatprep.subr.mxu0 0.0
    %1084 = vmatpush1.msra.mxu0 0.0
    %1085 = vmatprep.subr.mxu0 0.0
    %1086 = vmatpush1.msra.mxu0 0.0
    %1087 = vmatprep.subr.mxu0 0.0
    %1088 = vmatpush1.msra.mxu0 0.0
    %1089 = vmatprep.subr.mxu0 0.0
    %1090 = vmatpush1.msra.mxu0 0.0
    %1091 = vmatprep.subr.mxu0 0.0
    %1092 = vmatpush1.msra.mxu0 0.0
    %1093 = vmatprep.subr.mxu0 0.0
    %1094 = vmatpush1.msra.mxu0 0.0
    %1095 = vmatprep.subr.mxu0 0.0
    %1096 = vmatpush1.msra.mxu0 0.0
    %1097 = vmatprep.subr.mxu0 0.0
    %1098 = vmatpush1.msra.mxu0 0.0
    %1099 = vmatprep.subr.mxu0 0.0
    %1100 = vmatpush1.msra.mxu0 0.0
    %1101 = vmatprep.subr.mxu0 0.0
    %1102 = vmatpush1.msra.mxu0 0.0
    %1103 = vmatprep.subr.mxu0 0.0
    %1104 = vmatpush1.msra.mxu0 0.0
    %1105 = vmatprep.subr.mxu0 0.0
    %1106 = vmatpush1.msra.mxu0 0.0
    %1107 = vmatprep.subr.mxu0 0.0
    %1108 = vmatpush1.msra.mxu0 0.0
    %1109 = vmatprep.subr.mxu0 0.0
    %1110 = vmatpush1.msra.mxu0 0.0
    %1111 = vmatprep.subr.mxu0 0.0
    %1112 = vmatpush1.msra.mxu0 0.0
    %1113 = vmatprep.subr.mxu0 0.0
    %1114 = vmatpush1.msra.mxu0 0.0
    %1115 = vmatprep.subr.mxu0 0.0
    %1116 = vmatpush1.msra.mxu0 0.0
    %1117 = vmatprep.subr.mxu0 0.0
    %1118 = vmatpush1.msra.mxu0 0.0
    %1119 = vmatprep.subr.mxu0 0.0
    %1120 = vmatpush1.msra.mxu0 0.0
    %1121 = vmatprep.subr.mxu0 0.0
    %1122 = vmatpush1.msra.mxu0 0.0
    %1123 = vmatprep.subr.mxu0 0.0
    %1124 = vmatpush1.msra.mxu0 0.0
    %1125 = vmatprep.mubr.f32.mxu0 0.0
    %1126 = vmatmul.mubr.f32.gmra.mrb[0].mxu0 %v1050
    %v1127 = vpop.f32.mrb[0].mxu0
    %v1128 = vadd.f32 %v1048, %v1127
    %v1129 = vpop.f32.mrb[0].mxu0
    %1130 = vmatprep.mubr.f32.mxu0 0.0
    %1131 = vmatmul.mubr.f32.gmra.mrb[0].mxu0 %v1053
    %v1132 = vpop.f32.mrb[0].mxu0
    %v1133 = vadd.f32 %v1048, %v1132
    %v1134 = vpop.f32.mrb[0].mxu0
    %1135 = vmatprep.mubr.f32.mxu0 0.0
    %1136 = vmatmul.mubr.f32.gmra.mrb[0].mxu0 %v1056
    %v1137 = vpop.f32.mrb[0].mxu0
    %v1138 = vadd.f32 %v1048, %v1137
    %v1139 = vpop.f32.mrb[0].mxu0
    %1140 = vdwg.mxu0
    %v1141 = vtanh.pop %v1128
    %v1142 = vtanh.pop %v1133
    %v1143 = vtanh.pop %v1138
    %v1144 = vlaneseq
    %v1145 = vshrl.u32 %v1144, 7
    %v1146 = vsub.s32 0, %v1145
    %v1147 = vrot.slane %v820, %v1146
    %v1149 = vsel %vm948, %v1141, 0
    %v1152 = vsel %vm948, %v1142, 0
    %v1155 = vsel %vm948, %v1143, 0
    %v1158 = vsel %vm958, %v812, 0
    %1160 = vmatprep.subr.mxu0 0.0
    %1161 = vmatpush1.msra.mxu0 %v811
    %1162 = vmatprep.subr.mxu0 0.0
    %1163 = vmatpush1.msra.mxu0 %v1158
    %1164 = vmatprep.subr.mxu0 0.0
    %1165 = vmatpush1.msra.mxu0 0.0
    %1166 = vmatprep.subr.mxu0 0.0
    %1167 = vmatpush1.msra.mxu0 0.0
    %1168 = vmatprep.subr.mxu0 0.0
    %1169 = vmatpush1.msra.mxu0 0.0
    %1170 = vmatprep.subr.mxu0 0.0
    %1171 = vmatpush1.msra.mxu0 0.0
    %1172 = vmatprep.subr.mxu0 0.0
    %1173 = vmatpush1.msra.mxu0 0.0
    %1174 = vmatprep.subr.mxu0 0.0
    %1175 = vmatpush1.msra.mxu0 0.0
    %1176 = vmatprep.subr.mxu0 0.0
    %1177 = vmatpush1.msra.mxu0 0.0
    %1178 = vmatprep.subr.mxu0 0.0
    %1179 = vmatpush1.msra.mxu0 0.0
    %1180 = vmatprep.subr.mxu0 0.0
    %1181 = vmatpush1.msra.mxu0 0.0
    %1182 = vmatprep.subr.mxu0 0.0
    %1183 = vmatpush1.msra.mxu0 0.0
    %1184 = vmatprep.subr.mxu0 0.0
    %1185 = vmatpush1.msra.mxu0 0.0
    %1186 = vmatprep.subr.mxu0 0.0
    %1187 = vmatpush1.msra.mxu0 0.0
    %1188 = vmatprep.subr.mxu0 0.0
    %1189 = vmatpush1.msra.mxu0 0.0
    %1190 = vmatprep.subr.mxu0 0.0
    %1191 = vmatpush1.msra.mxu0 0.0
    %1192 = vmatprep.subr.mxu0 0.0
    %1193 = vmatpush1.msra.mxu0 0.0
    %1194 = vmatprep.subr.mxu0 0.0
    %1195 = vmatpush1.msra.mxu0 0.0
    %1196 = vmatprep.subr.mxu0 0.0
    %1197 = vmatpush1.msra.mxu0 0.0
    %1198 = vmatprep.subr.mxu0 0.0
    %1199 = vmatpush1.msra.mxu0 0.0
    %1200 = vmatprep.subr.mxu0 0.0
    %1201 = vmatpush1.msra.mxu0 0.0
    %1202 = vmatprep.subr.mxu0 0.0
    %1203 = vmatpush1.msra.mxu0 0.0
    %1204 = vmatprep.subr.mxu0 0.0
    %1205 = vmatpush1.msra.mxu0 0.0
    %1206 = vmatprep.subr.mxu0 0.0
    %1207 = vmatpush1.msra.mxu0 0.0
    %1208 = vmatprep.subr.mxu0 0.0
    %1209 = vmatpush1.msra.mxu0 0.0
    %1210 = vmatprep.subr.mxu0 0.0
    %1211 = vmatpush1.msra.mxu0 0.0
    %1212 = vmatprep.subr.mxu0 0.0
    %1213 = vmatpush1.msra.mxu0 0.0
    %1214 = vmatprep.subr.mxu0 0.0
    %1215 = vmatpush1.msra.mxu0 0.0
    %1216 = vmatprep.subr.mxu0 0.0
    %1217 = vmatpush1.msra.mxu0 0.0
    %1218 = vmatprep.subr.mxu0 0.0
    %1219 = vmatpush1.msra.mxu0 0.0
    %1220 = vmatprep.subr.mxu0 0.0
    %1221 = vmatpush1.msra.mxu0 0.0
    %1222 = vmatprep.subr.mxu0 0.0
    %1223 = vmatpush1.msra.mxu0 0.0
    %1224 = vmatprep.mubr.f32.mxu0 0.0
    %1225 = vmatmul.mubr.f32.gmra.mrb[0].mxu0 %v1149
    %v1226 = vpop.f32.mrb[0].mxu0
    %v1227 = vadd.f32 %v1147, %v1226
    %v1228 = vpop.f32.mrb[0].mxu0
    %1229 = vmatprep.mubr.f32.mxu0 0.0
    %1230 = vmatmul.mubr.f32.gmra.mrb[0].mxu0 %v1152
    %v1231 = vpop.f32.mrb[0].mxu0
    %v1232 = vadd.f32 %v1147, %v1231
    %v1233 = vpop.f32.mrb[0].mxu0
    %1234 = vmatprep.mubr.f32.mxu0 0.0
    %1235 = vmatmul.mubr.f32.gmra.mrb[0].mxu0 %v1155
    %v1236 = vpop.f32.mrb[0].mxu0
    %v1237 = vadd.f32 %v1147, %v1236
    %v1238 = vpop.f32.mrb[0].mxu0
    %1239 = vdwg.mxu0
    %v1240 = vtanh.pop %v1227
    %v1241 = vtanh.pop %v1232
    %v1242 = vtanh.pop %v1237
    %v1243 = vlaneseq
    %v1244 = vshrl.u32 %v1243, 7
    %v1245 = vsub.s32 0, %v1244
    %v1246 = vrot.slane %v821, %v1245
    %v1248 = vsel %vm948, %v1240, 0
    %v1251 = vsel %vm948, %v1241, 0
    %v1254 = vsel %vm948, %v1242, 0
    %v1257 = vsel %vm958, %v814, 0
    %1259 = vmatprep.subr.mxu0 0.0
    %1260 = vmatpush1.msra.mxu0 %v813
    %1261 = vmatprep.subr.mxu0 0.0
    %1262 = vmatpush1.msra.mxu0 %v1257
    %1263 = vmatprep.subr.mxu0 0.0
    %1264 = vmatpush1.msra.mxu0 0.0
    %1265 = vmatprep.subr.mxu0 0.0
    %1266 = vmatpush1.msra.mxu0 0.0
    %1267 = vmatprep.subr.mxu0 0.0
    %1268 = vmatpush1.msra.mxu0 0.0
    %1269 = vmatprep.subr.mxu0 0.0
    %1270 = vmatpush1.msra.mxu0 0.0
    %1271 = vmatprep.subr.mxu0 0.0
    %1272 = vmatpush1.msra.mxu0 0.0
    %1273 = vmatprep.subr.mxu0 0.0
    %1274 = vmatpush1.msra.mxu0 0.0
    %1275 = vmatprep.subr.mxu0 0.0
    %1276 = vmatpush1.msra.mxu0 0.0
    %1277 = vmatprep.subr.mxu0 0.0
    %1278 = vmatpush1.msra.mxu0 0.0
    %1279 = vmatprep.subr.mxu0 0.0
    %1280 = vmatpush1.msra.mxu0 0.0
    %1281 = vmatprep.subr.mxu0 0.0
    %1282 = vmatpush1.msra.mxu0 0.0
    %1283 = vmatprep.subr.mxu0 0.0
    %1284 = vmatpush1.msra.mxu0 0.0
    %1285 = vmatprep.subr.mxu0 0.0
    %1286 = vmatpush1.msra.mxu0 0.0
    %1287 = vmatprep.subr.mxu0 0.0
    %1288 = vmatpush1.msra.mxu0 0.0
    %1289 = vmatprep.subr.mxu0 0.0
    %1290 = vmatpush1.msra.mxu0 0.0
    %1291 = vmatprep.subr.mxu0 0.0
    %1292 = vmatpush1.msra.mxu0 0.0
    %1293 = vmatprep.subr.mxu0 0.0
    %1294 = vmatpush1.msra.mxu0 0.0
    %1295 = vmatprep.subr.mxu0 0.0
    %1296 = vmatpush1.msra.mxu0 0.0
    %1297 = vmatprep.subr.mxu0 0.0
    %1298 = vmatpush1.msra.mxu0 0.0
    %1299 = vmatprep.subr.mxu0 0.0
    %1300 = vmatpush1.msra.mxu0 0.0
    %1301 = vmatprep.subr.mxu0 0.0
    %1302 = vmatpush1.msra.mxu0 0.0
    %1303 = vmatprep.subr.mxu0 0.0
    %1304 = vmatpush1.msra.mxu0 0.0
    %1305 = vmatprep.subr.mxu0 0.0
    %1306 = vmatpush1.msra.mxu0 0.0
    %1307 = vmatprep.subr.mxu0 0.0
    %1308 = vmatpush1.msra.mxu0 0.0
    %1309 = vmatprep.subr.mxu0 0.0
    %1310 = vmatpush1.msra.mxu0 0.0
    %1311 = vmatprep.subr.mxu0 0.0
    %1312 = vmatpush1.msra.mxu0 0.0
    %1313 = vmatprep.subr.mxu0 0.0
    %1314 = vmatpush1.msra.mxu0 0.0
    %1315 = vmatprep.subr.mxu0 0.0
    %1316 = vmatpush1.msra.mxu0 0.0
    %1317 = vmatprep.subr.mxu0 0.0
    %1318 = vmatpush1.msra.mxu0 0.0
    %1319 = vmatprep.subr.mxu0 0.0
    %1320 = vmatpush1.msra.mxu0 0.0
    %1321 = vmatprep.subr.mxu0 0.0
    %1322 = vmatpush1.msra.mxu0 0.0
    %1323 = vmatprep.mubr.f32.mxu0 0.0
    %1324 = vmatmul.mubr.f32.gmra.mrb[0].mxu0 %v1248
    %v1325 = vpop.f32.mrb[0].mxu0
    %v1326 = vadd.f32 %v1246, %v1325
    %v1327 = vpop.f32.mrb[0].mxu0
    %1328 = vmatprep.mubr.f32.mxu0 0.0
    %1329 = vmatmul.mubr.f32.gmra.mrb[0].mxu0 %v1251
    %v1330 = vpop.f32.mrb[0].mxu0
    %v1331 = vadd.f32 %v1246, %v1330
    %v1332 = vpop.f32.mrb[0].mxu0
    %1333 = vmatprep.mubr.f32.mxu0 0.0
    %1334 = vmatmul.mubr.f32.gmra.mrb[0].mxu0 %v1254
    %v1335 = vpop.f32.mrb[0].mxu0
    %v1336 = vadd.f32 %v1246, %v1335
    %v1337 = vpop.f32.mrb[0].mxu0
    %1338 = vdwg.mxu0
    %v1339 = vtanh.pop %v1326
    %v1340 = vtanh.pop %v1331
    %v1341 = vtanh.pop %v1336
    %v1342 = vlaneseq
    %v1343 = vshrl.u32 %v1342, 7
    %v1344 = vsub.s32 0, %v1343
    %v1345 = vrot.slane %v822, %v1344
    %v1347 = vsel %vm948, %v1339, 0
    %v1350 = vsel %vm948, %v1340, 0
    %v1353 = vsel %vm948, %v1341, 0
    %v1356 = vsel %vm958, %v816, 0
    %1358 = vmatprep.subr.mxu0 0.0
    %1359 = vmatpush1.msra.mxu0 %v815
    %1360 = vmatprep.subr.mxu0 0.0
    %1361 = vmatpush1.msra.mxu0 %v1356
    %1362 = vmatprep.subr.mxu0 0.0
    %1363 = vmatpush1.msra.mxu0 0.0
    %1364 = vmatprep.subr.mxu0 0.0
    %1365 = vmatpush1.msra.mxu0 0.0
    %1366 = vmatprep.subr.mxu0 0.0
    %1367 = vmatpush1.msra.mxu0 0.0
    %1368 = vmatprep.subr.mxu0 0.0
    %1369 = vmatpush1.msra.mxu0 0.0
    %1370 = vmatprep.subr.mxu0 0.0
    %1371 = vmatpush1.msra.mxu0 0.0
    %1372 = vmatprep.subr.mxu0 0.0
    %1373 = vmatpush1.msra.mxu0 0.0
    %1374 = vmatprep.subr.mxu0 0.0
    %1375 = vmatpush1.msra.mxu0 0.0
    %1376 = vmatprep.subr.mxu0 0.0
    %1377 = vmatpush1.msra.mxu0 0.0
    %1378 = vmatprep.subr.mxu0 0.0
    %1379 = vmatpush1.msra.mxu0 0.0
    %1380 = vmatprep.subr.mxu0 0.0
    %1381 = vmatpush1.msra.mxu0 0.0
    %1382 = vmatprep.subr.mxu0 0.0
    %1383 = vmatpush1.msra.mxu0 0.0
    %1384 = vmatprep.subr.mxu0 0.0
    %1385 = vmatpush1.msra.mxu0 0.0
    %1386 = vmatprep.subr.mxu0 0.0
    %1387 = vmatpush1.msra.mxu0 0.0
    %1388 = vmatprep.subr.mxu0 0.0
    %1389 = vmatpush1.msra.mxu0 0.0
    %1390 = vmatprep.subr.mxu0 0.0
    %1391 = vmatpush1.msra.mxu0 0.0
    %1392 = vmatprep.subr.mxu0 0.0
    %1393 = vmatpush1.msra.mxu0 0.0
    %1394 = vmatprep.subr.mxu0 0.0
    %1395 = vmatpush1.msra.mxu0 0.0
    %1396 = vmatprep.subr.mxu0 0.0
    %1397 = vmatpush1.msra.mxu0 0.0
    %1398 = vmatprep.subr.mxu0 0.0
    %1399 = vmatpush1.msra.mxu0 0.0
    %1400 = vmatprep.subr.mxu0 0.0
    %1401 = vmatpush1.msra.mxu0 0.0
    %1402 = vmatprep.subr.mxu0 0.0
    %1403 = vmatpush1.msra.mxu0 0.0
    %1404 = vmatprep.subr.mxu0 0.0
    %1405 = vmatpush1.msra.mxu0 0.0
    %1406 = vmatprep.subr.mxu0 0.0
    %1407 = vmatpush1.msra.mxu0 0.0
    %1408 = vmatprep.subr.mxu0 0.0
    %1409 = vmatpush1.msra.mxu0 0.0
    %1410 = vmatprep.subr.mxu0 0.0
    %1411 = vmatpush1.msra.mxu0 0.0
    %1412 = vmatprep.subr.mxu0 0.0
    %1413 = vmatpush1.msra.mxu0 0.0
    %1414 = vmatprep.subr.mxu0 0.0
    %1415 = vmatpush1.msra.mxu0 0.0
    %1416 = vmatprep.subr.mxu0 0.0
    %1417 = vmatpush1.msra.mxu0 0.0
    %1418 = vmatprep.subr.mxu0 0.0
    %1419 = vmatpush1.msra.mxu0 0.0
    %1420 = vmatprep.subr.mxu0 0.0
    %1421 = vmatpush1.msra.mxu0 0.0
    %1422 = vmatprep.mubr.f32.mxu0 0.0
    %1423 = vmatmul.mubr.f32.gmra.mrb[0].mxu0 %v1347
    %v1424 = vpop.f32.mrb[0].mxu0
    %v1425 = vadd.f32 %v1345, %v1424
    %v1426 = vpop.f32.mrb[0].mxu0
    %1427 = vmatprep.mubr.f32.mxu0 0.0
    %1428 = vmatmul.mubr.f32.gmra.mrb[0].mxu0 %v1350
    %v1429 = vpop.f32.mrb[0].mxu0
    %v1430 = vadd.f32 %v1345, %v1429
    %v1431 = vpop.f32.mrb[0].mxu0
    %1432 = vmatprep.mubr.f32.mxu0 0.0
    %1433 = vmatmul.mubr.f32.gmra.mrb[0].mxu0 %v1353
    %v1434 = vpop.f32.mrb[0].mxu0
    %v1435 = vadd.f32 %v1345, %v1434
    %v1436 = vpop.f32.mrb[0].mxu0
    %1437 = vdwg.mxu0
    %v1438 = vlaneseq
    %v1439 = vshrl.u32 %v1438, 7
    %v1440 = vsub.s32 0, %v1439
    %v1441 = vrot.slane %v823, %v1440
    %v1442 = vmul.f32 %v1425, %v1441
    %v1443 = vmul.f32 %v1430, %v1441
    %v1444 = vmul.f32 %v1435, %v1441
    %v1445 = vsel %vm142, %v1442, 0.0
    %1446 = vadd.xlane.f32.xlu0 %v1445
    %v1447 = vpop.xlane.xlu0 %1446
    %v1448 = vsel %vm142, %v1443, 0.0
    %1449 = vadd.xlane.f32.xlu0 %v1448
    %v1450 = vpop.xlane.xlu0 %1449
    %v1451 = vsel %vm142, %v1444, 0.0
    %1452 = vadd.xlane.f32.xlu0 %v1451
    %v1453 = vpop.xlane.xlu0 %1452
    %v1455 = vsel %vm142, %v1441, 0
    %v1458 = vsel %vm142, %v815, 0
    %v1460 = vsel %vm142, %v816, 0
    %1462 = vmatprep.subr.mxu0 0.0
    %1463 = vmatpush1.xpose.msra.mxu0 %v1458
    %1464 = vmatprep.subr.mxu0 0.0
    %1465 = vmatpush1.xpose.msra.mxu0 %v1460
    %1466 = vmatprep.subr.mxu0 0.0
    %1467 = vmatpush1.xpose.msra.mxu0 0.0
    %1468 = vmatprep.subr.mxu0 0.0
    %1469 = vmatpush1.xpose.msra.mxu0 0.0
    %1470 = vmatprep.subr.mxu0 0.0
    %1471 = vmatpush1.xpose.msra.mxu0 0.0
    %1472 = vmatprep.subr.mxu0 0.0
    %1473 = vmatpush1.xpose.msra.mxu0 0.0
    %1474 = vmatprep.subr.mxu0 0.0
    %1475 = vmatpush1.xpose.msra.mxu0 0.0
    %1476 = vmatprep.subr.mxu0 0.0
    %1477 = vmatpush1.xpose.msra.mxu0 0.0
    %1478 = vmatprep.subr.mxu0 0.0
    %1479 = vmatpush1.xpose.msra.mxu0 0.0
    %1480 = vmatprep.subr.mxu0 0.0
    %1481 = vmatpush1.xpose.msra.mxu0 0.0
    %1482 = vmatprep.subr.mxu0 0.0
    %1483 = vmatpush1.xpose.msra.mxu0 0.0
    %1484 = vmatprep.subr.mxu0 0.0
    %1485 = vmatpush1.xpose.msra.mxu0 0.0
    %1486 = vmatprep.subr.mxu0 0.0
    %1487 = vmatpush1.xpose.msra.mxu0 0.0
    %1488 = vmatprep.subr.mxu0 0.0
    %1489 = vmatpush1.xpose.msra.mxu0 0.0
    %1490 = vmatprep.subr.mxu0 0.0
    %1491 = vmatpush1.xpose.msra.mxu0 0.0
    %1492 = vmatprep.subr.mxu0 0.0
    %1493 = vmatpush1.xpose.msra.mxu0 0.0
    %1494 = vmatprep.subr.mxu0 0.0
    %1495 = vmatpush1.xpose.msra.mxu0 0.0
    %1496 = vmatprep.subr.mxu0 0.0
    %1497 = vmatpush1.xpose.msra.mxu0 0.0
    %1498 = vmatprep.subr.mxu0 0.0
    %1499 = vmatpush1.xpose.msra.mxu0 0.0
    %1500 = vmatprep.subr.mxu0 0.0
    %1501 = vmatpush1.xpose.msra.mxu0 0.0
    %1502 = vmatprep.subr.mxu0 0.0
    %1503 = vmatpush1.xpose.msra.mxu0 0.0
    %1504 = vmatprep.subr.mxu0 0.0
    %1505 = vmatpush1.xpose.msra.mxu0 0.0
    %1506 = vmatprep.subr.mxu0 0.0
    %1507 = vmatpush1.xpose.msra.mxu0 0.0
    %1508 = vmatprep.subr.mxu0 0.0
    %1509 = vmatpush1.xpose.msra.mxu0 0.0
    %1510 = vmatprep.subr.mxu0 0.0
    %1511 = vmatpush1.xpose.msra.mxu0 0.0
    %1512 = vmatprep.subr.mxu0 0.0
    %1513 = vmatpush1.xpose.msra.mxu0 0.0
    %1514 = vmatprep.subr.mxu0 0.0
    %1515 = vmatpush1.xpose.msra.mxu0 0.0
    %1516 = vmatprep.subr.mxu0 0.0
    %1517 = vmatpush1.xpose.msra.mxu0 0.0
    %1518 = vmatprep.subr.mxu0 0.0
    %1519 = vmatpush1.xpose.msra.mxu0 0.0
    %1520 = vmatprep.subr.mxu0 0.0
    %1521 = vmatpush1.xpose.msra.mxu0 0.0
    %1522 = vmatprep.subr.mxu0 0.0
    %1523 = vmatpush1.xpose.msra.mxu0 0.0
    %1524 = vmatprep.subr.mxu0 0.0
    %1525 = vmatpush1.xpose.msra.mxu0 0.0
    %1526 = vmatprep.mubr.f32.mxu0 0.0
    %1527 = vmatmul.mubr.f32.gmra.mrb[0].mxu0 %v1455
    %v1528 = vpop.f32.mrb[0].mxu0
    %v1529 = vadd.f32 0.0, %v1528
    %v1530 = vpop.f32.mrb[0].mxu0
    %1531 = vmatprep.mubr.f32.mxu0 0.0
    %1532 = vmatmul.mubr.f32.gmra.mrb[0].mxu0 %v1455
    %v1533 = vpop.f32.mrb[0].mxu0
    %v1534 = vadd.f32 0.0, %v1533
    %v1535 = vpop.f32.mrb[0].mxu0
    %1536 = vmatprep.mubr.f32.mxu0 0.0
    %1537 = vmatmul.mubr.f32.gmra.mrb[0].mxu0 %v1455
    %v1538 = vpop.f32.mrb[0].mxu0
    %v1539 = vadd.f32 0.0, %v1538
    %v1540 = vpop.f32.mrb[0].mxu0
    %1541 = vdwg.mxu0
    %v1542 = vmul.f32 %v1339, %v1339
    %v1543 = vmul.f32 %v1340, %v1340
    %v1544 = vmul.f32 %v1341, %v1341
    %v1545 = vsub.f32 1.0, %v1542
    %v1546 = vsub.f32 1.0, %v1543
    %v1547 = vsub.f32 1.0, %v1544
    %v1548 = vmul.f32 %v1529, %v1545
    %v1549 = vmul.f32 %v1534, %v1546
    %v1550 = vmul.f32 %v1539, %v1547
    %v1552 = vsel %vm948, %v1548, 0
    %v1555 = vsel %vm948, %v1549, 0
    %v1558 = vsel %vm948, %v1550, 0
    %v1561 = vsel %vm948, %v813, 0
    %v1563 = vsel %vm948, %v814, 0
    %1565 = vmatprep.subr.mxu0 0.0
    %1566 = vmatpush1.xpose.msra.mxu0 %v1561
    %1567 = vmatprep.subr.mxu0 0.0
    %1568 = vmatpush1.xpose.msra.mxu0 %v1563
    %1569 = vmatprep.subr.mxu0 0.0
    %1570 = vmatpush1.xpose.msra.mxu0 0.0
    %1571 = vmatprep.subr.mxu0 0.0
    %1572 = vmatpush1.xpose.msra.mxu0 0.0
    %1573 = vmatprep.subr.mxu0 0.0
    %1574 = vmatpush1.xpose.msra.mxu0 0.0
    %1575 = vmatprep.subr.mxu0 0.0
    %1576 = vmatpush1.xpose.msra.mxu0 0.0
    %1577 = vmatprep.subr.mxu0 0.0
    %1578 = vmatpush1.xpose.msra.mxu0 0.0
    %1579 = vmatprep.subr.mxu0 0.0
    %1580 = vmatpush1.xpose.msra.mxu0 0.0
    %1581 = vmatprep.subr.mxu0 0.0
    %1582 = vmatpush1.xpose.msra.mxu0 0.0
    %1583 = vmatprep.subr.mxu0 0.0
    %1584 = vmatpush1.xpose.msra.mxu0 0.0
    %1585 = vmatprep.subr.mxu0 0.0
    %1586 = vmatpush1.xpose.msra.mxu0 0.0
    %1587 = vmatprep.subr.mxu0 0.0
    %1588 = vmatpush1.xpose.msra.mxu0 0.0
    %1589 = vmatprep.subr.mxu0 0.0
    %1590 = vmatpush1.xpose.msra.mxu0 0.0
    %1591 = vmatprep.subr.mxu0 0.0
    %1592 = vmatpush1.xpose.msra.mxu0 0.0
    %1593 = vmatprep.subr.mxu0 0.0
    %1594 = vmatpush1.xpose.msra.mxu0 0.0
    %1595 = vmatprep.subr.mxu0 0.0
    %1596 = vmatpush1.xpose.msra.mxu0 0.0
    %1597 = vmatprep.subr.mxu0 0.0
    %1598 = vmatpush1.xpose.msra.mxu0 0.0
    %1599 = vmatprep.subr.mxu0 0.0
    %1600 = vmatpush1.xpose.msra.mxu0 0.0
    %1601 = vmatprep.subr.mxu0 0.0
    %1602 = vmatpush1.xpose.msra.mxu0 0.0
    %1603 = vmatprep.subr.mxu0 0.0
    %1604 = vmatpush1.xpose.msra.mxu0 0.0
    %1605 = vmatprep.subr.mxu0 0.0
    %1606 = vmatpush1.xpose.msra.mxu0 0.0
    %1607 = vmatprep.subr.mxu0 0.0
    %1608 = vmatpush1.xpose.msra.mxu0 0.0
    %1609 = vmatprep.subr.mxu0 0.0
    %1610 = vmatpush1.xpose.msra.mxu0 0.0
    %1611 = vmatprep.subr.mxu0 0.0
    %1612 = vmatpush1.xpose.msra.mxu0 0.0
    %1613 = vmatprep.subr.mxu0 0.0
    %1614 = vmatpush1.xpose.msra.mxu0 0.0
    %1615 = vmatprep.subr.mxu0 0.0
    %1616 = vmatpush1.xpose.msra.mxu0 0.0
    %1617 = vmatprep.subr.mxu0 0.0
    %1618 = vmatpush1.xpose.msra.mxu0 0.0
    %1619 = vmatprep.subr.mxu0 0.0
    %1620 = vmatpush1.xpose.msra.mxu0 0.0
    %1621 = vmatprep.subr.mxu0 0.0
    %1622 = vmatpush1.xpose.msra.mxu0 0.0
    %1623 = vmatprep.subr.mxu0 0.0
    %1624 = vmatpush1.xpose.msra.mxu0 0.0
    %1625 = vmatprep.subr.mxu0 0.0
    %1626 = vmatpush1.xpose.msra.mxu0 0.0
    %1627 = vmatprep.subr.mxu0 0.0
    %1628 = vmatpush1.xpose.msra.mxu0 0.0
    %1629 = vmatprep.mubr.f32.mxu0 0.0
    %1630 = vmatmul.mubr.f32.gmra.mrb[0].mxu0 %v1552
    %v1631 = vpop.f32.mrb[0].mxu0
    %v1632 = vadd.f32 0.0, %v1631
    %v1633 = vpop.f32.mrb[0].mxu0
    %1634 = vmatprep.mubr.f32.mxu0 0.0
    %1635 = vmatmul.mubr.f32.gmra.mrb[0].mxu0 %v1555
    %v1636 = vpop.f32.mrb[0].mxu0
    %v1637 = vadd.f32 0.0, %v1636
    %v1638 = vpop.f32.mrb[0].mxu0
    %1639 = vmatprep.mubr.f32.mxu0 0.0
    %1640 = vmatmul.mubr.f32.gmra.mrb[0].mxu0 %v1558
    %v1641 = vpop.f32.mrb[0].mxu0
    %v1642 = vadd.f32 0.0, %v1641
    %v1643 = vpop.f32.mrb[0].mxu0
    %1644 = vdwg.mxu0
    %v1645 = vmul.f32 %v1240, %v1240
    %v1646 = vmul.f32 %v1241, %v1241
    %v1647 = vmul.f32 %v1242, %v1242
    %v1648 = vsub.f32 1.0, %v1645
    %v1649 = vsub.f32 1.0, %v1646
    %v1650 = vsub.f32 1.0, %v1647
    %v1651 = vmul.f32 %v1632, %v1648
    %v1652 = vmul.f32 %v1637, %v1649
    %v1653 = vmul.f32 %v1642, %v1650
    %v1655 = vsel %vm948, %v1651, 0
    %v1658 = vsel %vm948, %v1652, 0
    %v1661 = vsel %vm948, %v1653, 0
    %v1664 = vsel %vm948, %v811, 0
    %v1666 = vsel %vm948, %v812, 0
    %1668 = vmatprep.subr.mxu0 0.0
    %1669 = vmatpush1.xpose.msra.mxu0 %v1664
    %1670 = vmatprep.subr.mxu0 0.0
    %1671 = vmatpush1.xpose.msra.mxu0 %v1666
    %1672 = vmatprep.subr.mxu0 0.0
    %1673 = vmatpush1.xpose.msra.mxu0 0.0
    %1674 = vmatprep.subr.mxu0 0.0
    %1675 = vmatpush1.xpose.msra.mxu0 0.0
    %1676 = vmatprep.subr.mxu0 0.0
    %1677 = vmatpush1.xpose.msra.mxu0 0.0
    %1678 = vmatprep.subr.mxu0 0.0
    %1679 = vmatpush1.xpose.msra.mxu0 0.0
    %1680 = vmatprep.subr.mxu0 0.0
    %1681 = vmatpush1.xpose.msra.mxu0 0.0
    %1682 = vmatprep.subr.mxu0 0.0
    %1683 = vmatpush1.xpose.msra.mxu0 0.0
    %1684 = vmatprep.subr.mxu0 0.0
    %1685 = vmatpush1.xpose.msra.mxu0 0.0
    %1686 = vmatprep.subr.mxu0 0.0
    %1687 = vmatpush1.xpose.msra.mxu0 0.0
    %1688 = vmatprep.subr.mxu0 0.0
    %1689 = vmatpush1.xpose.msra.mxu0 0.0
    %1690 = vmatprep.subr.mxu0 0.0
    %1691 = vmatpush1.xpose.msra.mxu0 0.0
    %1692 = vmatprep.subr.mxu0 0.0
    %1693 = vmatpush1.xpose.msra.mxu0 0.0
    %1694 = vmatprep.subr.mxu0 0.0
    %1695 = vmatpush1.xpose.msra.mxu0 0.0
    %1696 = vmatprep.subr.mxu0 0.0
    %1697 = vmatpush1.xpose.msra.mxu0 0.0
    %1698 = vmatprep.subr.mxu0 0.0
    %1699 = vmatpush1.xpose.msra.mxu0 0.0
    %1700 = vmatprep.subr.mxu0 0.0
    %1701 = vmatpush1.xpose.msra.mxu0 0.0
    %1702 = vmatprep.subr.mxu0 0.0
    %1703 = vmatpush1.xpose.msra.mxu0 0.0
    %1704 = vmatprep.subr.mxu0 0.0
    %1705 = vmatpush1.xpose.msra.mxu0 0.0
    %1706 = vmatprep.subr.mxu0 0.0
    %1707 = vmatpush1.xpose.msra.mxu0 0.0
    %1708 = vmatprep.subr.mxu0 0.0
    %1709 = vmatpush1.xpose.msra.mxu0 0.0
    %1710 = vmatprep.subr.mxu0 0.0
    %1711 = vmatpush1.xpose.msra.mxu0 0.0
    %1712 = vmatprep.subr.mxu0 0.0
    %1713 = vmatpush1.xpose.msra.mxu0 0.0
    %1714 = vmatprep.subr.mxu0 0.0
    %1715 = vmatpush1.xpose.msra.mxu0 0.0
    %1716 = vmatprep.subr.mxu0 0.0
    %1717 = vmatpush1.xpose.msra.mxu0 0.0
    %1718 = vmatprep.subr.mxu0 0.0
    %1719 = vmatpush1.xpose.msra.mxu0 0.0
    %1720 = vmatprep.subr.mxu0 0.0
    %1721 = vmatpush1.xpose.msra.mxu0 0.0
    %1722 = vmatprep.subr.mxu0 0.0
    %1723 = vmatpush1.xpose.msra.mxu0 0.0
    %1724 = vmatprep.subr.mxu0 0.0
    %1725 = vmatpush1.xpose.msra.mxu0 0.0
    %1726 = vmatprep.subr.mxu0 0.0
    %1727 = vmatpush1.xpose.msra.mxu0 0.0
    %1728 = vmatprep.subr.mxu0 0.0
    %1729 = vmatpush1.xpose.msra.mxu0 0.0
    %1730 = vmatprep.subr.mxu0 0.0
    %1731 = vmatpush1.xpose.msra.mxu0 0.0
    %1732 = vmatprep.mubr.f32.mxu0 0.0
    %1733 = vmatmul.mubr.f32.gmra.mrb[0].mxu0 %v1655
    %v1734 = vpop.f32.mrb[0].mxu0
    %v1735 = vadd.f32 0.0, %v1734
    %v1736 = vpop.f32.mrb[0].mxu0
    %1737 = vmatprep.mubr.f32.mxu0 0.0
    %1738 = vmatmul.mubr.f32.gmra.mrb[0].mxu0 %v1658
    %v1739 = vpop.f32.mrb[0].mxu0
    %v1740 = vadd.f32 0.0, %v1739
    %v1741 = vpop.f32.mrb[0].mxu0
    %1742 = vmatprep.mubr.f32.mxu0 0.0
    %1743 = vmatmul.mubr.f32.gmra.mrb[0].mxu0 %v1661
    %v1744 = vpop.f32.mrb[0].mxu0
    %v1745 = vadd.f32 0.0, %v1744
    %v1746 = vpop.f32.mrb[0].mxu0
    %1747 = vdwg.mxu0
    %v1748 = vmul.f32 %v1141, %v1141
    %v1749 = vmul.f32 %v1142, %v1142
    %v1750 = vmul.f32 %v1143, %v1143
    %v1751 = vsub.f32 1.0, %v1748
    %v1752 = vsub.f32 1.0, %v1749
    %v1753 = vsub.f32 1.0, %v1750
    %v1754 = vmul.f32 %v1735, %v1751
    %v1755 = vmul.f32 %v1740, %v1752
    %v1756 = vmul.f32 %v1745, %v1753
    %v1758 = vsel %vm948, %v1754, 0
    %v1761 = vsel %vm948, %v1755, 0
    %v1764 = vsel %vm948, %v1756, 0
    %v1767 = vsel %vm948, %v809, 0
    %v1769 = vsel %vm948, %v810, 0
    %1771 = vmatprep.subr.mxu0 0.0
    %1772 = vmatpush1.xpose.msra.mxu0 %v1767
    %1773 = vmatprep.subr.mxu0 0.0
    %1774 = vmatpush1.xpose.msra.mxu0 %v1769
    %1775 = vmatprep.subr.mxu0 0.0
    %1776 = vmatpush1.xpose.msra.mxu0 0.0
    %1777 = vmatprep.subr.mxu0 0.0
    %1778 = vmatpush1.xpose.msra.mxu0 0.0
    %1779 = vmatprep.subr.mxu0 0.0
    %1780 = vmatpush1.xpose.msra.mxu0 0.0
    %1781 = vmatprep.subr.mxu0 0.0
    %1782 = vmatpush1.xpose.msra.mxu0 0.0
    %1783 = vmatprep.subr.mxu0 0.0
    %1784 = vmatpush1.xpose.msra.mxu0 0.0
    %1785 = vmatprep.subr.mxu0 0.0
    %1786 = vmatpush1.xpose.msra.mxu0 0.0
    %1787 = vmatprep.subr.mxu0 0.0
    %1788 = vmatpush1.xpose.msra.mxu0 0.0
    %1789 = vmatprep.subr.mxu0 0.0
    %1790 = vmatpush1.xpose.msra.mxu0 0.0
    %1791 = vmatprep.subr.mxu0 0.0
    %1792 = vmatpush1.xpose.msra.mxu0 0.0
    %1793 = vmatprep.subr.mxu0 0.0
    %1794 = vmatpush1.xpose.msra.mxu0 0.0
    %1795 = vmatprep.subr.mxu0 0.0
    %1796 = vmatpush1.xpose.msra.mxu0 0.0
    %1797 = vmatprep.subr.mxu0 0.0
    %1798 = vmatpush1.xpose.msra.mxu0 0.0
    %1799 = vmatprep.subr.mxu0 0.0
    %1800 = vmatpush1.xpose.msra.mxu0 0.0
    %1801 = vmatprep.subr.mxu0 0.0
    %1802 = vmatpush1.xpose.msra.mxu0 0.0
    %1803 = vmatprep.subr.mxu0 0.0
    %1804 = vmatpush1.xpose.msra.mxu0 0.0
    %1805 = vmatprep.subr.mxu0 0.0
    %1806 = vmatpush1.xpose.msra.mxu0 0.0
    %1807 = vmatprep.subr.mxu0 0.0
    %1808 = vmatpush1.xpose.msra.mxu0 0.0
    %1809 = vmatprep.subr.mxu0 0.0
    %1810 = vmatpush1.xpose.msra.mxu0 0.0
    %1811 = vmatprep.subr.mxu0 0.0
    %1812 = vmatpush1.xpose.msra.mxu0 0.0
    %1813 = vmatprep.subr.mxu0 0.0
    %1814 = vmatpush1.xpose.msra.mxu0 0.0
    %1815 = vmatprep.subr.mxu0 0.0
    %1816 = vmatpush1.xpose.msra.mxu0 0.0
    %1817 = vmatprep.subr.mxu0 0.0
    %1818 = vmatpush1.xpose.msra.mxu0 0.0
    %1819 = vmatprep.subr.mxu0 0.0
    %1820 = vmatpush1.xpose.msra.mxu0 0.0
    %1821 = vmatprep.subr.mxu0 0.0
    %1822 = vmatpush1.xpose.msra.mxu0 0.0
    %1823 = vmatprep.subr.mxu0 0.0
    %1824 = vmatpush1.xpose.msra.mxu0 0.0
    %1825 = vmatprep.subr.mxu0 0.0
    %1826 = vmatpush1.xpose.msra.mxu0 0.0
    %1827 = vmatprep.subr.mxu0 0.0
    %1828 = vmatpush1.xpose.msra.mxu0 0.0
    %1829 = vmatprep.subr.mxu0 0.0
    %1830 = vmatpush1.xpose.msra.mxu0 0.0
    %1831 = vmatprep.subr.mxu0 0.0
    %1832 = vmatpush1.xpose.msra.mxu0 0.0
    %1833 = vmatprep.subr.mxu0 0.0
    %1834 = vmatpush1.xpose.msra.mxu0 0.0
    %1835 = vmatprep.mubr.f32.mxu0 0.0
    %1836 = vmatmul.mubr.f32.gmra.mrb[0].mxu0 %v1758
    %v1837 = vpop.f32.mrb[0].mxu0
    %v1838 = vadd.f32 0.0, %v1837
    %v1839 = vpop.f32.mrb[0].mxu0
    %1840 = vmatprep.mubr.f32.mxu0 0.0
    %1841 = vmatmul.mubr.f32.gmra.mrb[0].mxu0 %v1761
    %v1842 = vpop.f32.mrb[0].mxu0
    %v1843 = vadd.f32 0.0, %v1842
    %v1844 = vpop.f32.mrb[0].mxu0
    %1845 = vmatprep.mubr.f32.mxu0 0.0
    %1846 = vmatmul.mubr.f32.gmra.mrb[0].mxu0 %v1764
    %v1847 = vpop.f32.mrb[0].mxu0
    %v1848 = vadd.f32 0.0, %v1847
    %v1849 = vpop.f32.mrb[0].mxu0
    %1850 = vdwg.mxu0
    %v1851 = vmul.f32 %v1042, %v1042
    %v1852 = vmul.f32 %v1043, %v1043
    %v1853 = vmul.f32 %v1044, %v1044
    %v1854 = vsub.f32 1.0, %v1851
    %v1855 = vsub.f32 1.0, %v1852
    %v1856 = vsub.f32 1.0, %v1853
    %v1857 = vmul.f32 %v1838, %v1854
    %v1858 = vmul.f32 %v1843, %v1855
    %v1859 = vmul.f32 %v1848, %v1856
    %v1861 = vsel %vm948, %v1857, 0
    %v1864 = vsel %vm948, %v1858, 0
    %v1867 = vsel %vm948, %v1859, 0
    %v1870 = vsel %vm948, %v807, 0
    %v1872 = vsel %vm948, %v808, 0
    %1874 = vmatprep.subr.mxu0 0.0
    %1875 = vmatpush1.xpose.msra.mxu0 %v1870
    %1876 = vmatprep.subr.mxu0 0.0
    %1877 = vmatpush1.xpose.msra.mxu0 %v1872
    %1878 = vmatprep.subr.mxu0 0.0
    %1879 = vmatpush1.xpose.msra.mxu0 0.0
    %1880 = vmatprep.subr.mxu0 0.0
    %1881 = vmatpush1.xpose.msra.mxu0 0.0
    %1882 = vmatprep.subr.mxu0 0.0
    %1883 = vmatpush1.xpose.msra.mxu0 0.0
    %1884 = vmatprep.subr.mxu0 0.0
    %1885 = vmatpush1.xpose.msra.mxu0 0.0
    %1886 = vmatprep.subr.mxu0 0.0
    %1887 = vmatpush1.xpose.msra.mxu0 0.0
    %1888 = vmatprep.subr.mxu0 0.0
    %1889 = vmatpush1.xpose.msra.mxu0 0.0
    %1890 = vmatprep.subr.mxu0 0.0
    %1891 = vmatpush1.xpose.msra.mxu0 0.0
    %1892 = vmatprep.subr.mxu0 0.0
    %1893 = vmatpush1.xpose.msra.mxu0 0.0
    %1894 = vmatprep.subr.mxu0 0.0
    %1895 = vmatpush1.xpose.msra.mxu0 0.0
    %1896 = vmatprep.subr.mxu0 0.0
    %1897 = vmatpush1.xpose.msra.mxu0 0.0
    %1898 = vmatprep.subr.mxu0 0.0
    %1899 = vmatpush1.xpose.msra.mxu0 0.0
    %1900 = vmatprep.subr.mxu0 0.0
    %1901 = vmatpush1.xpose.msra.mxu0 0.0
    %1902 = vmatprep.subr.mxu0 0.0
    %1903 = vmatpush1.xpose.msra.mxu0 0.0
    %1904 = vmatprep.subr.mxu0 0.0
    %1905 = vmatpush1.xpose.msra.mxu0 0.0
    %1906 = vmatprep.subr.mxu0 0.0
    %1907 = vmatpush1.xpose.msra.mxu0 0.0
    %1908 = vmatprep.subr.mxu0 0.0
    %1909 = vmatpush1.xpose.msra.mxu0 0.0
    %1910 = vmatprep.subr.mxu0 0.0
    %1911 = vmatpush1.xpose.msra.mxu0 0.0
    %1912 = vmatprep.subr.mxu0 0.0
    %1913 = vmatpush1.xpose.msra.mxu0 0.0
    %1914 = vmatprep.subr.mxu0 0.0
    %1915 = vmatpush1.xpose.msra.mxu0 0.0
    %1916 = vmatprep.subr.mxu0 0.0
    %1917 = vmatpush1.xpose.msra.mxu0 0.0
    %1918 = vmatprep.subr.mxu0 0.0
    %1919 = vmatpush1.xpose.msra.mxu0 0.0
    %1920 = vmatprep.subr.mxu0 0.0
    %1921 = vmatpush1.xpose.msra.mxu0 0.0
    %1922 = vmatprep.subr.mxu0 0.0
    %1923 = vmatpush1.xpose.msra.mxu0 0.0
    %1924 = vmatprep.subr.mxu0 0.0
    %1925 = vmatpush1.xpose.msra.mxu0 0.0
    %1926 = vmatprep.subr.mxu0 0.0
    %1927 = vmatpush1.xpose.msra.mxu0 0.0
    %1928 = vmatprep.subr.mxu0 0.0
    %1929 = vmatpush1.xpose.msra.mxu0 0.0
    %1930 = vmatprep.subr.mxu0 0.0
    %1931 = vmatpush1.xpose.msra.mxu0 0.0
    %1932 = vmatprep.subr.mxu0 0.0
    %1933 = vmatpush1.xpose.msra.mxu0 0.0
    %1934 = vmatprep.subr.mxu0 0.0
    %1935 = vmatpush1.xpose.msra.mxu0 0.0
    %1936 = vmatprep.subr.mxu0 0.0
    %1937 = vmatpush1.xpose.msra.mxu0 0.0
    %1938 = vmatprep.mubr.f32.mxu0 0.0
    %1939 = vmatmul.mubr.f32.gmra.mrb[0].mxu0 %v1861
    %v1940 = vpop.f32.mrb[0].mxu0
    %v1941 = vadd.f32 0.0, %v1940
    %v1942 = vpop.f32.mrb[0].mxu0
    %1943 = vmatprep.mubr.f32.mxu0 0.0
    %1944 = vmatmul.mubr.f32.gmra.mrb[0].mxu0 %v1864
    %v1945 = vpop.f32.mrb[0].mxu0
    %v1946 = vadd.f32 0.0, %v1945
    %v1947 = vpop.f32.mrb[0].mxu0
    %1948 = vmatprep.mubr.f32.mxu0 0.0
    %1949 = vmatmul.mubr.f32.gmra.mrb[0].mxu0 %v1867
    %v1950 = vpop.f32.mrb[0].mxu0
    %v1951 = vadd.f32 0.0, %v1950
    %v1952 = vpop.f32.mrb[0].mxu0
    %1953 = vdwg.mxu0
    %v1954 = vmul.f32 %v941, %v941
    %v1955 = vmul.f32 %v942, %v942
    %v1956 = vmul.f32 %v943, %v943
    %v1957 = vsub.f32 1.0, %v1954
    %v1958 = vsub.f32 1.0, %v1955
    %v1959 = vsub.f32 1.0, %v1956
    %v1960 = vmul.f32 %v1941, %v1957
    %v1961 = vmul.f32 %v1946, %v1958
    %v1962 = vmul.f32 %v1951, %v1959
    %v1964 = vsel %vm948, %v1960, 0
    %v1967 = vsel %vm948, %v1961, 0
    %v1970 = vsel %vm948, %v1962, 0
    %v1972 = vsel %vm948, %v806, 0
    %1974 = vmatprep.subr.mxu0 0.0
    %1975 = vmatpush1.xpose.msra.mxu0 %v1972
    %1976 = vmatprep.subr.mxu0 0.0
    %1977 = vmatpush1.xpose.msra.mxu0 0.0
    %1978 = vmatprep.subr.mxu0 0.0
    %1979 = vmatpush1.xpose.msra.mxu0 0.0
    %1980 = vmatprep.subr.mxu0 0.0
    %1981 = vmatpush1.xpose.msra.mxu0 0.0
    %1982 = vmatprep.subr.mxu0 0.0
    %1983 = vmatpush1.xpose.msra.mxu0 0.0
    %1984 = vmatprep.subr.mxu0 0.0
    %1985 = vmatpush1.xpose.msra.mxu0 0.0
    %1986 = vmatprep.subr.mxu0 0.0
    %1987 = vmatpush1.xpose.msra.mxu0 0.0
    %1988 = vmatprep.subr.mxu0 0.0
    %1989 = vmatpush1.xpose.msra.mxu0 0.0
    %1990 = vmatprep.subr.mxu0 0.0
    %1991 = vmatpush1.xpose.msra.mxu0 0.0
    %1992 = vmatprep.subr.mxu0 0.0
    %1993 = vmatpush1.xpose.msra.mxu0 0.0
    %1994 = vmatprep.subr.mxu0 0.0
    %1995 = vmatpush1.xpose.msra.mxu0 0.0
    %1996 = vmatprep.subr.mxu0 0.0
    %1997 = vmatpush1.xpose.msra.mxu0 0.0
    %1998 = vmatprep.subr.mxu0 0.0
    %1999 = vmatpush1.xpose.msra.mxu0 0.0
    %2000 = vmatprep.subr.mxu0 0.0
    %2001 = vmatpush1.xpose.msra.mxu0 0.0
    %2002 = vmatprep.subr.mxu0 0.0
    %2003 = vmatpush1.xpose.msra.mxu0 0.0
    %2004 = vmatprep.subr.mxu0 0.0
    %2005 = vmatpush1.xpose.msra.mxu0 0.0
    %2006 = vmatprep.subr.mxu0 0.0
    %2007 = vmatpush1.xpose.msra.mxu0 0.0
    %2008 = vmatprep.subr.mxu0 0.0
    %2009 = vmatpush1.xpose.msra.mxu0 0.0
    %2010 = vmatprep.subr.mxu0 0.0
    %2011 = vmatpush1.xpose.msra.mxu0 0.0
    %2012 = vmatprep.subr.mxu0 0.0
    %2013 = vmatpush1.xpose.msra.mxu0 0.0
    %2014 = vmatprep.subr.mxu0 0.0
    %2015 = vmatpush1.xpose.msra.mxu0 0.0
    %2016 = vmatprep.subr.mxu0 0.0
    %2017 = vmatpush1.xpose.msra.mxu0 0.0
    %2018 = vmatprep.subr.mxu0 0.0
    %2019 = vmatpush1.xpose.msra.mxu0 0.0
    %2020 = vmatprep.subr.mxu0 0.0
    %2021 = vmatpush1.xpose.msra.mxu0 0.0
    %2022 = vmatprep.subr.mxu0 0.0
    %2023 = vmatpush1.xpose.msra.mxu0 0.0
    %2024 = vmatprep.subr.mxu0 0.0
    %2025 = vmatpush1.xpose.msra.mxu0 0.0
    %2026 = vmatprep.subr.mxu0 0.0
    %2027 = vmatpush1.xpose.msra.mxu0 0.0
    %2028 = vmatprep.subr.mxu0 0.0
    %2029 = vmatpush1.xpose.msra.mxu0 0.0
    %2030 = vmatprep.subr.mxu0 0.0
    %2031 = vmatpush1.xpose.msra.mxu0 0.0
    %2032 = vmatprep.subr.mxu0 0.0
    %2033 = vmatpush1.xpose.msra.mxu0 0.0
    %2034 = vmatprep.subr.mxu0 0.0
    %2035 = vmatpush1.xpose.msra.mxu0 0.0
    %2036 = vmatprep.subr.mxu0 0.0
    %2037 = vmatpush1.xpose.msra.mxu0 0.0
    %2038 = vmatprep.mubr.f32.mxu0 0.0
    %2039 = vmatmul.mubr.f32.gmra.mrb[0].mxu0 %v1964
    %v2040 = vpop.f32.mrb[0].mxu0
    %v2041 = vadd.f32 0.0, %v2040
    %v2042 = vpop.f32.mrb[0].mxu0
    %2043 = vmatprep.mubr.f32.mxu0 0.0
    %2044 = vmatmul.mubr.f32.gmra.mrb[0].mxu0 %v1967
    %v2045 = vpop.f32.mrb[0].mxu0
    %v2046 = vadd.f32 0.0, %v2045
    %v2047 = vpop.f32.mrb[0].mxu0
    %2048 = vmatprep.mubr.f32.mxu0 0.0
    %2049 = vmatmul.mubr.f32.gmra.mrb[0].mxu0 %v1970
    %v2050 = vpop.f32.mrb[0].mxu0
    %v2051 = vadd.f32 0.0, %v2050
    %v2052 = vpop.f32.mrb[0].mxu0
    %2053 = vdwg.mxu0
    %2057 = vrot.lane.b32.xlu0 %v2041, 5
    %v2058 = vpop.permute.xlu0 %2057
    %2059 = vrot.lane.b32.xlu0 %v2046, 5
    %v2060 = vpop.permute.xlu0 %2059
    %2061 = vrot.lane.b32.xlu0 %v2051, 5
    %v2062 = vpop.permute.xlu0 %2061
    %v2066 = vsel %vm839, %v793, %v1447
    %v2067 = vsel %vm839, %v798, %v1450
    %v2068 = vsel %vm839, %v803, %v1453
    %v2069 = vsel %vm847, %v2066, %v2058
    %v2070 = vsel %vm847, %v2067, %v2060
    %v2071 = vsel %vm847, %v2068, %v2062
    %vm2072 = vcmask 72704
    %v2073 = vsel %vm2072, %v2069, %v2058
    %v2074 = vsel %vm2072, %v2070, %v2060
    %v2075 = vsel %vm2072, %v2071, %v2062
    %v2076 = vsel %vm948, %v2073, 0.0
    %v2077 = vsel %vm948, %v2074, 0.0
    %v2078 = vsel %vm948, %v2075, 0.0
    %2079 = vst [vmem:[%s5] sm:$0xff] %v2076
    %2080 = vst [vmem:[%s5 + $0x8] sm:$0xff] %v2077
    %2081 = vst [vmem:[%s5 + $0x10] sm:$0xff] %v2078
  $region29: #{pinn_forward.5} parent=0 // pred_fallthru
    _
  // Predicated region
  $region30: #{pinn_forward.5} parent=0 // pred_check
    _
  $region31: #{pinn_forward.5} parent=0 // pred_check_branch
    %2083 = sbr.rel (0) target = $region33
  $region32: #{pinn_forward.5} parent=0 // pred_region
    _
  $region33: #{pinn_forward.5} parent=0 // pred_fallthru
    _
  // Predicated region
  $region34: #{pinn_forward.5} parent=0 // pred_check
    _
  $region35: #{pinn_forward.5} parent=0 // pred_check_branch
    %2085 = sbr.rel (0) target = $region37
  $region36: #{pinn_forward.5} parent=0 // pred_region
    _
  $region37: #{pinn_forward.5} parent=0 // pred_fallthru
    _

</llo_original>
